<compile_context>
chip_gen: v7x
topology: tpu7x:2x2x1
jax: 0.10.0
libtpu: 0.0.40
codegen_flags: <defaults>
</compile_context>

<pallas_src>
import functools
import math

import jax
import jax.numpy as jnp
from jax import lax
from jax.experimental import pallas as pl
from jax.experimental.pallas import tpu as pltpu


# =============================================================================
# Helpers
# =============================================================================
def get_position_encoding(seq_len, d, n=10000.0):
    """Replicates model_1.getPositionEncoding(seq_len, d, n) (sinusoidal)."""
    pos = jnp.arange(seq_len, dtype=jnp.float32)[:, None]
    i = jnp.arange(d // 2, dtype=jnp.float32)[None, :]
    angle = pos / jnp.power(jnp.float32(n), 2.0 * i / jnp.float32(d))
    pe = jnp.stack([jnp.sin(angle), jnp.cos(angle)], axis=-1)  # (L, d/2, 2)
    return pe.reshape(seq_len, d)


def _default_batch_tile(n, seq_len):
    """Row tile: full batch for tiny N, otherwise a multiple-of-8 tile sized to
    amortize the ~0.35 us per-grid-step overhead while (a) keeping >= 2 grid
    steps for large N (v7x has 2 TensorCores) and (b) keeping the block-dense
    (batch_tile*L)^2 bias/energy working set small (v7x VMEM is 64 MiB)."""
    if n <= 8:
        return n
    bt = 8
    while bt < 64 and n >= 4 * bt and (2 * bt) * seq_len <= 1024:
        bt *= 2
    return bt


# =============================================================================
# Fused kernel: model_1 stand-in (pos-enc + MHSA) + flatten + final_out + softmax
# =============================================================================
def _agg2modal_fused_kernel(x_ref, x2_ref, pos_ref, bias_ref,
                            wq_ref, wk_ref, wv_ref, wfc_ref, bfc_ref,
                            w1t_ref, w2t_ref, bf_ref, o_ref,
                            *, heads, head_dim, embed_size, seq_len,
                            batch_tile, mm_dtype):
    B, L, E, hd = batch_tile, seq_len, embed_size, head_dim
    R = B * L                                     # rows in this block (batch folded into M)
    inv_scale = jnp.float32(1.0 / math.sqrt(E))

    # x_1 rows already flattened to (R, E) by the wrapper; pos pre-tiled to (R, E).
    h = x_ref[...] + pos_ref[...]                 # (R, E), mm_dtype
    bias = bias_ref[...]                          # (R, R) pre-scaled additive bias:
                                                  #   causal/temporal mask within a batch
                                                  #   row, -1e20/sqrt(E) across batch rows.

    # Fused all-head projections: one fat (R, E) @ (E, E) MXU matmul each
    # (block-diagonal kron(I_heads, W^T) weights built in the wrapper).
    q_all = jnp.dot(h, wq_ref[...], preferred_element_type=mm_dtype)
    k_all = jnp.dot(h, wk_ref[...], preferred_element_type=mm_dtype)
    v_all = jnp.dot(h, wv_ref[...], preferred_element_type=mm_dtype)
    wfc = wfc_ref[...]                            # (E, E) = Wfc^T

    acc = jnp.zeros((R, E), jnp.float32)
    for hh in range(heads):
        lo = hh * hd
        qh = q_all[:, lo:lo + hd]                 # (R, hd)
        kh = k_all[:, lo:lo + hd]
        vh = v_all[:, lo:lo + hd]

        # Energy over the whole row block at once (M = N = R): cross-batch pairs
        # are annihilated by the additive bias, so softmax normalization stays
        # strictly per batch row.  No kh.T is materialized.
        energy = lax.dot_general(qh, kh, (((1,), (1,)), ((), ())),
                                 preferred_element_type=jnp.float32)   # (R, R)
        energy = energy * inv_scale + bias

        # numerically stable softmax over keys; approx reciprocal -> EUP slot.
        m = jnp.max(energy, axis=-1, keepdims=True)
        p = jnp.exp(energy - m)
        attn = (p * pl.reciprocal(jnp.sum(p, axis=-1, keepdims=True),
                                  approx=True)).astype(mm_dtype)

        ctx = jnp.dot(attn, vh, preferred_element_type=mm_dtype)       # (R, hd)
        # Head concat folded into fc_out: accumulate ctx @ Wfc^T[rows of head hh].
        acc = acc + jnp.dot(ctx, wfc[lo:lo + hd, :],
                            preferred_element_type=jnp.float32)

    out1 = acc + bfc_ref[...]                     # (R, E): row r = b*L + l is out_1[b, l, :]

    # ---- aggregator head, fused (out_1 never leaves VMEM) -------------------
    # flatten(out_1, start_dim=1) @ W1^T is realized as
    #     sum_l (S_l @ out1) @ W1^T[l*E:(l+1)*E, :]
    # where S_l is an iota-built 0/1 row selector -> only plain MXU dots, no
    # minor-dim reshape / relayout.  out_2 (= x_2 squeezed) block and the final
    # bias are folded in here too, so the whole forward is a single pallas_call.
    logits = (jnp.dot(x2_ref[...], w2t_ref[...],
                      preferred_element_type=jnp.float32) + bf_ref[...])   # (B, 3)
    rows = lax.broadcasted_iota(jnp.int32, (B, R), 0)
    cols = lax.broadcasted_iota(jnp.int32, (B, R), 1)
    base = rows * L
    for l in range(L):
        sel = (cols == base + l).astype(jnp.float32)        # (B, R) row selector
        row_l = jnp.dot(sel, out1, preferred_element_type=jnp.float32)  # (B, E)
        logits = logits + jnp.dot(row_l, w1t_ref[l * E:(l + 1) * E, :],
                                  preferred_element_type=jnp.float32)

    # Final class probabilities: EXACT softmax (review correctness note).
    m = jnp.max(logits, axis=-1, keepdims=True)
    p = jnp.exp(logits - m)
    o_ref[...] = (p / jnp.sum(p, axis=-1, keepdims=True)).astype(o_ref.dtype)


# =============================================================================
# Full Aggregator_2Modal forward (single fused pallas_call)
# =============================================================================
def aggregator_2modal_forward(x_1, x_2, params, causal_mask=None,
                              temporal_mask=None, *, heads, batch_tile=None,
                              matmul_dtype=jnp.float32):
    N, L, E = x_1.shape
    assert E % heads == 0
    V = x_2.shape[1]
    hd = E // heads

    bt = batch_tile if batch_tile is not None else _default_batch_tile(N, L)
    n_pad = pl.cdiv(N, bt) * bt
    R = bt * L

    # ---- combined additive mask bias (batch-invariant, built once) ----------
    # masked_fill(mask == 1, -1e20) followed by /sqrt(E) is folded into a single
    # pre-scaled additive bias; cross-batch-row pairs inside the (R, R) block
    # get the same -1e20/sqrt(E) so attention never crosses batch rows.
    neg = jnp.float32(-1e20 / math.sqrt(E))
    mask = jnp.zeros((L, L), jnp.float32)
    for m_ in (causal_mask, temporal_mask):
        if m_ is not None:
            assert m_.ndim == 2 and m_.shape == (L, L), (
                "masks are assumed batch-invariant with shape (L, L)")
            mask = jnp.maximum(mask, (m_ == 1).astype(jnp.float32))
    bias_ll = mask * neg                                                   # (L, L)
    same_row = jnp.kron(jnp.eye(bt, dtype=jnp.float32),
                        jnp.ones((L, L), jnp.float32))                    # (R, R)
    bias_full = jnp.where(same_row > 0, jnp.tile(bias_ll, (bt, bt)), neg)  # (R, R) f32

    # ---- inputs: batch folded into rows, padded to a whole number of blocks --
    x1 = x_1.astype(matmul_dtype)
    x2 = jnp.squeeze(x_2, axis=-1).astype(jnp.float32)   # model_2 == identity (TODO above)
    if n_pad != N:
        x1 = jnp.pad(x1, ((0, n_pad - N), (0, 0), (0, 0)))
        x2 = jnp.pad(x2, ((0, n_pad - N), (0, 0)))
    x_rows = x1.reshape(n_pad * L, E)                     # flatten batch into matmul M
    pos_tiled = jnp.tile(params["pos"], (bt, 1)).astype(matmul_dtype)      # (R, E)

    # matmul operands in matmul_dtype (bf16 recommended on v6e/v7x); softmax math
    # and the tiny final-logit matmuls stay f32.
    wq_bd = params["wq_bd"].astype(matmul_dtype)
    wk_bd = params["wk_bd"].astype(matmul_dtype)
    wv_bd = params["wv_bd"].astype(matmul_dtype)
    wfc_t = params["wfc_t"].astype(matmul_dtype)
    bfc = params["bfc"].astype(jnp.float32)
    w1t = params["w1t"].astype(jnp.float32)
    w2t = params["w2t"].astype(jnp.float32)
    bf = params["bf"].astype(jnp.float32)

    kernel = functools.partial(
        _agg2modal_fused_kernel, heads=heads, head_dim=hd, embed_size=E,
        seq_len=L, batch_tile=bt, mm_dtype=matmul_dtype)

    grid_spec = pltpu.PrefetchScalarGridSpec(
        num_scalar_prefetch=0,
        grid=(n_pad // bt,),
        in_specs=[
            pl.BlockSpec((R, E), lambda i: (i, 0)),        # x_1 rows (batch-folded)
            pl.BlockSpec((bt, V), lambda i: (i, 0)),       # x_2 (squeezed) rows
            pl.BlockSpec((R, E), lambda i: (0, 0)),        # pos encoding (tiled)
            pl.BlockSpec((R, R), lambda i: (0, 0)),        # additive mask bias
            pl.BlockSpec((E, E), lambda i: (0, 0)),        # Wq block-diag (^T)
            pl.BlockSpec((E, E), lambda i: (0, 0)),        # Wk block-diag (^T)
            pl.BlockSpec((E, E), lambda i: (0, 0)),        # Wv block-diag (^T)
            pl.BlockSpec((E, E), lambda i: (0, 0)),        # Wfc^T
            pl.BlockSpec((1, E), lambda i: (0, 0)),        # bfc
            pl.BlockSpec((L * E, 3), lambda i: (0, 0)),    # final W block for out_1
            pl.BlockSpec((V, 3), lambda i: (0, 0)),        # final W block for out_2
            pl.BlockSpec((1, 3), lambda i: (0, 0)),        # final bias
        ],
        out_specs=pl.BlockSpec((bt, 3), lambda i: (i, 0)),
    )
    probs = pl.pallas_call(
        kernel,
        out_shape=jax.ShapeDtypeStruct((n_pad, 3), jnp.float32),
        grid_spec=grid_spec,
        compiler_params=pltpu.CompilerParams(
            dimension_semantics=("parallel",),
            # explicit scoped-VMEM budget (<= v7x default); per-step working set
            # here is ~ 2*R*E*dt (x) + R^2*4 (bias) + a few R^2*4 intermediates.
            vmem_limit_bytes=32 * 1024 * 1024),
    )(x_rows, x2, pos_tiled, bias_full, wq_bd, wk_bd, wv_bd, wfc_t, bfc,
      w1t, w2t, bf)
    return probs[:N]


# =============================================================================
# Parameters (deterministic) + pure-JAX reference mirroring PyTorch exactly
# =============================================================================
def build_params(key, *, max_length, feature_embed_size, video_embed_size, heads):
    E = feature_embed_size
    hd = E // heads
    k1, k2, k3, k4, k5, k6, k7 = jax.random.split(key, 7)
    # nn.Linear weights are (out_features, in_features)
    wv = 0.1 * jax.random.normal(k1, (hd, hd), jnp.float32)
    wk = 0.1 * jax.random.normal(k2, (hd, hd), jnp.float32)
    wq = 0.1 * jax.random.normal(k3, (hd, hd), jnp.float32)
    wfc = 0.1 * jax.random.normal(k4, (E, E), jnp.float32)
    bfc = 0.1 * jax.random.normal(k5, (E,), jnp.float32)
    in_final = E * max_length + video_embed_size
    wf = 0.1 * jax.random.normal(k6, (3, in_final), jnp.float32)
    bf = 0.1 * jax.random.normal(k7, (3,), jnp.float32)
    pos = get_position_encoding(max_length, E)

    eye = jnp.eye(heads, dtype=jnp.float32)
    raw = dict(wv=wv, wk=wk, wq=wq, wfc=wfc, bfc=bfc, wf=wf, bf=bf, pos=pos)
    kernel_params = dict(
        pos=pos,
        # pre-transposed, block-diagonal fused per-head projection weights
        # (fine for E <= ~128; see TODO at top for large E)
        wq_bd=jnp.kron(eye, wq.T),
        wk_bd=jnp.kron(eye, wk.T),
        wv_bd=jnp.kron(eye, wv.T),
        wfc_t=wfc.T,
        bfc=bfc.reshape(1, E),
        # final_out weight split into the out_1-flat block and the out_2 block
        w1t=wf[:, : E * max_length].T,
        w2t=wf[:, E * max_length:].T,
        bf=bf.reshape(1, 3),
    )
    return raw, kernel_params


def aggregator_2modal_ref(x_1, x_2, raw, causal_mask=None, temporal_mask=None,
                          *, heads):
    N, L, E = x_1.shape
    hd = E // heads
    mask = jnp.zeros((L, L), jnp.int32)
    if causal_mask is not None:
        mask = jnp.maximum(mask, (causal_mask == 1).astype(jnp.int32))
    if temporal_mask is not None:
        mask = jnp.maximum(mask, (temporal_mask == 1).astype(jnp.int32))

    h = x_1 + raw["pos"][None]
    v = h.reshape(N, L, heads, hd) @ raw["wv"].T
    k = h.reshape(N, L, heads, hd) @ raw["wk"].T
    q = h.reshape(N, L, heads, hd) @ raw["wq"].T
    energy = jnp.einsum("nqhd,nkhd->nhqk", q, k)
    energy = jnp.where(mask[None, None] == 1, jnp.float32(-1e20), energy)
    attn = jax.nn.softmax(energy / jnp.sqrt(jnp.float32(E)), axis=3)
    out_1 = jnp.einsum("nhql,nlhd->nqhd", attn, v).reshape(N, L, E)
    out_1 = out_1 @ raw["wfc"].T + raw["bfc"].reshape(1, 1, E)
    out_1 = out_1.reshape(N, -1)

    out_2 = jnp.squeeze(x_2, axis=-1)
    cat = jnp.concatenate([out_1, out_2], axis=1)
    logits = cat @ raw["wf"].T + raw["bf"]
    return jax.nn.softmax(logits, axis=-1)


# =============================================================================
# Demo / self-test
# =============================================================================
if __name__ == "__main__":
    MAX_LEN = 8      # max_length (sequence length of modality 1)
    FEAT_E = 32      # feature_embed_size
    VIDEO_E = 32     # video_embed_size
    HEADS = 4        # heads in the model_1 attention stand-in

    root = jax.random.PRNGKey(0)
    kp, kx1, kx2, kx3, kx4 = jax.random.split(root, 5)
    raw, params = build_params(kp, max_length=MAX_LEN, feature_embed_size=FEAT_E,
                               video_embed_size=VIDEO_E, heads=HEADS)
    # causal mask: 1 == masked (future positions), batch-invariant (L, L)
    causal_mask = jnp.triu(jnp.ones((MAX_LEN, MAX_LEN), jnp.int32), k=1)

    # --- Test A: tiny batch, f32 matmul operands (exact path) ----------------
    N = 2
    x_1 = jax.random.normal(kx1, (N, MAX_LEN, FEAT_E), jnp.float32)
    x_2 = jax.random.normal(kx2, (N, VIDEO_E, 1), jnp.float32)
    out = aggregator_2modal_forward(x_1, x_2, params, causal_mask=causal_mask,
                                    heads=HEADS, matmul_dtype=jnp.float32)
    out = jax.block_until_ready(out)
    ref = aggregator_2modal_ref(x_1, x_2, raw, causal_mask=causal_mask,
                                heads=HEADS)
    assert out.shape == (N, 3)
    # tolerance > 1e-4 only because of pl.reciprocal(approx=True) in attention
    assert jnp.allclose(out, ref, atol=2e-3, rtol=2e-3), (
        f"f32 max abs err = {jnp.max(jnp.abs(out - ref))}")

    # --- Test B: non-divisible batch, bf16 matmul operands (v6e/v7x path) ----
    N = 11            # forces padding to 16 and a 2-step grid (batch_tile=8)
    x_1 = jax.random.normal(kx3, (N, MAX_LEN, FEAT_E), jnp.float32)
    x_2 = jax.random.normal(kx4, (N, VIDEO_E, 1), jnp.float32)
    out = aggregator_2modal_forward(x_1, x_2, params, causal_mask=causal_mask,
                                    heads=HEADS, matmul_dtype=jnp.bfloat16)
    out = jax.block_until_ready(out)
    ref = aggregator_2modal_ref(x_1, x_2, raw, causal_mask=causal_mask,
                                heads=HEADS)
    assert out.shape == (N, 3)
    assert jnp.allclose(out, ref, atol=5e-2, rtol=5e-2), (
        f"bf16 max abs err = {jnp.max(jnp.abs(out - ref))}")

    print("KERNEL_OK")
</pallas_src>

<mosaic_0001>
module attributes {stable_mosaic.version = 11 : i64} {
  func.func @_agg2modal_fused_kernel(%arg0: i32, %arg1: memref<16x32xf32, #tpu.memory_space<vmem>>, %arg2: memref<2x32xf32, #tpu.memory_space<vmem>>, %arg3: memref<16x32xf32, #tpu.memory_space<vmem>>, %arg4: memref<16x16xf32, #tpu.memory_space<vmem>>, %arg5: memref<32x32xf32, #tpu.memory_space<vmem>>, %arg6: memref<32x32xf32, #tpu.memory_space<vmem>>, %arg7: memref<32x32xf32, #tpu.memory_space<vmem>>, %arg8: memref<32x32xf32, #tpu.memory_space<vmem>>, %arg9: memref<1x32xf32, #tpu.memory_space<vmem>>, %arg10: memref<256x3xf32, #tpu.memory_space<vmem>>, %arg11: memref<32x3xf32, #tpu.memory_space<vmem>>, %arg12: memref<1x3xf32, #tpu.memory_space<vmem>>, %arg13: memref<2x3xf32, #tpu.memory_space<vmem>>) attributes {dimension_semantics = [#tpu.dimension_semantics<parallel>], iteration_bounds = array<i64: 1>, scalar_prefetch = 0 : i64, scratch_operands = 0 : i64, tpu.core_type = #tpu.core_type<tc>, window_params = [{transform_indices = @transform_0, window_bounds = array<i64: 16, 32>}, {transform_indices = @transform_1, window_bounds = array<i64: 2, 32>}, {pipeline_mode = #tpu.pipeline_mode<synchronous>, transform_indices = @transform_2, window_bounds = array<i64: 16, 32>}, {pipeline_mode = #tpu.pipeline_mode<synchronous>, transform_indices = @transform_3, window_bounds = array<i64: 16, 16>}, {pipeline_mode = #tpu.pipeline_mode<synchronous>, transform_indices = @transform_4, window_bounds = array<i64: 32, 32>}, {pipeline_mode = #tpu.pipeline_mode<synchronous>, transform_indices = @transform_5, window_bounds = array<i64: 32, 32>}, {pipeline_mode = #tpu.pipeline_mode<synchronous>, transform_indices = @transform_6, window_bounds = array<i64: 32, 32>}, {pipeline_mode = #tpu.pipeline_mode<synchronous>, transform_indices = @transform_7, window_bounds = array<i64: 32, 32>}, {pipeline_mode = #tpu.pipeline_mode<synchronous>, transform_indices = @transform_8, window_bounds = array<i64: 1, 32>}, {pipeline_mode = #tpu.pipeline_mode<synchronous>, transform_indices = @transform_9, window_bounds = array<i64: 256, 3>}, {pipeline_mode = #tpu.pipeline_mode<synchronous>, transform_indices = @transform_10, window_bounds = array<i64: 32, 3>}, {pipeline_mode = #tpu.pipeline_mode<synchronous>, transform_indices = @transform_11, window_bounds = array<i64: 1, 3>}, {transform_indices = @transform_12, window_bounds = array<i64: 2, 3>}]} {
    %c0 = arith.constant 0 : index
    %c0_0 = arith.constant 0 : index
    %0 = vector.load %arg1[%c0, %c0_0] : memref<16x32xf32, #tpu.memory_space<vmem>>, vector<16x32xf32>
    %c0_1 = arith.constant 0 : index
    %c0_2 = arith.constant 0 : index
    %1 = vector.load %arg3[%c0_1, %c0_2] : memref<16x32xf32, #tpu.memory_space<vmem>>, vector<16x32xf32>
    %2 = arith.addf %0, %1 : vector<16x32xf32>
    %c0_3 = arith.constant 0 : index
    %c0_4 = arith.constant 0 : index
    %3 = vector.load %arg4[%c0_3, %c0_4] : memref<16x16xf32, #tpu.memory_space<vmem>>, vector<16x16xf32>
    %c0_5 = arith.constant 0 : index
    %c0_6 = arith.constant 0 : index
    %4 = vector.load %arg5[%c0_5, %c0_6] : memref<32x32xf32, #tpu.memory_space<vmem>>, vector<32x32xf32>
    %cst = arith.constant dense<0.000000e+00> : vector<16x32xf32>
    %5 = tpu.matmul %2, %4, %cst {dimension_numbers = #tpu.dot_dimension_numbers<[1], [0], [0], [1], [0, 0, 1, 1], [], []>} : vector<16x32xf32>, vector<32x32xf32>, vector<16x32xf32> -> vector<16x32xf32>
    %c0_7 = arith.constant 0 : index
    %c0_8 = arith.constant 0 : index
    %6 = vector.load %arg6[%c0_7, %c0_8] : memref<32x32xf32, #tpu.memory_space<vmem>>, vector<32x32xf32>
    %cst_9 = arith.constant dense<0.000000e+00> : vector<16x32xf32>
    %7 = tpu.matmul %2, %6, %cst_9 {dimension_numbers = #tpu.dot_dimension_numbers<[1], [0], [0], [1], [0, 0, 1, 1], [], []>} : vector<16x32xf32>, vector<32x32xf32>, vector<16x32xf32> -> vector<16x32xf32>
    %c0_10 = arith.constant 0 : index
    %c0_11 = arith.constant 0 : index
    %8 = vector.load %arg7[%c0_10, %c0_11] : memref<32x32xf32, #tpu.memory_space<vmem>>, vector<32x32xf32>
    %cst_12 = arith.constant dense<0.000000e+00> : vector<16x32xf32>
    %9 = tpu.matmul %2, %8, %cst_12 {dimension_numbers = #tpu.dot_dimension_numbers<[1], [0], [0], [1], [0, 0, 1, 1], [], []>} : vector<16x32xf32>, vector<32x32xf32>, vector<16x32xf32> -> vector<16x32xf32>
    %c0_13 = arith.constant 0 : index
    %c0_14 = arith.constant 0 : index
    %10 = vector.load %arg8[%c0_13, %c0_14] : memref<32x32xf32, #tpu.memory_space<vmem>>, vector<32x32xf32>
    %cst_15 = arith.constant 0.000000e+00 : f32
    %11 = vector.broadcast %cst_15 : f32 to vector<16x32xf32>
    %12 = vector.extract_strided_slice %5 {offsets = [0, 0], sizes = [16, 8], strides = [1, 1]} : vector<16x32xf32> to vector<16x8xf32>
    %13 = vector.extract_strided_slice %7 {offsets = [0, 0], sizes = [16, 8], strides = [1, 1]} : vector<16x32xf32> to vector<16x8xf32>
    %14 = vector.extract_strided_slice %9 {offsets = [0, 0], sizes = [16, 8], strides = [1, 1]} : vector<16x32xf32> to vector<16x8xf32>
    %cst_16 = arith.constant dense<0.000000e+00> : vector<16x16xf32>
    %15 = tpu.matmul %12, %13, %cst_16 {dimension_numbers = #tpu.dot_dimension_numbers<[1], [1], [0], [0], [0, 0, 1, 0], [], []>} : vector<16x8xf32>, vector<16x8xf32>, vector<16x16xf32> -> vector<16x16xf32>
    %cst_17 = arith.constant 0.176776692 : f32
    %16 = vector.broadcast %cst_17 : f32 to vector<16x16xf32>
    %17 = arith.mulf %15, %16 : vector<16x16xf32>
    %18 = arith.addf %17, %3 : vector<16x16xf32>
    %cst_18 = arith.constant dense<0xFF800000> : vector<16xf32>
    %19 = vector.multi_reduction <maximumf>, %18, %cst_18 [1] : vector<16x16xf32> to vector<16xf32>
    %20 = vector.shape_cast %19 : vector<16xf32> to vector<16x1xf32>
    %21 = vector.broadcast %20 : vector<16x1xf32> to vector<16x16xf32>
    %22 = arith.subf %18, %21 : vector<16x16xf32>
    %23 = math.exp %22 : vector<16x16xf32>
    %cst_19 = arith.constant dense<0.000000e+00> : vector<16xf32>
    %24 = vector.multi_reduction <add>, %23, %cst_19 [1] : vector<16x16xf32> to vector<16xf32>
    %25 = vector.shape_cast %24 : vector<16xf32> to vector<16x1xf32>
    %26 = tpu.reciprocal %25 {approx = true} : vector<16x1xf32> -> vector<16x1xf32>
    %27 = vector.broadcast %26 : vector<16x1xf32> to vector<16x16xf32>
    %28 = arith.mulf %23, %27 : vector<16x16xf32>
    %cst_20 = arith.constant dense<0.000000e+00> : vector<16x8xf32>
    %29 = tpu.matmul %28, %14, %cst_20 {dimension_numbers = #tpu.dot_dimension_numbers<[1], [0], [0], [1], [0, 0, 1, 1], [], []>} : vector<16x16xf32>, vector<16x8xf32>, vector<16x8xf32> -> vector<16x8xf32>
    %30 = vector.extract_strided_slice %10 {offsets = [0, 0], sizes = [8, 32], strides = [1, 1]} : vector<32x32xf32> to vector<8x32xf32>
    %cst_21 = arith.constant dense<0.000000e+00> : vector<16x32xf32>
    %31 = tpu.matmul %29, %30, %cst_21 {dimension_numbers = #tpu.dot_dimension_numbers<[1], [0], [0], [1], [0, 0, 1, 1], [], []>} : vector<16x8xf32>, vector<8x32xf32>, vector<16x32xf32> -> vector<16x32xf32>
    %32 = arith.addf %11, %31 : vector<16x32xf32>
    %33 = vector.extract_strided_slice %5 {offsets = [0, 8], sizes = [16, 8], strides = [1, 1]} : vector<16x32xf32> to vector<16x8xf32>
    %34 = vector.extract_strided_slice %7 {offsets = [0, 8], sizes = [16, 8], strides = [1, 1]} : vector<16x32xf32> to vector<16x8xf32>
    %35 = vector.extract_strided_slice %9 {offsets = [0, 8], sizes = [16, 8], strides = [1, 1]} : vector<16x32xf32> to vector<16x8xf32>
    %cst_22 = arith.constant dense<0.000000e+00> : vector<16x16xf32>
    %36 = tpu.matmul %33, %34, %cst_22 {dimension_numbers = #tpu.dot_dimension_numbers<[1], [1], [0], [0], [0, 0, 1, 0], [], []>} : vector<16x8xf32>, vector<16x8xf32>, vector<16x16xf32> -> vector<16x16xf32>
    %cst_23 = arith.constant 0.176776692 : f32
    %37 = vector.broadcast %cst_23 : f32 to vector<16x16xf32>
    %38 = arith.mulf %36, %37 : vector<16x16xf32>
    %39 = arith.addf %38, %3 : vector<16x16xf32>
    %cst_24 = arith.constant dense<0xFF800000> : vector<16xf32>
    %40 = vector.multi_reduction <maximumf>, %39, %cst_24 [1] : vector<16x16xf32> to vector<16xf32>
    %41 = vector.shape_cast %40 : vector<16xf32> to vector<16x1xf32>
    %42 = vector.broadcast %41 : vector<16x1xf32> to vector<16x16xf32>
    %43 = arith.subf %39, %42 : vector<16x16xf32>
    %44 = math.exp %43 : vector<16x16xf32>
    %cst_25 = arith.constant dense<0.000000e+00> : vector<16xf32>
    %45 = vector.multi_reduction <add>, %44, %cst_25 [1] : vector<16x16xf32> to vector<16xf32>
    %46 = vector.shape_cast %45 : vector<16xf32> to vector<16x1xf32>
    %47 = tpu.reciprocal %46 {approx = true} : vector<16x1xf32> -> vector<16x1xf32>
    %48 = vector.broadcast %47 : vector<16x1xf32> to vector<16x16xf32>
    %49 = arith.mulf %44, %48 : vector<16x16xf32>
    %cst_26 = arith.constant dense<0.000000e+00> : vector<16x8xf32>
    %50 = tpu.matmul %49, %35, %cst_26 {dimension_numbers = #tpu.dot_dimension_numbers<[1], [0], [0], [1], [0, 0, 1, 1], [], []>} : vector<16x16xf32>, vector<16x8xf32>, vector<16x8xf32> -> vector<16x8xf32>
    %51 = vector.extract_strided_slice %10 {offsets = [8, 0], sizes = [8, 32], strides = [1, 1]} : vector<32x32xf32> to vector<8x32xf32>
    %cst_27 = arith.constant dense<0.000000e+00> : vector<16x32xf32>
    %52 = tpu.matmul %50, %51, %cst_27 {dimension_numbers = #tpu.dot_dimension_numbers<[1], [0], [0], [1], [0, 0, 1, 1], [], []>} : vector<16x8xf32>, vector<8x32xf32>, vector<16x32xf32> -> vector<16x32xf32>
    %53 = arith.addf %32, %52 : vector<16x32xf32>
    %54 = vector.extract_strided_slice %5 {offsets = [0, 16], sizes = [16, 8], strides = [1, 1]} : vector<16x32xf32> to vector<16x8xf32>
    %55 = vector.extract_strided_slice %7 {offsets = [0, 16], sizes = [16, 8], strides = [1, 1]} : vector<16x32xf32> to vector<16x8xf32>
    %56 = vector.extract_strided_slice %9 {offsets = [0, 16], sizes = [16, 8], strides = [1, 1]} : vector<16x32xf32> to vector<16x8xf32>
    %cst_28 = arith.constant dense<0.000000e+00> : vector<16x16xf32>
    %57 = tpu.matmul %54, %55, %cst_28 {dimension_numbers = #tpu.dot_dimension_numbers<[1], [1], [0], [0], [0, 0, 1, 0], [], []>} : vector<16x8xf32>, vector<16x8xf32>, vector<16x16xf32> -> vector<16x16xf32>
    %cst_29 = arith.constant 0.176776692 : f32
    %58 = vector.broadcast %cst_29 : f32 to vector<16x16xf32>
    %59 = arith.mulf %57, %58 : vector<16x16xf32>
    %60 = arith.addf %59, %3 : vector<16x16xf32>
    %cst_30 = arith.constant dense<0xFF800000> : vector<16xf32>
    %61 = vector.multi_reduction <maximumf>, %60, %cst_30 [1] : vector<16x16xf32> to vector<16xf32>
    %62 = vector.shape_cast %61 : vector<16xf32> to vector<16x1xf32>
    %63 = vector.broadcast %62 : vector<16x1xf32> to vector<16x16xf32>
    %64 = arith.subf %60, %63 : vector<16x16xf32>
    %65 = math.exp %64 : vector<16x16xf32>
    %cst_31 = arith.constant dense<0.000000e+00> : vector<16xf32>
    %66 = vector.multi_reduction <add>, %65, %cst_31 [1] : vector<16x16xf32> to vector<16xf32>
    %67 = vector.shape_cast %66 : vector<16xf32> to vector<16x1xf32>
    %68 = tpu.reciprocal %67 {approx = true} : vector<16x1xf32> -> vector<16x1xf32>
    %69 = vector.broadcast %68 : vector<16x1xf32> to vector<16x16xf32>
    %70 = arith.mulf %65, %69 : vector<16x16xf32>
    %cst_32 = arith.constant dense<0.000000e+00> : vector<16x8xf32>
    %71 = tpu.matmul %70, %56, %cst_32 {dimension_numbers = #tpu.dot_dimension_numbers<[1], [0], [0], [1], [0, 0, 1, 1], [], []>} : vector<16x16xf32>, vector<16x8xf32>, vector<16x8xf32> -> vector<16x8xf32>
    %72 = vector.extract_strided_slice %10 {offsets = [16, 0], sizes = [8, 32], strides = [1, 1]} : vector<32x32xf32> to vector<8x32xf32>
    %cst_33 = arith.constant dense<0.000000e+00> : vector<16x32xf32>
    %73 = tpu.matmul %71, %72, %cst_33 {dimension_numbers = #tpu.dot_dimension_numbers<[1], [0], [0], [1], [0, 0, 1, 1], [], []>} : vector<16x8xf32>, vector<8x32xf32>, vector<16x32xf32> -> vector<16x32xf32>
    %74 = arith.addf %53, %73 : vector<16x32xf32>
    %75 = vector.extract_strided_slice %5 {offsets = [0, 24], sizes = [16, 8], strides = [1, 1]} : vector<16x32xf32> to vector<16x8xf32>
    %76 = vector.extract_strided_slice %7 {offsets = [0, 24], sizes = [16, 8], strides = [1, 1]} : vector<16x32xf32> to vector<16x8xf32>
    %77 = vector.extract_strided_slice %9 {offsets = [0, 24], sizes = [16, 8], strides = [1, 1]} : vector<16x32xf32> to vector<16x8xf32>
    %cst_34 = arith.constant dense<0.000000e+00> : vector<16x16xf32>
    %78 = tpu.matmul %75, %76, %cst_34 {dimension_numbers = #tpu.dot_dimension_numbers<[1], [1], [0], [0], [0, 0, 1, 0], [], []>} : vector<16x8xf32>, vector<16x8xf32>, vector<16x16xf32> -> vector<16x16xf32>
    %cst_35 = arith.constant 0.176776692 : f32
    %79 = vector.broadcast %cst_35 : f32 to vector<16x16xf32>
    %80 = arith.mulf %78, %79 : vector<16x16xf32>
    %81 = arith.addf %80, %3 : vector<16x16xf32>
    %cst_36 = arith.constant dense<0xFF800000> : vector<16xf32>
    %82 = vector.multi_reduction <maximumf>, %81, %cst_36 [1] : vector<16x16xf32> to vector<16xf32>
    %83 = vector.shape_cast %82 : vector<16xf32> to vector<16x1xf32>
    %84 = vector.broadcast %83 : vector<16x1xf32> to vector<16x16xf32>
    %85 = arith.subf %81, %84 : vector<16x16xf32>
    %86 = math.exp %85 : vector<16x16xf32>
    %cst_37 = arith.constant dense<0.000000e+00> : vector<16xf32>
    %87 = vector.multi_reduction <add>, %86, %cst_37 [1] : vector<16x16xf32> to vector<16xf32>
    %88 = vector.shape_cast %87 : vector<16xf32> to vector<16x1xf32>
    %89 = tpu.reciprocal %88 {approx = true} : vector<16x1xf32> -> vector<16x1xf32>
    %90 = vector.broadcast %89 : vector<16x1xf32> to vector<16x16xf32>
    %91 = arith.mulf %86, %90 : vector<16x16xf32>
    %cst_38 = arith.constant dense<0.000000e+00> : vector<16x8xf32>
    %92 = tpu.matmul %91, %77, %cst_38 {dimension_numbers = #tpu.dot_dimension_numbers<[1], [0], [0], [1], [0, 0, 1, 1], [], []>} : vector<16x16xf32>, vector<16x8xf32>, vector<16x8xf32> -> vector<16x8xf32>
    %93 = vector.extract_strided_slice %10 {offsets = [24, 0], sizes = [8, 32], strides = [1, 1]} : vector<32x32xf32> to vector<8x32xf32>
    %cst_39 = arith.constant dense<0.000000e+00> : vector<16x32xf32>
    %94 = tpu.matmul %92, %93, %cst_39 {dimension_numbers = #tpu.dot_dimension_numbers<[1], [0], [0], [1], [0, 0, 1, 1], [], []>} : vector<16x8xf32>, vector<8x32xf32>, vector<16x32xf32> -> vector<16x32xf32>
    %95 = arith.addf %74, %94 : vector<16x32xf32>
    %c0_40 = arith.constant 0 : index
    %c0_41 = arith.constant 0 : index
    %96 = vector.load %arg9[%c0_40, %c0_41] : memref<1x32xf32, #tpu.memory_space<vmem>>, vector<1x32xf32>
    %97 = vector.broadcast %96 : vector<1x32xf32> to vector<16x32xf32>
    %98 = arith.addf %95, %97 : vector<16x32xf32>
    %c0_42 = arith.constant 0 : index
    %c0_43 = arith.constant 0 : index
    %99 = vector.load %arg2[%c0_42, %c0_43] : memref<2x32xf32, #tpu.memory_space<vmem>>, vector<2x32xf32>
    %c0_44 = arith.constant 0 : index
    %c0_45 = arith.constant 0 : index
    %100 = vector.load %arg11[%c0_44, %c0_45] : memref<32x3xf32, #tpu.memory_space<vmem>>, vector<32x3xf32>
    %cst_46 = arith.constant dense<0.000000e+00> : vector<2x3xf32>
    %101 = tpu.matmul %99, %100, %cst_46 {dimension_numbers = #tpu.dot_dimension_numbers<[1], [0], [0], [1], [0, 0, 1, 1], [], []>} : vector<2x32xf32>, vector<32x3xf32>, vector<2x3xf32> -> vector<2x3xf32>
    %c0_47 = arith.constant 0 : index
    %c0_48 = arith.constant 0 : index
    %102 = vector.load %arg12[%c0_47, %c0_48] : memref<1x3xf32, #tpu.memory_space<vmem>>, vector<1x3xf32>
    %103 = vector.broadcast %102 : vector<1x3xf32> to vector<2x3xf32>
    %104 = arith.addf %101, %103 : vector<2x3xf32>
    %105 = tpu.iota {dimensions = array<i32: 0>} : vector<2x16xi32>
    %106 = tpu.iota {dimensions = array<i32: 1>} : vector<2x16xi32>
    %c8_i32 = arith.constant 8 : i32
    %107 = vector.broadcast %c8_i32 : i32 to vector<2x16xi32>
    %108 = arith.muli %105, %107 : vector<2x16xi32>
    %c0_i32 = arith.constant 0 : i32
    %109 = vector.broadcast %c0_i32 : i32 to vector<2x16xi32>
    %110 = arith.addi %108, %109 : vector<2x16xi32>
    %111 = arith.cmpi eq, %106, %110 : vector<2x16xi32>
    %112 = arith.extui %111 : vector<2x16xi1> to vector<2x16xi32>
    %113 = arith.sitofp %112 : vector<2x16xi32> to vector<2x16xf32>
    %cst_49 = arith.constant dense<0.000000e+00> : vector<2x32xf32>
    %114 = tpu.matmul %113, %98, %cst_49 {dimension_numbers = #tpu.dot_dimension_numbers<[1], [0], [0], [1], [0, 0, 1, 1], [], []>} : vector<2x16xf32>, vector<16x32xf32>, vector<2x32xf32> -> vector<2x32xf32>
    %c0_50 = arith.constant 0 : index
    %c0_51 = arith.constant 0 : index
    %115 = vector.load %arg10[%c0_50, %c0_51] : memref<256x3xf32, #tpu.memory_space<vmem>>, vector<32x3xf32>
    %cst_52 = arith.constant dense<0.000000e+00> : vector<2x3xf32>
    %116 = tpu.matmul %114, %115, %cst_52 {dimension_numbers = #tpu.dot_dimension_numbers<[1], [0], [0], [1], [0, 0, 1, 1], [], []>} : vector<2x32xf32>, vector<32x3xf32>, vector<2x3xf32> -> vector<2x3xf32>
    %117 = arith.addf %104, %116 : vector<2x3xf32>
    %c1_i32 = arith.constant 1 : i32
    %118 = vector.broadcast %c1_i32 : i32 to vector<2x16xi32>
    %119 = arith.addi %108, %118 : vector<2x16xi32>
    %120 = arith.cmpi eq, %106, %119 : vector<2x16xi32>
    %121 = arith.extui %120 : vector<2x16xi1> to vector<2x16xi32>
    %122 = arith.sitofp %121 : vector<2x16xi32> to vector<2x16xf32>
    %cst_53 = arith.constant dense<0.000000e+00> : vector<2x32xf32>
    %123 = tpu.matmul %122, %98, %cst_53 {dimension_numbers = #tpu.dot_dimension_numbers<[1], [0], [0], [1], [0, 0, 1, 1], [], []>} : vector<2x16xf32>, vector<16x32xf32>, vector<2x32xf32> -> vector<2x32xf32>
    %c32 = arith.constant 32 : index
    %c0_54 = arith.constant 0 : index
    %124 = vector.load %arg10[%c32, %c0_54] : memref<256x3xf32, #tpu.memory_space<vmem>>, vector<32x3xf32>
    %cst_55 = arith.constant dense<0.000000e+00> : vector<2x3xf32>
    %125 = tpu.matmul %123, %124, %cst_55 {dimension_numbers = #tpu.dot_dimension_numbers<[1], [0], [0], [1], [0, 0, 1, 1], [], []>} : vector<2x32xf32>, vector<32x3xf32>, vector<2x3xf32> -> vector<2x3xf32>
    %126 = arith.addf %117, %125 : vector<2x3xf32>
    %c2_i32 = arith.constant 2 : i32
    %127 = vector.broadcast %c2_i32 : i32 to vector<2x16xi32>
    %128 = arith.addi %108, %127 : vector<2x16xi32>
    %129 = arith.cmpi eq, %106, %128 : vector<2x16xi32>
    %130 = arith.extui %129 : vector<2x16xi1> to vector<2x16xi32>
    %131 = arith.sitofp %130 : vector<2x16xi32> to vector<2x16xf32>
    %cst_56 = arith.constant dense<0.000000e+00> : vector<2x32xf32>
    %132 = tpu.matmul %131, %98, %cst_56 {dimension_numbers = #tpu.dot_dimension_numbers<[1], [0], [0], [1], [0, 0, 1, 1], [], []>} : vector<2x16xf32>, vector<16x32xf32>, vector<2x32xf32> -> vector<2x32xf32>
    %c64 = arith.constant 64 : index
    %c0_57 = arith.constant 0 : index
    %133 = vector.load %arg10[%c64, %c0_57] : memref<256x3xf32, #tpu.memory_space<vmem>>, vector<32x3xf32>
    %cst_58 = arith.constant dense<0.000000e+00> : vector<2x3xf32>
    %134 = tpu.matmul %132, %133, %cst_58 {dimension_numbers = #tpu.dot_dimension_numbers<[1], [0], [0], [1], [0, 0, 1, 1], [], []>} : vector<2x32xf32>, vector<32x3xf32>, vector<2x3xf32> -> vector<2x3xf32>
    %135 = arith.addf %126, %134 : vector<2x3xf32>
    %c3_i32 = arith.constant 3 : i32
    %136 = vector.broadcast %c3_i32 : i32 to vector<2x16xi32>
    %137 = arith.addi %108, %136 : vector<2x16xi32>
    %138 = arith.cmpi eq, %106, %137 : vector<2x16xi32>
    %139 = arith.extui %138 : vector<2x16xi1> to vector<2x16xi32>
    %140 = arith.sitofp %139 : vector<2x16xi32> to vector<2x16xf32>
    %cst_59 = arith.constant dense<0.000000e+00> : vector<2x32xf32>
    %141 = tpu.matmul %140, %98, %cst_59 {dimension_numbers = #tpu.dot_dimension_numbers<[1], [0], [0], [1], [0, 0, 1, 1], [], []>} : vector<2x16xf32>, vector<16x32xf32>, vector<2x32xf32> -> vector<2x32xf32>
    %c96 = arith.constant 96 : index
    %c0_60 = arith.constant 0 : index
    %142 = vector.load %arg10[%c96, %c0_60] : memref<256x3xf32, #tpu.memory_space<vmem>>, vector<32x3xf32>
    %cst_61 = arith.constant dense<0.000000e+00> : vector<2x3xf32>
    %143 = tpu.matmul %141, %142, %cst_61 {dimension_numbers = #tpu.dot_dimension_numbers<[1], [0], [0], [1], [0, 0, 1, 1], [], []>} : vector<2x32xf32>, vector<32x3xf32>, vector<2x3xf32> -> vector<2x3xf32>
    %144 = arith.addf %135, %143 : vector<2x3xf32>
    %c4_i32 = arith.constant 4 : i32
    %145 = vector.broadcast %c4_i32 : i32 to vector<2x16xi32>
    %146 = arith.addi %108, %145 : vector<2x16xi32>
    %147 = arith.cmpi eq, %106, %146 : vector<2x16xi32>
    %148 = arith.extui %147 : vector<2x16xi1> to vector<2x16xi32>
    %149 = arith.sitofp %148 : vector<2x16xi32> to vector<2x16xf32>
    %cst_62 = arith.constant dense<0.000000e+00> : vector<2x32xf32>
    %150 = tpu.matmul %149, %98, %cst_62 {dimension_numbers = #tpu.dot_dimension_numbers<[1], [0], [0], [1], [0, 0, 1, 1], [], []>} : vector<2x16xf32>, vector<16x32xf32>, vector<2x32xf32> -> vector<2x32xf32>
    %c128 = arith.constant 128 : index
    %c0_63 = arith.constant 0 : index
    %151 = vector.load %arg10[%c128, %c0_63] : memref<256x3xf32, #tpu.memory_space<vmem>>, vector<32x3xf32>
    %cst_64 = arith.constant dense<0.000000e+00> : vector<2x3xf32>
    %152 = tpu.matmul %150, %151, %cst_64 {dimension_numbers = #tpu.dot_dimension_numbers<[1], [0], [0], [1], [0, 0, 1, 1], [], []>} : vector<2x32xf32>, vector<32x3xf32>, vector<2x3xf32> -> vector<2x3xf32>
    %153 = arith.addf %144, %152 : vector<2x3xf32>
    %c5_i32 = arith.constant 5 : i32
    %154 = vector.broadcast %c5_i32 : i32 to vector<2x16xi32>
    %155 = arith.addi %108, %154 : vector<2x16xi32>
    %156 = arith.cmpi eq, %106, %155 : vector<2x16xi32>
    %157 = arith.extui %156 : vector<2x16xi1> to vector<2x16xi32>
    %158 = arith.sitofp %157 : vector<2x16xi32> to vector<2x16xf32>
    %cst_65 = arith.constant dense<0.000000e+00> : vector<2x32xf32>
    %159 = tpu.matmul %158, %98, %cst_65 {dimension_numbers = #tpu.dot_dimension_numbers<[1], [0], [0], [1], [0, 0, 1, 1], [], []>} : vector<2x16xf32>, vector<16x32xf32>, vector<2x32xf32> -> vector<2x32xf32>
    %c160 = arith.constant 160 : index
    %c0_66 = arith.constant 0 : index
    %160 = vector.load %arg10[%c160, %c0_66] : memref<256x3xf32, #tpu.memory_space<vmem>>, vector<32x3xf32>
    %cst_67 = arith.constant dense<0.000000e+00> : vector<2x3xf32>
    %161 = tpu.matmul %159, %160, %cst_67 {dimension_numbers = #tpu.dot_dimension_numbers<[1], [0], [0], [1], [0, 0, 1, 1], [], []>} : vector<2x32xf32>, vector<32x3xf32>, vector<2x3xf32> -> vector<2x3xf32>
    %162 = arith.addf %153, %161 : vector<2x3xf32>
    %c6_i32 = arith.constant 6 : i32
    %163 = vector.broadcast %c6_i32 : i32 to vector<2x16xi32>
    %164 = arith.addi %108, %163 : vector<2x16xi32>
    %165 = arith.cmpi eq, %106, %164 : vector<2x16xi32>
    %166 = arith.extui %165 : vector<2x16xi1> to vector<2x16xi32>
    %167 = arith.sitofp %166 : vector<2x16xi32> to vector<2x16xf32>
    %cst_68 = arith.constant dense<0.000000e+00> : vector<2x32xf32>
    %168 = tpu.matmul %167, %98, %cst_68 {dimension_numbers = #tpu.dot_dimension_numbers<[1], [0], [0], [1], [0, 0, 1, 1], [], []>} : vector<2x16xf32>, vector<16x32xf32>, vector<2x32xf32> -> vector<2x32xf32>
    %c192 = arith.constant 192 : index
    %c0_69 = arith.constant 0 : index
    %169 = vector.load %arg10[%c192, %c0_69] : memref<256x3xf32, #tpu.memory_space<vmem>>, vector<32x3xf32>
    %cst_70 = arith.constant dense<0.000000e+00> : vector<2x3xf32>
    %170 = tpu.matmul %168, %169, %cst_70 {dimension_numbers = #tpu.dot_dimension_numbers<[1], [0], [0], [1], [0, 0, 1, 1], [], []>} : vector<2x32xf32>, vector<32x3xf32>, vector<2x3xf32> -> vector<2x3xf32>
    %171 = arith.addf %162, %170 : vector<2x3xf32>
    %c7_i32 = arith.constant 7 : i32
    %172 = vector.broadcast %c7_i32 : i32 to vector<2x16xi32>
    %173 = arith.addi %108, %172 : vector<2x16xi32>
    %174 = arith.cmpi eq, %106, %173 : vector<2x16xi32>
    %175 = arith.extui %174 : vector<2x16xi1> to vector<2x16xi32>
    %176 = arith.sitofp %175 : vector<2x16xi32> to vector<2x16xf32>
    %cst_71 = arith.constant dense<0.000000e+00> : vector<2x32xf32>
    %177 = tpu.matmul %176, %98, %cst_71 {dimension_numbers = #tpu.dot_dimension_numbers<[1], [0], [0], [1], [0, 0, 1, 1], [], []>} : vector<2x16xf32>, vector<16x32xf32>, vector<2x32xf32> -> vector<2x32xf32>
    %c224 = arith.constant 224 : index
    %c0_72 = arith.constant 0 : index
    %178 = vector.load %arg10[%c224, %c0_72] : memref<256x3xf32, #tpu.memory_space<vmem>>, vector<32x3xf32>
    %cst_73 = arith.constant dense<0.000000e+00> : vector<2x3xf32>
    %179 = tpu.matmul %177, %178, %cst_73 {dimension_numbers = #tpu.dot_dimension_numbers<[1], [0], [0], [1], [0, 0, 1, 1], [], []>} : vector<2x32xf32>, vector<32x3xf32>, vector<2x3xf32> -> vector<2x3xf32>
    %180 = arith.addf %171, %179 : vector<2x3xf32>
    %cst_74 = arith.constant dense<0xFF800000> : vector<2xf32>
    %181 = vector.multi_reduction <maximumf>, %180, %cst_74 [1] : vector<2x3xf32> to vector<2xf32>
    %182 = vector.shape_cast %181 : vector<2xf32> to vector<2x1xf32>
    %183 = vector.broadcast %182 : vector<2x1xf32> to vector<2x3xf32>
    %184 = arith.subf %180, %183 : vector<2x3xf32>
    %185 = math.exp %184 : vector<2x3xf32>
    %cst_75 = arith.constant dense<0.000000e+00> : vector<2xf32>
    %186 = vector.multi_reduction <add>, %185, %cst_75 [1] : vector<2x3xf32> to vector<2xf32>
    %187 = vector.shape_cast %186 : vector<2xf32> to vector<2x1xf32>
    %188 = vector.broadcast %187 : vector<2x1xf32> to vector<2x3xf32>
    %189 = arith.divf %185, %188 : vector<2x3xf32>
    %c0_76 = arith.constant 0 : index
    %c0_77 = arith.constant 0 : index
    %190 = vector.load %arg13[%c0_76, %c0_77] : memref<2x3xf32, #tpu.memory_space<vmem>>, vector<2x3xf32>
    tpu.vector_store %arg13[%c0_76, %c0_77], %189 {strides = array<i32>} : memref<2x3xf32, #tpu.memory_space<vmem>>, vector<2x3xf32>,
    return
  }
  func.func @transform_0(%arg0: i32) -> (i32, i32) {
    %c0_i32 = arith.constant 0 : i32
    %c0_i32_0 = arith.constant 0 : i32
    return %arg0, %c0_i32 : i32, i32
  }
  func.func @transform_1(%arg0: i32) -> (i32, i32) {
    %c0_i32 = arith.constant 0 : i32
    %c0_i32_0 = arith.constant 0 : i32
    return %arg0, %c0_i32 : i32, i32
  }
  func.func @transform_2(%arg0: i32) -> (i32, i32) {
    %c0_i32 = arith.constant 0 : i32
    %c0_i32_0 = arith.constant 0 : i32
    %c0_i32_1 = arith.constant 0 : i32
    return %c0_i32, %c0_i32_0 : i32, i32
  }
  func.func @transform_3(%arg0: i32) -> (i32, i32) {
    %c0_i32 = arith.constant 0 : i32
    %c0_i32_0 = arith.constant 0 : i32
    %c0_i32_1 = arith.constant 0 : i32
    return %c0_i32, %c0_i32_0 : i32, i32
  }
  func.func @transform_4(%arg0: i32) -> (i32, i32) {
    %c0_i32 = arith.constant 0 : i32
    %c0_i32_0 = arith.constant 0 : i32
    %c0_i32_1 = arith.constant 0 : i32
    return %c0_i32, %c0_i32_0 : i32, i32
  }
  func.func @transform_5(%arg0: i32) -> (i32, i32) {
    %c0_i32 = arith.constant 0 : i32
    %c0_i32_0 = arith.constant 0 : i32
    %c0_i32_1 = arith.constant 0 : i32
    return %c0_i32, %c0_i32_0 : i32, i32
  }
  func.func @transform_6(%arg0: i32) -> (i32, i32) {
    %c0_i32 = arith.constant 0 : i32
    %c0_i32_0 = arith.constant 0 : i32
    %c0_i32_1 = arith.constant 0 : i32
    return %c0_i32, %c0_i32_0 : i32, i32
  }
  func.func @transform_7(%arg0: i32) -> (i32, i32) {
    %c0_i32 = arith.constant 0 : i32
    %c0_i32_0 = arith.constant 0 : i32
    %c0_i32_1 = arith.constant 0 : i32
    return %c0_i32, %c0_i32_0 : i32, i32
  }
  func.func @transform_8(%arg0: i32) -> (i32, i32) {
    %c0_i32 = arith.constant 0 : i32
    %c0_i32_0 = arith.constant 0 : i32
    %c0_i32_1 = arith.constant 0 : i32
    return %c0_i32, %c0_i32_0 : i32, i32
  }
  func.func @transform_9(%arg0: i32) -> (i32, i32) {
    %c0_i32 = arith.constant 0 : i32
    %c0_i32_0 = arith.constant 0 : i32
    %c0_i32_1 = arith.constant 0 : i32
    return %c0_i32, %c0_i32_0 : i32, i32
  }
  func.func @transform_10(%arg0: i32) -> (i32, i32) {
    %c0_i32 = arith.constant 0 : i32
    %c0_i32_0 = arith.constant 0 : i32
    %c0_i32_1 = arith.constant 0 : i32
    return %c0_i32, %c0_i32_0 : i32, i32
  }
  func.func @transform_11(%arg0: i32) -> (i32, i32) {
    %c0_i32 = arith.constant 0 : i32
    %c0_i32_0 = arith.constant 0 : i32
    %c0_i32_1 = arith.constant 0 : i32
    return %c0_i32, %c0_i32_0 : i32, i32
  }
  func.func @transform_12(%arg0: i32) -> (i32, i32) {
    %c0_i32 = arith.constant 0 : i32
    %c0_i32_0 = arith.constant 0 : i32
    return %arg0, %c0_i32 : i32, i32
  }
}

</mosaic_0001>

<llo_original>
// kernel: tpu_custom_call.1
$region0: #{tpu_custom_call.1}
  #allocation0 [shape = 'u32[]', space=smem, size = 0x4, offset = 0x4, fixed_abs, tag = 'smem constant byte address 0x4 - core index']
  #allocation1 [shape = 'u32[144,128]{1,0:T(1,128)}', space=vmem, size = 0x12000, scoped, tag = 'internal scratch']
  %s0 = inlined_call_operand.vmem [shape: f32[16,32], index: 0, kind: input, shape index: {}]
  %s1 = inlined_call_operand.vmem [shape: f32[2,32], index: 1, kind: input, shape index: {}]
  %s2 = inlined_call_operand.vmem [shape: f32[16,32], index: 2, kind: input, shape index: {}]
  %s3 = inlined_call_operand.vmem [shape: f32[16,16], index: 3, kind: input, shape index: {}]
  %s4 = inlined_call_operand.vmem [shape: f32[32,32], index: 4, kind: input, shape index: {}]
  %s5 = inlined_call_operand.vmem [shape: f32[32,32], index: 5, kind: input, shape index: {}]
  %s6 = inlined_call_operand.vmem [shape: f32[32,32], index: 6, kind: input, shape index: {}]
  %s7 = inlined_call_operand.vmem [shape: f32[32,32], index: 7, kind: input, shape index: {}]
  %s8 = inlined_call_operand.vmem [shape: f32[1,32], index: 8, kind: input, shape index: {}]
  %s9 = inlined_call_operand.vmem [shape: f32[256,3], index: 9, kind: input, shape index: {}]
  %s10 = inlined_call_operand.vmem [shape: f32[32,3], index: 10, kind: input, shape index: {}]
  %s11 = inlined_call_operand.vmem [shape: f32[1,3], index: 11, kind: input, shape index: {}]
  %s12 = inlined_call_operand.hbm [shape: f32[2,3], index: 12, kind: output, shape index: {}]
  %s13 = sld [smem:[#allocation0]]
  $region58: #{tpu_custom_call.1} parent=0
    _
  %s15 = ssub.s32 1, %s13
  %s16 = scalar_select 0, %s15, %s13
  $region1: #{tpu_custom_call.1} parent=0
    #allocation2 [shape = 'u8[1024]{0}', space=vmem, size = 0x400, scoped, tag = 'output window, operand 0, single buffered']
    #allocation3 [shape = 's32[1]{0}', space=sflag, size = 0x4, scoped, tag = 'scoped memory for tpu_custom_call.1']
    %17 = vsyncpa [#allocation3], 0
    // Predicated region
    $region2: #{tpu_custom_call.1} parent=1 // pred_check
      _
    $region3: #{tpu_custom_call.1} parent=1 // pred_check_branch
      %19 = sbr.rel (0) target = $region5
    $region4: #{tpu_custom_call.1} parent=1 // pred_region
      _
    $region5: #{tpu_custom_call.1} parent=1 // pred_fallthru
      _
    // Predicated region
    $region6: #{tpu_custom_call.1} parent=1 // pred_check
      _
    $region7: #{tpu_custom_call.1} parent=1 // pred_check_branch
      %21 = sbr.rel (0) target = $region9
    $region8: #{tpu_custom_call.1} parent=1 // pred_region
      _
    $region9: #{tpu_custom_call.1} parent=1 // pred_fallthru
      _
    // Predicated region
    $region10: #{tpu_custom_call.1} parent=1 // pred_check
      _
    $region11: #{tpu_custom_call.1} parent=1 // pred_check_branch
      %23 = sbr.rel (0) target = $region13
    $region12: #{tpu_custom_call.1} parent=1 // pred_region
      _
    $region13: #{tpu_custom_call.1} parent=1 // pred_fallthru
      _
    // Predicated region
    $region14: #{tpu_custom_call.1} parent=1 // pred_check
      _
    $region15: #{tpu_custom_call.1} parent=1 // pred_check_branch
      %25 = sbr.rel (0) target = $region17
    $region16: #{tpu_custom_call.1} parent=1 // pred_region
      _
    $region17: #{tpu_custom_call.1} parent=1 // pred_fallthru
      _
    // Predicated region
    $region18: #{tpu_custom_call.1} parent=1 // pred_check
      _
    $region19: #{tpu_custom_call.1} parent=1 // pred_check_branch
      %27 = sbr.rel (0) target = $region21
    $region20: #{tpu_custom_call.1} parent=1 // pred_region
      _
    $region21: #{tpu_custom_call.1} parent=1 // pred_fallthru
      _
    // Predicated region
    $region22: #{tpu_custom_call.1} parent=1 // pred_check
      _
    $region23: #{tpu_custom_call.1} parent=1 // pred_check_branch
      %29 = sbr.rel (0) target = $region25
    $region24: #{tpu_custom_call.1} parent=1 // pred_region
      _
    $region25: #{tpu_custom_call.1} parent=1 // pred_fallthru
      _
    // Predicated region
    $region26: #{tpu_custom_call.1} parent=1 // pred_check
      _
    $region27: #{tpu_custom_call.1} parent=1 // pred_check_branch
      %31 = sbr.rel (0) target = $region29
    $region28: #{tpu_custom_call.1} parent=1 // pred_region
      _
    $region29: #{tpu_custom_call.1} parent=1 // pred_fallthru
      _
    // Predicated region
    $region30: #{tpu_custom_call.1} parent=1 // pred_check
      _
    $region31: #{tpu_custom_call.1} parent=1 // pred_check_branch
      %33 = sbr.rel (0) target = $region33
    $region32: #{tpu_custom_call.1} parent=1 // pred_region
      _
    $region33: #{tpu_custom_call.1} parent=1 // pred_fallthru
      _
    // Predicated region
    $region34: #{tpu_custom_call.1} parent=1 // pred_check
      _
    $region35: #{tpu_custom_call.1} parent=1 // pred_check_branch
      %35 = sbr.rel (0) target = $region37
    $region36: #{tpu_custom_call.1} parent=1 // pred_region
      _
    $region37: #{tpu_custom_call.1} parent=1 // pred_fallthru
      _
    // Predicated region
    $region38: #{tpu_custom_call.1} parent=1 // pred_check
      _
    $region39: #{tpu_custom_call.1} parent=1 // pred_check_branch
      %37 = sbr.rel (0) target = $region41
    $region40: #{tpu_custom_call.1} parent=1 // pred_region
      _
    $region41: #{tpu_custom_call.1} parent=1 // pred_fallthru
      _
    // Predicated region
    $region42: #{tpu_custom_call.1} parent=1 // pred_check
      _
    $region43: #{tpu_custom_call.1} parent=1 // pred_check_branch
      %39 = sbr.rel (0) target = $region45
    $region44: #{tpu_custom_call.1} parent=1 // pred_region
      _
    $region45: #{tpu_custom_call.1} parent=1 // pred_fallthru
      _
    // Predicated region
    $region46: #{tpu_custom_call.1} parent=1 // pred_check
      _
    $region47: #{tpu_custom_call.1} parent=1 // pred_check_branch
      %41 = sbr.rel (0) target = $region49
    $region48: #{tpu_custom_call.1} parent=1 // pred_region
      _
    $region49: #{tpu_custom_call.1} parent=1 // pred_fallthru
      _
    %v42 = vld [vmem:[%s0] sm:$0xff]
    %v43 = vld [vmem:[%s0 + $0x8] sm:$0xff]
    %v44 = vld [vmem:[%s2] sm:$0xff]
    %v45 = vld [vmem:[%s2 + $0x8] sm:$0xff]
    %v46 = vadd.f32 %v42, %v44
    %v47 = vadd.f32 %v43, %v45
    %v48 = vld [vmem:[%s3] sm:$0xff]
    %v49 = vld [vmem:[%s3 + $0x8] sm:$0xff]
    %v50 = vld [vmem:[%s4] sm:$0xff]
    %v51 = vld [vmem:[%s4 + $0x8] sm:$0xff]
    %v52 = vld [vmem:[%s4 + $0x10] sm:$0xff]
    %v53 = vld [vmem:[%s4 + $0x18] sm:$0xff]
    %vm54 = vcmask 261120
    %v56 = vsel %vm54, %v46, 0
    %v59 = vsel %vm54, %v47, 0
    %61 = vmatprep.subr.mxu0 0.0
    %62 = vmatpush1.msra.mxu0 %v50
    %63 = vmatprep.subr.mxu0 0.0
    %64 = vmatpush1.msra.mxu0 %v51
    %65 = vmatprep.subr.mxu0 0.0
    %66 = vmatpush1.msra.mxu0 %v52
    %67 = vmatprep.subr.mxu0 0.0
    %68 = vmatpush1.msra.mxu0 %v53
    %69 = vmatprep.subr.mxu0 0.0
    %70 = vmatpush1.msra.mxu0 0.0
    %71 = vmatprep.subr.mxu0 0.0
    %72 = vmatpush1.msra.mxu0 0.0
    %73 = vmatprep.subr.mxu0 0.0
    %74 = vmatpush1.msra.mxu0 0.0
    %75 = vmatprep.subr.mxu0 0.0
    %76 = vmatpush1.msra.mxu0 0.0
    %77 = vmatprep.subr.mxu0 0.0
    %78 = vmatpush1.msra.mxu0 0.0
    %79 = vmatprep.subr.mxu0 0.0
    %80 = vmatpush1.msra.mxu0 0.0
    %81 = vmatprep.subr.mxu0 0.0
    %82 = vmatpush1.msra.mxu0 0.0
    %83 = vmatprep.subr.mxu0 0.0
    %84 = vmatpush1.msra.mxu0 0.0
    %85 = vmatprep.subr.mxu0 0.0
    %86 = vmatpush1.msra.mxu0 0.0
    %87 = vmatprep.subr.mxu0 0.0
    %88 = vmatpush1.msra.mxu0 0.0
    %89 = vmatprep.subr.mxu0 0.0
    %90 = vmatpush1.msra.mxu0 0.0
    %91 = vmatprep.subr.mxu0 0.0
    %92 = vmatpush1.msra.mxu0 0.0
    %93 = vmatprep.subr.mxu0 0.0
    %94 = vmatpush1.msra.mxu0 0.0
    %95 = vmatprep.subr.mxu0 0.0
    %96 = vmatpush1.msra.mxu0 0.0
    %97 = vmatprep.subr.mxu0 0.0
    %98 = vmatpush1.msra.mxu0 0.0
    %99 = vmatprep.subr.mxu0 0.0
    %100 = vmatpush1.msra.mxu0 0.0
    %101 = vmatprep.subr.mxu0 0.0
    %102 = vmatpush1.msra.mxu0 0.0
    %103 = vmatprep.subr.mxu0 0.0
    %104 = vmatpush1.msra.mxu0 0.0
    %105 = vmatprep.subr.mxu0 0.0
    %106 = vmatpush1.msra.mxu0 0.0
    %107 = vmatprep.subr.mxu0 0.0
    %108 = vmatpush1.msra.mxu0 0.0
    %109 = vmatprep.subr.mxu0 0.0
    %110 = vmatpush1.msra.mxu0 0.0
    %111 = vmatprep.subr.mxu0 0.0
    %112 = vmatpush1.msra.mxu0 0.0
    %113 = vmatprep.subr.mxu0 0.0
    %114 = vmatpush1.msra.mxu0 0.0
    %115 = vmatprep.subr.mxu0 0.0
    %116 = vmatpush1.msra.mxu0 0.0
    %117 = vmatprep.subr.mxu0 0.0
    %118 = vmatpush1.msra.mxu0 0.0
    %119 = vmatprep.subr.mxu0 0.0
    %120 = vmatpush1.msra.mxu0 0.0
    %121 = vmatprep.subr.mxu0 0.0
    %122 = vmatpush1.msra.mxu0 0.0
    %123 = vmatprep.subr.mxu0 0.0
    %124 = vmatpush1.msra.mxu0 0.0
    %125 = vmatprep.mubr.f32.mxu0 0.0
    %126 = vmatmul.mubr.f32.gmra.mrb[0].mxu0 %v56
    %v127 = vpop.f32.mrb[0].mxu0
    %v128 = vadd.f32 0.0, %v127
    %v129 = vpop.f32.mrb[0].mxu0
    %130 = vmatprep.mubr.f32.mxu0 0.0
    %131 = vmatmul.mubr.f32.gmra.mrb[0].mxu0 %v59
    %v132 = vpop.f32.mrb[0].mxu0
    %v133 = vadd.f32 0.0, %v132
    %v134 = vpop.f32.mrb[0].mxu0
    %135 = vdwg.mxu0
    %v136 = vld [vmem:[%s5] sm:$0xff]
    %v137 = vld [vmem:[%s5 + $0x8] sm:$0xff]
    %v138 = vld [vmem:[%s5 + $0x10] sm:$0xff]
    %v139 = vld [vmem:[%s5 + $0x18] sm:$0xff]
    %140 = vmatprep.subr.mxu0 0.0
    %141 = vmatpush1.msra.mxu0 %v136
    %142 = vmatprep.subr.mxu0 0.0
    %143 = vmatpush1.msra.mxu0 %v137
    %144 = vmatprep.subr.mxu0 0.0
    %145 = vmatpush1.msra.mxu0 %v138
    %146 = vmatprep.subr.mxu0 0.0
    %147 = vmatpush1.msra.mxu0 %v139
    %148 = vmatprep.subr.mxu0 0.0
    %149 = vmatpush1.msra.mxu0 0.0
    %150 = vmatprep.subr.mxu0 0.0
    %151 = vmatpush1.msra.mxu0 0.0
    %152 = vmatprep.subr.mxu0 0.0
    %153 = vmatpush1.msra.mxu0 0.0
    %154 = vmatprep.subr.mxu0 0.0
    %155 = vmatpush1.msra.mxu0 0.0
    %156 = vmatprep.subr.mxu0 0.0
    %157 = vmatpush1.msra.mxu0 0.0
    %158 = vmatprep.subr.mxu0 0.0
    %159 = vmatpush1.msra.mxu0 0.0
    %160 = vmatprep.subr.mxu0 0.0
    %161 = vmatpush1.msra.mxu0 0.0
    %162 = vmatprep.subr.mxu0 0.0
    %163 = vmatpush1.msra.mxu0 0.0
    %164 = vmatprep.subr.mxu0 0.0
    %165 = vmatpush1.msra.mxu0 0.0
    %166 = vmatprep.subr.mxu0 0.0
    %167 = vmatpush1.msra.mxu0 0.0
    %168 = vmatprep.subr.mxu0 0.0
    %169 = vmatpush1.msra.mxu0 0.0
    %170 = vmatprep.subr.mxu0 0.0
    %171 = vmatpush1.msra.mxu0 0.0
    %172 = vmatprep.subr.mxu0 0.0
    %173 = vmatpush1.msra.mxu0 0.0
    %174 = vmatprep.subr.mxu0 0.0
    %175 = vmatpush1.msra.mxu0 0.0
    %176 = vmatprep.subr.mxu0 0.0
    %177 = vmatpush1.msra.mxu0 0.0
    %178 = vmatprep.subr.mxu0 0.0
    %179 = vmatpush1.msra.mxu0 0.0
    %180 = vmatprep.subr.mxu0 0.0
    %181 = vmatpush1.msra.mxu0 0.0
    %182 = vmatprep.subr.mxu0 0.0
    %183 = vmatpush1.msra.mxu0 0.0
    %184 = vmatprep.subr.mxu0 0.0
    %185 = vmatpush1.msra.mxu0 0.0
    %186 = vmatprep.subr.mxu0 0.0
    %187 = vmatpush1.msra.mxu0 0.0
    %188 = vmatprep.subr.mxu0 0.0
    %189 = vmatpush1.msra.mxu0 0.0
    %190 = vmatprep.subr.mxu0 0.0
    %191 = vmatpush1.msra.mxu0 0.0
    %192 = vmatprep.subr.mxu0 0.0
    %193 = vmatpush1.msra.mxu0 0.0
    %194 = vmatprep.subr.mxu0 0.0
    %195 = vmatpush1.msra.mxu0 0.0
    %196 = vmatprep.subr.mxu0 0.0
    %197 = vmatpush1.msra.mxu0 0.0
    %198 = vmatprep.subr.mxu0 0.0
    %199 = vmatpush1.msra.mxu0 0.0
    %200 = vmatprep.subr.mxu0 0.0
    %201 = vmatpush1.msra.mxu0 0.0
    %202 = vmatprep.subr.mxu0 0.0
    %203 = vmatpush1.msra.mxu0 0.0
    %204 = vmatprep.mubr.f32.mxu0 0.0
    %205 = vmatmul.mubr.f32.gmra.mrb[0].mxu0 %v56
    %v206 = vpop.f32.mrb[0].mxu0
    %v207 = vadd.f32 0.0, %v206
    %v208 = vpop.f32.mrb[0].mxu0
    %209 = vmatprep.mubr.f32.mxu0 0.0
    %210 = vmatmul.mubr.f32.gmra.mrb[0].mxu0 %v59
    %v211 = vpop.f32.mrb[0].mxu0
    %v212 = vadd.f32 0.0, %v211
    %v213 = vpop.f32.mrb[0].mxu0
    %214 = vdwg.mxu0
    %v215 = vld [vmem:[%s6] sm:$0xff]
    %v216 = vld [vmem:[%s6 + $0x8] sm:$0xff]
    %v217 = vld [vmem:[%s6 + $0x10] sm:$0xff]
    %v218 = vld [vmem:[%s6 + $0x18] sm:$0xff]
    %219 = vmatprep.subr.mxu0 0.0
    %220 = vmatpush1.msra.mxu0 %v215
    %221 = vmatprep.subr.mxu0 0.0
    %222 = vmatpush1.msra.mxu0 %v216
    %223 = vmatprep.subr.mxu0 0.0
    %224 = vmatpush1.msra.mxu0 %v217
    %225 = vmatprep.subr.mxu0 0.0
    %226 = vmatpush1.msra.mxu0 %v218
    %227 = vmatprep.subr.mxu0 0.0
    %228 = vmatpush1.msra.mxu0 0.0
    %229 = vmatprep.subr.mxu0 0.0
    %230 = vmatpush1.msra.mxu0 0.0
    %231 = vmatprep.subr.mxu0 0.0
    %232 = vmatpush1.msra.mxu0 0.0
    %233 = vmatprep.subr.mxu0 0.0
    %234 = vmatpush1.msra.mxu0 0.0
    %235 = vmatprep.subr.mxu0 0.0
    %236 = vmatpush1.msra.mxu0 0.0
    %237 = vmatprep.subr.mxu0 0.0
    %238 = vmatpush1.msra.mxu0 0.0
    %239 = vmatprep.subr.mxu0 0.0
    %240 = vmatpush1.msra.mxu0 0.0
    %241 = vmatprep.subr.mxu0 0.0
    %242 = vmatpush1.msra.mxu0 0.0
    %243 = vmatprep.subr.mxu0 0.0
    %244 = vmatpush1.msra.mxu0 0.0
    %245 = vmatprep.subr.mxu0 0.0
    %246 = vmatpush1.msra.mxu0 0.0
    %247 = vmatprep.subr.mxu0 0.0
    %248 = vmatpush1.msra.mxu0 0.0
    %249 = vmatprep.subr.mxu0 0.0
    %250 = vmatpush1.msra.mxu0 0.0
    %251 = vmatprep.subr.mxu0 0.0
    %252 = vmatpush1.msra.mxu0 0.0
    %253 = vmatprep.subr.mxu0 0.0
    %254 = vmatpush1.msra.mxu0 0.0
    %255 = vmatprep.subr.mxu0 0.0
    %256 = vmatpush1.msra.mxu0 0.0
    %257 = vmatprep.subr.mxu0 0.0
    %258 = vmatpush1.msra.mxu0 0.0
    %259 = vmatprep.subr.mxu0 0.0
    %260 = vmatpush1.msra.mxu0 0.0
    %261 = vmatprep.subr.mxu0 0.0
    %262 = vmatpush1.msra.mxu0 0.0
    %263 = vmatprep.subr.mxu0 0.0
    %264 = vmatpush1.msra.mxu0 0.0
    %265 = vmatprep.subr.mxu0 0.0
    %266 = vmatpush1.msra.mxu0 0.0
    %267 = vmatprep.subr.mxu0 0.0
    %268 = vmatpush1.msra.mxu0 0.0
    %269 = vmatprep.subr.mxu0 0.0
    %270 = vmatpush1.msra.mxu0 0.0
    %271 = vmatprep.subr.mxu0 0.0
    %272 = vmatpush1.msra.mxu0 0.0
    %273 = vmatprep.subr.mxu0 0.0
    %274 = vmatpush1.msra.mxu0 0.0
    %275 = vmatprep.subr.mxu0 0.0
    %276 = vmatpush1.msra.mxu0 0.0
    %277 = vmatprep.subr.mxu0 0.0
    %278 = vmatpush1.msra.mxu0 0.0
    %279 = vmatprep.subr.mxu0 0.0
    %280 = vmatpush1.msra.mxu0 0.0
    %281 = vmatprep.subr.mxu0 0.0
    %282 = vmatpush1.msra.mxu0 0.0
    %283 = vmatprep.mubr.f32.mxu0 0.0
    %284 = vmatmul.mubr.f32.gmra.mrb[0].mxu0 %v56
    %v285 = vpop.f32.mrb[0].mxu0
    %v286 = vadd.f32 0.0, %v285
    %v287 = vpop.f32.mrb[0].mxu0
    %288 = vmatprep.mubr.f32.mxu0 0.0
    %289 = vmatmul.mubr.f32.gmra.mrb[0].mxu0 %v59
    %v290 = vpop.f32.mrb[0].mxu0
    %v291 = vadd.f32 0.0, %v290
    %v292 = vpop.f32.mrb[0].mxu0
    %293 = vdwg.mxu0
    %v294 = vld [vmem:[%s7] sm:$0xff]
    %v295 = vld [vmem:[%s7 + $0x8] sm:$0xff]
    %v296 = vld [vmem:[%s7 + $0x10] sm:$0xff]
    %v297 = vld [vmem:[%s7 + $0x18] sm:$0xff]
    %vm298 = vcmask 64512
    %v300 = vsel %vm298, %v128, 0
    %v303 = vsel %vm298, %v133, 0
    %v306 = vsel %vm298, %v207, 0
    %v309 = vsel %vm298, %v212, 0
    %311 = vmatprep.subr.mxu0 0.0
    %312 = vmatpush1.xpose.msra.mxu0 %v306
    %313 = vmatprep.subr.mxu0 0.0
    %314 = vmatpush1.xpose.msra.mxu0 %v309
    %315 = vmatprep.subr.mxu0 0.0
    %316 = vmatpush1.xpose.msra.mxu0 0.0
    %317 = vmatprep.subr.mxu0 0.0
    %318 = vmatpush1.xpose.msra.mxu0 0.0
    %319 = vmatprep.subr.mxu0 0.0
    %320 = vmatpush1.xpose.msra.mxu0 0.0
    %321 = vmatprep.subr.mxu0 0.0
    %322 = vmatpush1.xpose.msra.mxu0 0.0
    %323 = vmatprep.subr.mxu0 0.0
    %324 = vmatpush1.xpose.msra.mxu0 0.0
    %325 = vmatprep.subr.mxu0 0.0
    %326 = vmatpush1.xpose.msra.mxu0 0.0
    %327 = vmatprep.subr.mxu0 0.0
    %328 = vmatpush1.xpose.msra.mxu0 0.0
    %329 = vmatprep.subr.mxu0 0.0
    %330 = vmatpush1.xpose.msra.mxu0 0.0
    %331 = vmatprep.subr.mxu0 0.0
    %332 = vmatpush1.xpose.msra.mxu0 0.0
    %333 = vmatprep.subr.mxu0 0.0
    %334 = vmatpush1.xpose.msra.mxu0 0.0
    %335 = vmatprep.subr.mxu0 0.0
    %336 = vmatpush1.xpose.msra.mxu0 0.0
    %337 = vmatprep.subr.mxu0 0.0
    %338 = vmatpush1.xpose.msra.mxu0 0.0
    %339 = vmatprep.subr.mxu0 0.0
    %340 = vmatpush1.xpose.msra.mxu0 0.0
    %341 = vmatprep.subr.mxu0 0.0
    %342 = vmatpush1.xpose.msra.mxu0 0.0
    %343 = vmatprep.subr.mxu0 0.0
    %344 = vmatpush1.xpose.msra.mxu0 0.0
    %345 = vmatprep.subr.mxu0 0.0
    %346 = vmatpush1.xpose.msra.mxu0 0.0
    %347 = vmatprep.subr.mxu0 0.0
    %348 = vmatpush1.xpose.msra.mxu0 0.0
    %349 = vmatprep.subr.mxu0 0.0
    %350 = vmatpush1.xpose.msra.mxu0 0.0
    %351 = vmatprep.subr.mxu0 0.0
    %352 = vmatpush1.xpose.msra.mxu0 0.0
    %353 = vmatprep.subr.mxu0 0.0
    %354 = vmatpush1.xpose.msra.mxu0 0.0
    %355 = vmatprep.subr.mxu0 0.0
    %356 = vmatpush1.xpose.msra.mxu0 0.0
    %357 = vmatprep.subr.mxu0 0.0
    %358 = vmatpush1.xpose.msra.mxu0 0.0
    %359 = vmatprep.subr.mxu0 0.0
    %360 = vmatpush1.xpose.msra.mxu0 0.0
    %361 = vmatprep.subr.mxu0 0.0
    %362 = vmatpush1.xpose.msra.mxu0 0.0
    %363 = vmatprep.subr.mxu0 0.0
    %364 = vmatpush1.xpose.msra.mxu0 0.0
    %365 = vmatprep.subr.mxu0 0.0
    %366 = vmatpush1.xpose.msra.mxu0 0.0
    %367 = vmatprep.subr.mxu0 0.0
    %368 = vmatpush1.xpose.msra.mxu0 0.0
    %369 = vmatprep.subr.mxu0 0.0
    %370 = vmatpush1.xpose.msra.mxu0 0.0
    %371 = vmatprep.subr.mxu0 0.0
    %372 = vmatpush1.xpose.msra.mxu0 0.0
    %373 = vmatprep.subr.mxu0 0.0
    %374 = vmatpush1.xpose.msra.mxu0 0.0
    %375 = vmatprep.mubr.f32.mxu0 0.0
    %376 = vmatmul.mubr.f32.gmra.mrb[0].mxu0 %v300
    %v377 = vpop.f32.mrb[0].mxu0
    %v378 = vadd.f32 0.0, %v377
    %v379 = vpop.f32.mrb[0].mxu0
    %380 = vmatprep.mubr.f32.mxu0 0.0
    %381 = vmatmul.mubr.f32.gmra.mrb[0].mxu0 %v303
    %v382 = vpop.f32.mrb[0].mxu0
    %v383 = vadd.f32 0.0, %v382
    %v384 = vpop.f32.mrb[0].mxu0
    %385 = vdwg.mxu0
    %v386 = vmul.f32 %v378, 0.17677669
    %v387 = vmul.f32 %v383, 0.17677669
    %v388 = vadd.f32 %v386, %v48
    %v389 = vadd.f32 %v387, %v49
    %vm390 = vcmask 130048
    %v391 = vsel %vm390, %v388, -inf
    %392 = vmax.xlane.f32.xlu0 %v391
    %v393 = vpop.xlane.xlu0 %392
    %v394 = vsel %vm390, %v389, -inf
    %395 = vmax.xlane.f32.xlu0 %v394
    %v396 = vpop.xlane.xlu0 %395
    %v397 = vsub.f32 %v388, %v393
    %v398 = vsub.f32 %v389, %v396
    %v399 = vmul.f32 %v397, 1.442695
    %v400 = vpow.pop %v399
    %v401 = vmul.f32 %v398, 1.442695
    %v402 = vpow.pop %v401
    %v403 = vsel %vm390, %v400, 0.0
    %404 = vadd.xlane.f32.xlu0 %v403
    %v405 = vpop.xlane.xlu0 %404
    %v406 = vsel %vm390, %v402, 0.0
    %407 = vadd.xlane.f32.xlu0 %v406
    %v408 = vpop.xlane.xlu0 %407
    %v409 = vrcp.pop %v405
    %v410 = vrcp.pop %v408
    %v411 = vmul.f32 %v400, %v409
    %v412 = vmul.f32 %v402, %v410
    %v414 = vsel %vm390, %v411, 0
    %v417 = vsel %vm390, %v412, 0
    %419 = vmatprep.subr.mxu0 0.0
    %420 = vmatpush1.msra.mxu0 %v286
    %421 = vmatprep.subr.mxu0 0.0
    %422 = vmatpush1.msra.mxu0 %v291
    %423 = vmatprep.subr.mxu0 0.0
    %424 = vmatpush1.msra.mxu0 0.0
    %425 = vmatprep.subr.mxu0 0.0
    %426 = vmatpush1.msra.mxu0 0.0
    %427 = vmatprep.subr.mxu0 0.0
    %428 = vmatpush1.msra.mxu0 0.0
    %429 = vmatprep.subr.mxu0 0.0
    %430 = vmatpush1.msra.mxu0 0.0
    %431 = vmatprep.subr.mxu0 0.0
    %432 = vmatpush1.msra.mxu0 0.0
    %433 = vmatprep.subr.mxu0 0.0
    %434 = vmatpush1.msra.mxu0 0.0
    %435 = vmatprep.subr.mxu0 0.0
    %436 = vmatpush1.msra.mxu0 0.0
    %437 = vmatprep.subr.mxu0 0.0
    %438 = vmatpush1.msra.mxu0 0.0
    %439 = vmatprep.subr.mxu0 0.0
    %440 = vmatpush1.msra.mxu0 0.0
    %441 = vmatprep.subr.mxu0 0.0
    %442 = vmatpush1.msra.mxu0 0.0
    %443 = vmatprep.subr.mxu0 0.0
    %444 = vmatpush1.msra.mxu0 0.0
    %445 = vmatprep.subr.mxu0 0.0
    %446 = vmatpush1.msra.mxu0 0.0
    %447 = vmatprep.subr.mxu0 0.0
    %448 = vmatpush1.msra.mxu0 0.0
    %449 = vmatprep.subr.mxu0 0.0
    %450 = vmatpush1.msra.mxu0 0.0
    %451 = vmatprep.subr.mxu0 0.0
    %452 = vmatpush1.msra.mxu0 0.0
    %453 = vmatprep.subr.mxu0 0.0
    %454 = vmatpush1.msra.mxu0 0.0
    %455 = vmatprep.subr.mxu0 0.0
    %456 = vmatpush1.msra.mxu0 0.0
    %457 = vmatprep.subr.mxu0 0.0
    %458 = vmatpush1.msra.mxu0 0.0
    %459 = vmatprep.subr.mxu0 0.0
    %460 = vmatpush1.msra.mxu0 0.0
    %461 = vmatprep.subr.mxu0 0.0
    %462 = vmatpush1.msra.mxu0 0.0
    %463 = vmatprep.subr.mxu0 0.0
    %464 = vmatpush1.msra.mxu0 0.0
    %465 = vmatprep.subr.mxu0 0.0
    %466 = vmatpush1.msra.mxu0 0.0
    %467 = vmatprep.subr.mxu0 0.0
    %468 = vmatpush1.msra.mxu0 0.0
    %469 = vmatprep.subr.mxu0 0.0
    %470 = vmatpush1.msra.mxu0 0.0
    %471 = vmatprep.subr.mxu0 0.0
    %472 = vmatpush1.msra.mxu0 0.0
    %473 = vmatprep.subr.mxu0 0.0
    %474 = vmatpush1.msra.mxu0 0.0
    %475 = vmatprep.subr.mxu0 0.0
    %476 = vmatpush1.msra.mxu0 0.0
    %477 = vmatprep.subr.mxu0 0.0
    %478 = vmatpush1.msra.mxu0 0.0
    %479 = vmatprep.subr.mxu0 0.0
    %480 = vmatpush1.msra.mxu0 0.0
    %481 = vmatprep.subr.mxu0 0.0
    %482 = vmatpush1.msra.mxu0 0.0
    %483 = vmatprep.mubr.f32.mxu0 0.0
    %484 = vmatmul.mubr.f32.gmra.mrb[0].mxu0 %v414
    %v485 = vpop.f32.mrb[0].mxu0
    %v486 = vadd.f32 0.0, %v485
    %v487 = vpop.f32.mrb[0].mxu0
    %488 = vmatprep.mubr.f32.mxu0 0.0
    %489 = vmatmul.mubr.f32.gmra.mrb[0].mxu0 %v417
    %v490 = vpop.f32.mrb[0].mxu0
    %v491 = vadd.f32 0.0, %v490
    %v492 = vpop.f32.mrb[0].mxu0
    %493 = vdwg.mxu0
    %494 = vrot.lane.b32.xlu0 %v128, 120
    %v495 = vpop.permute.xlu0 %494
    %496 = vrot.lane.b32.xlu0 %v133, 120
    %v497 = vpop.permute.xlu0 %496
    %498 = vrot.lane.b32.xlu0 %v207, 120
    %v499 = vpop.permute.xlu0 %498
    %500 = vrot.lane.b32.xlu0 %v212, 120
    %v501 = vpop.permute.xlu0 %500
    %v502 = vsel %vm298, %v495, 0
    %v504 = vsel %vm298, %v497, 0
    %v506 = vsel %vm298, %v499, 0
    %v508 = vsel %vm298, %v501, 0
    %510 = vmatprep.subr.mxu0 0.0
    %511 = vmatpush1.xpose.msra.mxu0 %v506
    %512 = vmatprep.subr.mxu0 0.0
    %513 = vmatpush1.xpose.msra.mxu0 %v508
    %514 = vmatprep.subr.mxu0 0.0
    %515 = vmatpush1.xpose.msra.mxu0 0.0
    %516 = vmatprep.subr.mxu0 0.0
    %517 = vmatpush1.xpose.msra.mxu0 0.0
    %518 = vmatprep.subr.mxu0 0.0
    %519 = vmatpush1.xpose.msra.mxu0 0.0
    %520 = vmatprep.subr.mxu0 0.0
    %521 = vmatpush1.xpose.msra.mxu0 0.0
    %522 = vmatprep.subr.mxu0 0.0
    %523 = vmatpush1.xpose.msra.mxu0 0.0
    %524 = vmatprep.subr.mxu0 0.0
    %525 = vmatpush1.xpose.msra.mxu0 0.0
    %526 = vmatprep.subr.mxu0 0.0
    %527 = vmatpush1.xpose.msra.mxu0 0.0
    %528 = vmatprep.subr.mxu0 0.0
    %529 = vmatpush1.xpose.msra.mxu0 0.0
    %530 = vmatprep.subr.mxu0 0.0
    %531 = vmatpush1.xpose.msra.mxu0 0.0
    %532 = vmatprep.subr.mxu0 0.0
    %533 = vmatpush1.xpose.msra.mxu0 0.0
    %534 = vmatprep.subr.mxu0 0.0
    %535 = vmatpush1.xpose.msra.mxu0 0.0
    %536 = vmatprep.subr.mxu0 0.0
    %537 = vmatpush1.xpose.msra.mxu0 0.0
    %538 = vmatprep.subr.mxu0 0.0
    %539 = vmatpush1.xpose.msra.mxu0 0.0
    %540 = vmatprep.subr.mxu0 0.0
    %541 = vmatpush1.xpose.msra.mxu0 0.0
    %542 = vmatprep.subr.mxu0 0.0
    %543 = vmatpush1.xpose.msra.mxu0 0.0
    %544 = vmatprep.subr.mxu0 0.0
    %545 = vmatpush1.xpose.msra.mxu0 0.0
    %546 = vmatprep.subr.mxu0 0.0
    %547 = vmatpush1.xpose.msra.mxu0 0.0
    %548 = vmatprep.subr.mxu0 0.0
    %549 = vmatpush1.xpose.msra.mxu0 0.0
    %550 = vmatprep.subr.mxu0 0.0
    %551 = vmatpush1.xpose.msra.mxu0 0.0
    %552 = vmatprep.subr.mxu0 0.0
    %553 = vmatpush1.xpose.msra.mxu0 0.0
    %554 = vmatprep.subr.mxu0 0.0
    %555 = vmatpush1.xpose.msra.mxu0 0.0
    %556 = vmatprep.subr.mxu0 0.0
    %557 = vmatpush1.xpose.msra.mxu0 0.0
    %558 = vmatprep.subr.mxu0 0.0
    %559 = vmatpush1.xpose.msra.mxu0 0.0
    %560 = vmatprep.subr.mxu0 0.0
    %561 = vmatpush1.xpose.msra.mxu0 0.0
    %562 = vmatprep.subr.mxu0 0.0
    %563 = vmatpush1.xpose.msra.mxu0 0.0
    %564 = vmatprep.subr.mxu0 0.0
    %565 = vmatpush1.xpose.msra.mxu0 0.0
    %566 = vmatprep.subr.mxu0 0.0
    %567 = vmatpush1.xpose.msra.mxu0 0.0
    %568 = vmatprep.subr.mxu0 0.0
    %569 = vmatpush1.xpose.msra.mxu0 0.0
    %570 = vmatprep.subr.mxu0 0.0
    %571 = vmatpush1.xpose.msra.mxu0 0.0
    %572 = vmatprep.subr.mxu0 0.0
    %573 = vmatpush1.xpose.msra.mxu0 0.0
    %574 = vmatprep.mubr.f32.mxu0 0.0
    %575 = vmatmul.mubr.f32.gmra.mrb[0].mxu0 %v502
    %v576 = vpop.f32.mrb[0].mxu0
    %v577 = vadd.f32 0.0, %v576
    %v578 = vpop.f32.mrb[0].mxu0
    %579 = vmatprep.mubr.f32.mxu0 0.0
    %580 = vmatmul.mubr.f32.gmra.mrb[0].mxu0 %v504
    %v581 = vpop.f32.mrb[0].mxu0
    %v582 = vadd.f32 0.0, %v581
    %v583 = vpop.f32.mrb[0].mxu0
    %584 = vdwg.mxu0
    %v585 = vmul.f32 %v577, 0.17677669
    %v586 = vmul.f32 %v582, 0.17677669
    %v587 = vadd.f32 %v585, %v48
    %v588 = vadd.f32 %v586, %v49
    %v589 = vsel %vm390, %v587, -inf
    %590 = vmax.xlane.f32.xlu0 %v589
    %v591 = vpop.xlane.xlu0 %590
    %v592 = vsel %vm390, %v588, -inf
    %593 = vmax.xlane.f32.xlu0 %v592
    %v594 = vpop.xlane.xlu0 %593
    %v595 = vsub.f32 %v587, %v591
    %v596 = vsub.f32 %v588, %v594
    %v597 = vmul.f32 %v595, 1.442695
    %v598 = vpow.pop %v597
    %v599 = vmul.f32 %v596, 1.442695
    %v600 = vpow.pop %v599
    %v601 = vsel %vm390, %v598, 0.0
    %602 = vadd.xlane.f32.xlu0 %v601
    %v603 = vpop.xlane.xlu0 %602
    %v604 = vsel %vm390, %v600, 0.0
    %605 = vadd.xlane.f32.xlu0 %v604
    %v606 = vpop.xlane.xlu0 %605
    %v607 = vrcp.pop %v603
    %v608 = vrcp.pop %v606
    %v609 = vmul.f32 %v598, %v607
    %v610 = vmul.f32 %v600, %v608
    %613 = vrot.lane.b32.xlu0 %v286, 120
    %v614 = vpop.permute.xlu0 %613
    %615 = vrot.lane.b32.xlu0 %v291, 120
    %v616 = vpop.permute.xlu0 %615
    %v620 = vsel %vm390, %v609, 0
    %v623 = vsel %vm390, %v610, 0
    %625 = vmatprep.subr.mxu0 0.0
    %626 = vmatpush1.msra.mxu0 %v614
    %627 = vmatprep.subr.mxu0 0.0
    %628 = vmatpush1.msra.mxu0 %v616
    %629 = vmatprep.subr.mxu0 0.0
    %630 = vmatpush1.msra.mxu0 0.0
    %631 = vmatprep.subr.mxu0 0.0
    %632 = vmatpush1.msra.mxu0 0.0
    %633 = vmatprep.subr.mxu0 0.0
    %634 = vmatpush1.msra.mxu0 0.0
    %635 = vmatprep.subr.mxu0 0.0
    %636 = vmatpush1.msra.mxu0 0.0
    %637 = vmatprep.subr.mxu0 0.0
    %638 = vmatpush1.msra.mxu0 0.0
    %639 = vmatprep.subr.mxu0 0.0
    %640 = vmatpush1.msra.mxu0 0.0
    %641 = vmatprep.subr.mxu0 0.0
    %642 = vmatpush1.msra.mxu0 0.0
    %643 = vmatprep.subr.mxu0 0.0
    %644 = vmatpush1.msra.mxu0 0.0
    %645 = vmatprep.subr.mxu0 0.0
    %646 = vmatpush1.msra.mxu0 0.0
    %647 = vmatprep.subr.mxu0 0.0
    %648 = vmatpush1.msra.mxu0 0.0
    %649 = vmatprep.subr.mxu0 0.0
    %650 = vmatpush1.msra.mxu0 0.0
    %651 = vmatprep.subr.mxu0 0.0
    %652 = vmatpush1.msra.mxu0 0.0
    %653 = vmatprep.subr.mxu0 0.0
    %654 = vmatpush1.msra.mxu0 0.0
    %655 = vmatprep.subr.mxu0 0.0
    %656 = vmatpush1.msra.mxu0 0.0
    %657 = vmatprep.subr.mxu0 0.0
    %658 = vmatpush1.msra.mxu0 0.0
    %659 = vmatprep.subr.mxu0 0.0
    %660 = vmatpush1.msra.mxu0 0.0
    %661 = vmatprep.subr.mxu0 0.0
    %662 = vmatpush1.msra.mxu0 0.0
    %663 = vmatprep.subr.mxu0 0.0
    %664 = vmatpush1.msra.mxu0 0.0
    %665 = vmatprep.subr.mxu0 0.0
    %666 = vmatpush1.msra.mxu0 0.0
    %667 = vmatprep.subr.mxu0 0.0
    %668 = vmatpush1.msra.mxu0 0.0
    %669 = vmatprep.subr.mxu0 0.0
    %670 = vmatpush1.msra.mxu0 0.0
    %671 = vmatprep.subr.mxu0 0.0
    %672 = vmatpush1.msra.mxu0 0.0
    %673 = vmatprep.subr.mxu0 0.0
    %674 = vmatpush1.msra.mxu0 0.0
    %675 = vmatprep.subr.mxu0 0.0
    %676 = vmatpush1.msra.mxu0 0.0
    %677 = vmatprep.subr.mxu0 0.0
    %678 = vmatpush1.msra.mxu0 0.0
    %679 = vmatprep.subr.mxu0 0.0
    %680 = vmatpush1.msra.mxu0 0.0
    %681 = vmatprep.subr.mxu0 0.0
    %682 = vmatpush1.msra.mxu0 0.0
    %683 = vmatprep.subr.mxu0 0.0
    %684 = vmatpush1.msra.mxu0 0.0
    %685 = vmatprep.subr.mxu0 0.0
    %686 = vmatpush1.msra.mxu0 0.0
    %687 = vmatprep.subr.mxu0 0.0
    %688 = vmatpush1.msra.mxu0 0.0
    %689 = vmatprep.mubr.f32.mxu0 0.0
    %690 = vmatmul.mubr.f32.gmra.mrb[0].mxu0 %v620
    %v691 = vpop.f32.mrb[0].mxu0
    %v692 = vadd.f32 0.0, %v691
    %v693 = vpop.f32.mrb[0].mxu0
    %694 = vmatprep.mubr.f32.mxu0 0.0
    %695 = vmatmul.mubr.f32.gmra.mrb[0].mxu0 %v623
    %v696 = vpop.f32.mrb[0].mxu0
    %v697 = vadd.f32 0.0, %v696
    %v698 = vpop.f32.mrb[0].mxu0
    %699 = vdwg.mxu0
    %v701 = vsel %vm298, %v692, 0
    %v704 = vsel %vm298, %v697, 0
    %706 = vmatprep.subr.mxu0 0.0
    %707 = vmatpush1.msra.mxu0 %v295
    %708 = vmatprep.subr.mxu0 0.0
    %709 = vmatpush1.msra.mxu0 0.0
    %710 = vmatprep.subr.mxu0 0.0
    %711 = vmatpush1.msra.mxu0 0.0
    %712 = vmatprep.subr.mxu0 0.0
    %713 = vmatpush1.msra.mxu0 0.0
    %714 = vmatprep.subr.mxu0 0.0
    %715 = vmatpush1.msra.mxu0 0.0
    %716 = vmatprep.subr.mxu0 0.0
    %717 = vmatpush1.msra.mxu0 0.0
    %718 = vmatprep.subr.mxu0 0.0
    %719 = vmatpush1.msra.mxu0 0.0
    %720 = vmatprep.subr.mxu0 0.0
    %721 = vmatpush1.msra.mxu0 0.0
    %722 = vmatprep.subr.mxu0 0.0
    %723 = vmatpush1.msra.mxu0 0.0
    %724 = vmatprep.subr.mxu0 0.0
    %725 = vmatpush1.msra.mxu0 0.0
    %726 = vmatprep.subr.mxu0 0.0
    %727 = vmatpush1.msra.mxu0 0.0
    %728 = vmatprep.subr.mxu0 0.0
    %729 = vmatpush1.msra.mxu0 0.0
    %730 = vmatprep.subr.mxu0 0.0
    %731 = vmatpush1.msra.mxu0 0.0
    %732 = vmatprep.subr.mxu0 0.0
    %733 = vmatpush1.msra.mxu0 0.0
    %734 = vmatprep.subr.mxu0 0.0
    %735 = vmatpush1.msra.mxu0 0.0
    %736 = vmatprep.subr.mxu0 0.0
    %737 = vmatpush1.msra.mxu0 0.0
    %738 = vmatprep.subr.mxu0 0.0
    %739 = vmatpush1.msra.mxu0 0.0
    %740 = vmatprep.subr.mxu0 0.0
    %741 = vmatpush1.msra.mxu0 0.0
    %742 = vmatprep.subr.mxu0 0.0
    %743 = vmatpush1.msra.mxu0 0.0
    %744 = vmatprep.subr.mxu0 0.0
    %745 = vmatpush1.msra.mxu0 0.0
    %746 = vmatprep.subr.mxu0 0.0
    %747 = vmatpush1.msra.mxu0 0.0
    %748 = vmatprep.subr.mxu0 0.0
    %749 = vmatpush1.msra.mxu0 0.0
    %750 = vmatprep.subr.mxu0 0.0
    %751 = vmatpush1.msra.mxu0 0.0
    %752 = vmatprep.subr.mxu0 0.0
    %753 = vmatpush1.msra.mxu0 0.0
    %754 = vmatprep.subr.mxu0 0.0
    %755 = vmatpush1.msra.mxu0 0.0
    %756 = vmatprep.subr.mxu0 0.0
    %757 = vmatpush1.msra.mxu0 0.0
    %758 = vmatprep.subr.mxu0 0.0
    %759 = vmatpush1.msra.mxu0 0.0
    %760 = vmatprep.subr.mxu0 0.0
    %761 = vmatpush1.msra.mxu0 0.0
    %762 = vmatprep.subr.mxu0 0.0
    %763 = vmatpush1.msra.mxu0 0.0
    %764 = vmatprep.subr.mxu0 0.0
    %765 = vmatpush1.msra.mxu0 0.0
    %766 = vmatprep.subr.mxu0 0.0
    %767 = vmatpush1.msra.mxu0 0.0
    %768 = vmatprep.subr.mxu0 0.0
    %769 = vmatpush1.msra.mxu0 0.0
    %770 = vmatprep.mubr.f32.mxu0 0.0
    %771 = vmatmul.mubr.f32.gmra.mrb[0].mxu0 %v701
    %v772 = vpop.f32.mrb[0].mxu0
    %v773 = vadd.f32 0.0, %v772
    %v774 = vpop.f32.mrb[0].mxu0
    %775 = vmatprep.mubr.f32.mxu0 0.0
    %776 = vmatmul.mubr.f32.gmra.mrb[0].mxu0 %v704
    %v777 = vpop.f32.mrb[0].mxu0
    %v778 = vadd.f32 0.0, %v777
    %v779 = vpop.f32.mrb[0].mxu0
    %780 = vdwg.mxu0
    %v782 = vsel %vm298, %v486, 0
    %v785 = vsel %vm298, %v491, 0
    %787 = vmatprep.subr.mxu0 0.0
    %788 = vmatpush1.msra.mxu0 %v294
    %789 = vmatprep.subr.mxu0 0.0
    %790 = vmatpush1.msra.mxu0 0.0
    %791 = vmatprep.subr.mxu0 0.0
    %792 = vmatpush1.msra.mxu0 0.0
    %793 = vmatprep.subr.mxu0 0.0
    %794 = vmatpush1.msra.mxu0 0.0
    %795 = vmatprep.subr.mxu0 0.0
    %796 = vmatpush1.msra.mxu0 0.0
    %797 = vmatprep.subr.mxu0 0.0
    %798 = vmatpush1.msra.mxu0 0.0
    %799 = vmatprep.subr.mxu0 0.0
    %800 = vmatpush1.msra.mxu0 0.0
    %801 = vmatprep.subr.mxu0 0.0
    %802 = vmatpush1.msra.mxu0 0.0
    %803 = vmatprep.subr.mxu0 0.0
    %804 = vmatpush1.msra.mxu0 0.0
    %805 = vmatprep.subr.mxu0 0.0
    %806 = vmatpush1.msra.mxu0 0.0
    %807 = vmatprep.subr.mxu0 0.0
    %808 = vmatpush1.msra.mxu0 0.0
    %809 = vmatprep.subr.mxu0 0.0
    %810 = vmatpush1.msra.mxu0 0.0
    %811 = vmatprep.subr.mxu0 0.0
    %812 = vmatpush1.msra.mxu0 0.0
    %813 = vmatprep.subr.mxu0 0.0
    %814 = vmatpush1.msra.mxu0 0.0
    %815 = vmatprep.subr.mxu0 0.0
    %816 = vmatpush1.msra.mxu0 0.0
    %817 = vmatprep.subr.mxu0 0.0
    %818 = vmatpush1.msra.mxu0 0.0
    %819 = vmatprep.subr.mxu0 0.0
    %820 = vmatpush1.msra.mxu0 0.0
    %821 = vmatprep.subr.mxu0 0.0
    %822 = vmatpush1.msra.mxu0 0.0
    %823 = vmatprep.subr.mxu0 0.0
    %824 = vmatpush1.msra.mxu0 0.0
    %825 = vmatprep.subr.mxu0 0.0
    %826 = vmatpush1.msra.mxu0 0.0
    %827 = vmatprep.subr.mxu0 0.0
    %828 = vmatpush1.msra.mxu0 0.0
    %829 = vmatprep.subr.mxu0 0.0
    %830 = vmatpush1.msra.mxu0 0.0
    %831 = vmatprep.subr.mxu0 0.0
    %832 = vmatpush1.msra.mxu0 0.0
    %833 = vmatprep.subr.mxu0 0.0
    %834 = vmatpush1.msra.mxu0 0.0
    %835 = vmatprep.subr.mxu0 0.0
    %836 = vmatpush1.msra.mxu0 0.0
    %837 = vmatprep.subr.mxu0 0.0
    %838 = vmatpush1.msra.mxu0 0.0
    %839 = vmatprep.subr.mxu0 0.0
    %840 = vmatpush1.msra.mxu0 0.0
    %841 = vmatprep.subr.mxu0 0.0
    %842 = vmatpush1.msra.mxu0 0.0
    %843 = vmatprep.subr.mxu0 0.0
    %844 = vmatpush1.msra.mxu0 0.0
    %845 = vmatprep.subr.mxu0 0.0
    %846 = vmatpush1.msra.mxu0 0.0
    %847 = vmatprep.subr.mxu0 0.0
    %848 = vmatpush1.msra.mxu0 0.0
    %849 = vmatprep.subr.mxu0 0.0
    %850 = vmatpush1.msra.mxu0 0.0
    %851 = vmatprep.mubr.f32.mxu0 0.0
    %852 = vmatmul.mubr.f32.gmra.mrb[0].mxu0 %v782
    %v853 = vpop.f32.mrb[0].mxu0
    %v854 = vadd.f32 %v773, %v853
    %v855 = vpop.f32.mrb[0].mxu0
    %856 = vmatprep.mubr.f32.mxu0 0.0
    %857 = vmatmul.mubr.f32.gmra.mrb[0].mxu0 %v785
    %v858 = vpop.f32.mrb[0].mxu0
    %v859 = vadd.f32 %v778, %v858
    %v860 = vpop.f32.mrb[0].mxu0
    %861 = vdwg.mxu0
    %862 = vrot.lane.b32.xlu0 %v128, 112
    %v863 = vpop.permute.xlu0 %862
    %864 = vrot.lane.b32.xlu0 %v133, 112
    %v865 = vpop.permute.xlu0 %864
    %866 = vrot.lane.b32.xlu0 %v207, 112
    %v867 = vpop.permute.xlu0 %866
    %868 = vrot.lane.b32.xlu0 %v212, 112
    %v869 = vpop.permute.xlu0 %868
    %v870 = vsel %vm298, %v863, 0
    %v872 = vsel %vm298, %v865, 0
    %v874 = vsel %vm298, %v867, 0
    %v876 = vsel %vm298, %v869, 0
    %878 = vmatprep.subr.mxu0 0.0
    %879 = vmatpush1.xpose.msra.mxu0 %v874
    %880 = vmatprep.subr.mxu0 0.0
    %881 = vmatpush1.xpose.msra.mxu0 %v876
    %882 = vmatprep.subr.mxu0 0.0
    %883 = vmatpush1.xpose.msra.mxu0 0.0
    %884 = vmatprep.subr.mxu0 0.0
    %885 = vmatpush1.xpose.msra.mxu0 0.0
    %886 = vmatprep.subr.mxu0 0.0
    %887 = vmatpush1.xpose.msra.mxu0 0.0
    %888 = vmatprep.subr.mxu0 0.0
    %889 = vmatpush1.xpose.msra.mxu0 0.0
    %890 = vmatprep.subr.mxu0 0.0
    %891 = vmatpush1.xpose.msra.mxu0 0.0
    %892 = vmatprep.subr.mxu0 0.0
    %893 = vmatpush1.xpose.msra.mxu0 0.0
    %894 = vmatprep.subr.mxu0 0.0
    %895 = vmatpush1.xpose.msra.mxu0 0.0
    %896 = vmatprep.subr.mxu0 0.0
    %897 = vmatpush1.xpose.msra.mxu0 0.0
    %898 = vmatprep.subr.mxu0 0.0
    %899 = vmatpush1.xpose.msra.mxu0 0.0
    %900 = vmatprep.subr.mxu0 0.0
    %901 = vmatpush1.xpose.msra.mxu0 0.0
    %902 = vmatprep.subr.mxu0 0.0
    %903 = vmatpush1.xpose.msra.mxu0 0.0
    %904 = vmatprep.subr.mxu0 0.0
    %905 = vmatpush1.xpose.msra.mxu0 0.0
    %906 = vmatprep.subr.mxu0 0.0
    %907 = vmatpush1.xpose.msra.mxu0 0.0
    %908 = vmatprep.subr.mxu0 0.0
    %909 = vmatpush1.xpose.msra.mxu0 0.0
    %910 = vmatprep.subr.mxu0 0.0
    %911 = vmatpush1.xpose.msra.mxu0 0.0
    %912 = vmatprep.subr.mxu0 0.0
    %913 = vmatpush1.xpose.msra.mxu0 0.0
    %914 = vmatprep.subr.mxu0 0.0
    %915 = vmatpush1.xpose.msra.mxu0 0.0
    %916 = vmatprep.subr.mxu0 0.0
    %917 = vmatpush1.xpose.msra.mxu0 0.0
    %918 = vmatprep.subr.mxu0 0.0
    %919 = vmatpush1.xpose.msra.mxu0 0.0
    %920 = vmatprep.subr.mxu0 0.0
    %921 = vmatpush1.xpose.msra.mxu0 0.0
    %922 = vmatprep.subr.mxu0 0.0
    %923 = vmatpush1.xpose.msra.mxu0 0.0
    %924 = vmatprep.subr.mxu0 0.0
    %925 = vmatpush1.xpose.msra.mxu0 0.0
    %926 = vmatprep.subr.mxu0 0.0
    %927 = vmatpush1.xpose.msra.mxu0 0.0
    %928 = vmatprep.subr.mxu0 0.0
    %929 = vmatpush1.xpose.msra.mxu0 0.0
    %930 = vmatprep.subr.mxu0 0.0
    %931 = vmatpush1.xpose.msra.mxu0 0.0
    %932 = vmatprep.subr.mxu0 0.0
    %933 = vmatpush1.xpose.msra.mxu0 0.0
    %934 = vmatprep.subr.mxu0 0.0
    %935 = vmatpush1.xpose.msra.mxu0 0.0
    %936 = vmatprep.subr.mxu0 0.0
    %937 = vmatpush1.xpose.msra.mxu0 0.0
    %938 = vmatprep.subr.mxu0 0.0
    %939 = vmatpush1.xpose.msra.mxu0 0.0
    %940 = vmatprep.subr.mxu0 0.0
    %941 = vmatpush1.xpose.msra.mxu0 0.0
    %942 = vmatprep.mubr.f32.mxu0 0.0
    %943 = vmatmul.mubr.f32.gmra.mrb[0].mxu0 %v870
    %v944 = vpop.f32.mrb[0].mxu0
    %v945 = vadd.f32 0.0, %v944
    %v946 = vpop.f32.mrb[0].mxu0
    %947 = vmatprep.mubr.f32.mxu0 0.0
    %948 = vmatmul.mubr.f32.gmra.mrb[0].mxu0 %v872
    %v949 = vpop.f32.mrb[0].mxu0
    %v950 = vadd.f32 0.0, %v949
    %v951 = vpop.f32.mrb[0].mxu0
    %952 = vdwg.mxu0
    %v953 = vmul.f32 %v945, 0.17677669
    %v954 = vmul.f32 %v950, 0.17677669
    %v955 = vadd.f32 %v953, %v48
    %v956 = vadd.f32 %v954, %v49
    %v957 = vsel %vm390, %v955, -inf
    %958 = vmax.xlane.f32.xlu0 %v957
    %v959 = vpop.xlane.xlu0 %958
    %v960 = vsel %vm390, %v956, -inf
    %961 = vmax.xlane.f32.xlu0 %v960
    %v962 = vpop.xlane.xlu0 %961
    %v963 = vsub.f32 %v955, %v959
    %v964 = vsub.f32 %v956, %v962
    %v965 = vmul.f32 %v963, 1.442695
    %v966 = vpow.pop %v965
    %v967 = vmul.f32 %v964, 1.442695
    %v968 = vpow.pop %v967
    %v969 = vsel %vm390, %v966, 0.0
    %970 = vadd.xlane.f32.xlu0 %v969
    %v971 = vpop.xlane.xlu0 %970
    %v972 = vsel %vm390, %v968, 0.0
    %973 = vadd.xlane.f32.xlu0 %v972
    %v974 = vpop.xlane.xlu0 %973
    %v975 = vrcp.pop %v971
    %v976 = vrcp.pop %v974
    %v977 = vmul.f32 %v966, %v975
    %v978 = vmul.f32 %v968, %v976
    %979 = vrot.lane.b32.xlu0 %v286, 112
    %v980 = vpop.permute.xlu0 %979
    %981 = vrot.lane.b32.xlu0 %v291, 112
    %v982 = vpop.permute.xlu0 %981
    %v986 = vsel %vm390, %v977, 0
    %v989 = vsel %vm390, %v978, 0
    %991 = vmatprep.subr.mxu0 0.0
    %992 = vmatpush1.msra.mxu0 %v980
    %993 = vmatprep.subr.mxu0 0.0
    %994 = vmatpush1.msra.mxu0 %v982
    %995 = vmatprep.subr.mxu0 0.0
    %996 = vmatpush1.msra.mxu0 0.0
    %997 = vmatprep.subr.mxu0 0.0
    %998 = vmatpush1.msra.mxu0 0.0
    %999 = vmatprep.subr.mxu0 0.0
    %1000 = vmatpush1.msra.mxu0 0.0
    %1001 = vmatprep.subr.mxu0 0.0
    %1002 = vmatpush1.msra.mxu0 0.0
    %1003 = vmatprep.subr.mxu0 0.0
    %1004 = vmatpush1.msra.mxu0 0.0
    %1005 = vmatprep.subr.mxu0 0.0
    %1006 = vmatpush1.msra.mxu0 0.0
    %1007 = vmatprep.subr.mxu0 0.0
    %1008 = vmatpush1.msra.mxu0 0.0
    %1009 = vmatprep.subr.mxu0 0.0
    %1010 = vmatpush1.msra.mxu0 0.0
    %1011 = vmatprep.subr.mxu0 0.0
    %1012 = vmatpush1.msra.mxu0 0.0
    %1013 = vmatprep.subr.mxu0 0.0
    %1014 = vmatpush1.msra.mxu0 0.0
    %1015 = vmatprep.subr.mxu0 0.0
    %1016 = vmatpush1.msra.mxu0 0.0
    %1017 = vmatprep.subr.mxu0 0.0
    %1018 = vmatpush1.msra.mxu0 0.0
    %1019 = vmatprep.subr.mxu0 0.0
    %1020 = vmatpush1.msra.mxu0 0.0
    %1021 = vmatprep.subr.mxu0 0.0
    %1022 = vmatpush1.msra.mxu0 0.0
    %1023 = vmatprep.subr.mxu0 0.0
    %1024 = vmatpush1.msra.mxu0 0.0
    %1025 = vmatprep.subr.mxu0 0.0
    %1026 = vmatpush1.msra.mxu0 0.0
    %1027 = vmatprep.subr.mxu0 0.0
    %1028 = vmatpush1.msra.mxu0 0.0
    %1029 = vmatprep.subr.mxu0 0.0
    %1030 = vmatpush1.msra.mxu0 0.0
    %1031 = vmatprep.subr.mxu0 0.0
    %1032 = vmatpush1.msra.mxu0 0.0
    %1033 = vmatprep.subr.mxu0 0.0
    %1034 = vmatpush1.msra.mxu0 0.0
    %1035 = vmatprep.subr.mxu0 0.0
    %1036 = vmatpush1.msra.mxu0 0.0
    %1037 = vmatprep.subr.mxu0 0.0
    %1038 = vmatpush1.msra.mxu0 0.0
    %1039 = vmatprep.subr.mxu0 0.0
    %1040 = vmatpush1.msra.mxu0 0.0
    %1041 = vmatprep.subr.mxu0 0.0
    %1042 = vmatpush1.msra.mxu0 0.0
    %1043 = vmatprep.subr.mxu0 0.0
    %1044 = vmatpush1.msra.mxu0 0.0
    %1045 = vmatprep.subr.mxu0 0.0
    %1046 = vmatpush1.msra.mxu0 0.0
    %1047 = vmatprep.subr.mxu0 0.0
    %1048 = vmatpush1.msra.mxu0 0.0
    %1049 = vmatprep.subr.mxu0 0.0
    %1050 = vmatpush1.msra.mxu0 0.0
    %1051 = vmatprep.subr.mxu0 0.0
    %1052 = vmatpush1.msra.mxu0 0.0
    %1053 = vmatprep.subr.mxu0 0.0
    %1054 = vmatpush1.msra.mxu0 0.0
    %1055 = vmatprep.mubr.f32.mxu0 0.0
    %1056 = vmatmul.mubr.f32.gmra.mrb[0].mxu0 %v986
    %v1057 = vpop.f32.mrb[0].mxu0
    %v1058 = vadd.f32 0.0, %v1057
    %v1059 = vpop.f32.mrb[0].mxu0
    %1060 = vmatprep.mubr.f32.mxu0 0.0
    %1061 = vmatmul.mubr.f32.gmra.mrb[0].mxu0 %v989
    %v1062 = vpop.f32.mrb[0].mxu0
    %v1063 = vadd.f32 0.0, %v1062
    %v1064 = vpop.f32.mrb[0].mxu0
    %1065 = vdwg.mxu0
    %v1067 = vsel %vm298, %v1058, 0
    %v1070 = vsel %vm298, %v1063, 0
    %1072 = vmatprep.subr.mxu0 0.0
    %1073 = vmatpush1.msra.mxu0 %v296
    %1074 = vmatprep.subr.mxu0 0.0
    %1075 = vmatpush1.msra.mxu0 0.0
    %1076 = vmatprep.subr.mxu0 0.0
    %1077 = vmatpush1.msra.mxu0 0.0
    %1078 = vmatprep.subr.mxu0 0.0
    %1079 = vmatpush1.msra.mxu0 0.0
    %1080 = vmatprep.subr.mxu0 0.0
    %1081 = vmatpush1.msra.mxu0 0.0
    %1082 = vmatprep.subr.mxu0 0.0
    %1083 = vmatpush1.msra.mxu0 0.0
    %1084 = vmatprep.subr.mxu0 0.0
    %1085 = vmatpush1.msra.mxu0 0.0
    %1086 = vmatprep.subr.mxu0 0.0
    %1087 = vmatpush1.msra.mxu0 0.0
    %1088 = vmatprep.subr.mxu0 0.0
    %1089 = vmatpush1.msra.mxu0 0.0
    %1090 = vmatprep.subr.mxu0 0.0
    %1091 = vmatpush1.msra.mxu0 0.0
    %1092 = vmatprep.subr.mxu0 0.0
    %1093 = vmatpush1.msra.mxu0 0.0
    %1094 = vmatprep.subr.mxu0 0.0
    %1095 = vmatpush1.msra.mxu0 0.0
    %1096 = vmatprep.subr.mxu0 0.0
    %1097 = vmatpush1.msra.mxu0 0.0
    %1098 = vmatprep.subr.mxu0 0.0
    %1099 = vmatpush1.msra.mxu0 0.0
    %1100 = vmatprep.subr.mxu0 0.0
    %1101 = vmatpush1.msra.mxu0 0.0
    %1102 = vmatprep.subr.mxu0 0.0
    %1103 = vmatpush1.msra.mxu0 0.0
    %1104 = vmatprep.subr.mxu0 0.0
    %1105 = vmatpush1.msra.mxu0 0.0
    %1106 = vmatprep.subr.mxu0 0.0
    %1107 = vmatpush1.msra.mxu0 0.0
    %1108 = vmatprep.subr.mxu0 0.0
    %1109 = vmatpush1.msra.mxu0 0.0
    %1110 = vmatprep.subr.mxu0 0.0
    %1111 = vmatpush1.msra.mxu0 0.0
    %1112 = vmatprep.subr.mxu0 0.0
    %1113 = vmatpush1.msra.mxu0 0.0
    %1114 = vmatprep.subr.mxu0 0.0
    %1115 = vmatpush1.msra.mxu0 0.0
    %1116 = vmatprep.subr.mxu0 0.0
    %1117 = vmatpush1.msra.mxu0 0.0
    %1118 = vmatprep.subr.mxu0 0.0
    %1119 = vmatpush1.msra.mxu0 0.0
    %1120 = vmatprep.subr.mxu0 0.0
    %1121 = vmatpush1.msra.mxu0 0.0
    %1122 = vmatprep.subr.mxu0 0.0
    %1123 = vmatpush1.msra.mxu0 0.0
    %1124 = vmatprep.subr.mxu0 0.0
    %1125 = vmatpush1.msra.mxu0 0.0
    %1126 = vmatprep.subr.mxu0 0.0
    %1127 = vmatpush1.msra.mxu0 0.0
    %1128 = vmatprep.subr.mxu0 0.0
    %1129 = vmatpush1.msra.mxu0 0.0
    %1130 = vmatprep.subr.mxu0 0.0
    %1131 = vmatpush1.msra.mxu0 0.0
    %1132 = vmatprep.subr.mxu0 0.0
    %1133 = vmatpush1.msra.mxu0 0.0
    %1134 = vmatprep.subr.mxu0 0.0
    %1135 = vmatpush1.msra.mxu0 0.0
    %1136 = vmatprep.mubr.f32.mxu0 0.0
    %1137 = vmatmul.mubr.f32.gmra.mrb[0].mxu0 %v1067
    %v1138 = vpop.f32.mrb[0].mxu0
    %v1139 = vadd.f32 0.0, %v1138
    %v1140 = vpop.f32.mrb[0].mxu0
    %1141 = vmatprep.mubr.f32.mxu0 0.0
    %1142 = vmatmul.mubr.f32.gmra.mrb[0].mxu0 %v1070
    %v1143 = vpop.f32.mrb[0].mxu0
    %v1144 = vadd.f32 0.0, %v1143
    %v1145 = vpop.f32.mrb[0].mxu0
    %1146 = vdwg.mxu0
    %v1147 = vadd.f32 %v854, %v1139
    %v1148 = vadd.f32 %v859, %v1144
    %1149 = vrot.lane.b32.xlu0 %v128, 104
    %v1150 = vpop.permute.xlu0 %1149
    %1151 = vrot.lane.b32.xlu0 %v133, 104
    %v1152 = vpop.permute.xlu0 %1151
    %1153 = vrot.lane.b32.xlu0 %v207, 104
    %v1154 = vpop.permute.xlu0 %1153
    %1155 = vrot.lane.b32.xlu0 %v212, 104
    %v1156 = vpop.permute.xlu0 %1155
    %v1157 = vsel %vm298, %v1150, 0
    %v1159 = vsel %vm298, %v1152, 0
    %v1161 = vsel %vm298, %v1154, 0
    %v1163 = vsel %vm298, %v1156, 0
    %1165 = vmatprep.subr.mxu0 0.0
    %1166 = vmatpush1.xpose.msra.mxu0 %v1161
    %1167 = vmatprep.subr.mxu0 0.0
    %1168 = vmatpush1.xpose.msra.mxu0 %v1163
    %1169 = vmatprep.subr.mxu0 0.0
    %1170 = vmatpush1.xpose.msra.mxu0 0.0
    %1171 = vmatprep.subr.mxu0 0.0
    %1172 = vmatpush1.xpose.msra.mxu0 0.0
    %1173 = vmatprep.subr.mxu0 0.0
    %1174 = vmatpush1.xpose.msra.mxu0 0.0
    %1175 = vmatprep.subr.mxu0 0.0
    %1176 = vmatpush1.xpose.msra.mxu0 0.0
    %1177 = vmatprep.subr.mxu0 0.0
    %1178 = vmatpush1.xpose.msra.mxu0 0.0
    %1179 = vmatprep.subr.mxu0 0.0
    %1180 = vmatpush1.xpose.msra.mxu0 0.0
    %1181 = vmatprep.subr.mxu0 0.0
    %1182 = vmatpush1.xpose.msra.mxu0 0.0
    %1183 = vmatprep.subr.mxu0 0.0
    %1184 = vmatpush1.xpose.msra.mxu0 0.0
    %1185 = vmatprep.subr.mxu0 0.0
    %1186 = vmatpush1.xpose.msra.mxu0 0.0
    %1187 = vmatprep.subr.mxu0 0.0
    %1188 = vmatpush1.xpose.msra.mxu0 0.0
    %1189 = vmatprep.subr.mxu0 0.0
    %1190 = vmatpush1.xpose.msra.mxu0 0.0
    %1191 = vmatprep.subr.mxu0 0.0
    %1192 = vmatpush1.xpose.msra.mxu0 0.0
    %1193 = vmatprep.subr.mxu0 0.0
    %1194 = vmatpush1.xpose.msra.mxu0 0.0
    %1195 = vmatprep.subr.mxu0 0.0
    %1196 = vmatpush1.xpose.msra.mxu0 0.0
    %1197 = vmatprep.subr.mxu0 0.0
    %1198 = vmatpush1.xpose.msra.mxu0 0.0
    %1199 = vmatprep.subr.mxu0 0.0
    %1200 = vmatpush1.xpose.msra.mxu0 0.0
    %1201 = vmatprep.subr.mxu0 0.0
    %1202 = vmatpush1.xpose.msra.mxu0 0.0
    %1203 = vmatprep.subr.mxu0 0.0
    %1204 = vmatpush1.xpose.msra.mxu0 0.0
    %1205 = vmatprep.subr.mxu0 0.0
    %1206 = vmatpush1.xpose.msra.mxu0 0.0
    %1207 = vmatprep.subr.mxu0 0.0
    %1208 = vmatpush1.xpose.msra.mxu0 0.0
    %1209 = vmatprep.subr.mxu0 0.0
    %1210 = vmatpush1.xpose.msra.mxu0 0.0
    %1211 = vmatprep.subr.mxu0 0.0
    %1212 = vmatpush1.xpose.msra.mxu0 0.0
    %1213 = vmatprep.subr.mxu0 0.0
    %1214 = vmatpush1.xpose.msra.mxu0 0.0
    %1215 = vmatprep.subr.mxu0 0.0
    %1216 = vmatpush1.xpose.msra.mxu0 0.0
    %1217 = vmatprep.subr.mxu0 0.0
    %1218 = vmatpush1.xpose.msra.mxu0 0.0
    %1219 = vmatprep.subr.mxu0 0.0
    %1220 = vmatpush1.xpose.msra.mxu0 0.0
    %1221 = vmatprep.subr.mxu0 0.0
    %1222 = vmatpush1.xpose.msra.mxu0 0.0
    %1223 = vmatprep.subr.mxu0 0.0
    %1224 = vmatpush1.xpose.msra.mxu0 0.0
    %1225 = vmatprep.subr.mxu0 0.0
    %1226 = vmatpush1.xpose.msra.mxu0 0.0
    %1227 = vmatprep.subr.mxu0 0.0
    %1228 = vmatpush1.xpose.msra.mxu0 0.0
    %1229 = vmatprep.mubr.f32.mxu0 0.0
    %1230 = vmatmul.mubr.f32.gmra.mrb[0].mxu0 %v1157
    %v1231 = vpop.f32.mrb[0].mxu0
    %v1232 = vadd.f32 0.0, %v1231
    %v1233 = vpop.f32.mrb[0].mxu0
    %1234 = vmatprep.mubr.f32.mxu0 0.0
    %1235 = vmatmul.mubr.f32.gmra.mrb[0].mxu0 %v1159
    %v1236 = vpop.f32.mrb[0].mxu0
    %v1237 = vadd.f32 0.0, %v1236
    %v1238 = vpop.f32.mrb[0].mxu0
    %1239 = vdwg.mxu0
    %v1240 = vmul.f32 %v1232, 0.17677669
    %v1241 = vmul.f32 %v1237, 0.17677669
    %v1242 = vadd.f32 %v1240, %v48
    %v1243 = vadd.f32 %v1241, %v49
    %v1244 = vsel %vm390, %v1242, -inf
    %1245 = vmax.xlane.f32.xlu0 %v1244
    %v1246 = vpop.xlane.xlu0 %1245
    %v1247 = vsel %vm390, %v1243, -inf
    %1248 = vmax.xlane.f32.xlu0 %v1247
    %v1249 = vpop.xlane.xlu0 %1248
    %v1250 = vsub.f32 %v1242, %v1246
    %v1251 = vsub.f32 %v1243, %v1249
    %v1252 = vmul.f32 %v1250, 1.442695
    %v1253 = vpow.pop %v1252
    %v1254 = vmul.f32 %v1251, 1.442695
    %v1255 = vpow.pop %v1254
    %v1256 = vsel %vm390, %v1253, 0.0
    %1257 = vadd.xlane.f32.xlu0 %v1256
    %v1258 = vpop.xlane.xlu0 %1257
    %v1259 = vsel %vm390, %v1255, 0.0
    %1260 = vadd.xlane.f32.xlu0 %v1259
    %v1261 = vpop.xlane.xlu0 %1260
    %v1262 = vrcp.pop %v1258
    %v1263 = vrcp.pop %v1261
    %v1264 = vmul.f32 %v1253, %v1262
    %v1265 = vmul.f32 %v1255, %v1263
    %1266 = vrot.lane.b32.xlu0 %v286, 104
    %v1267 = vpop.permute.xlu0 %1266
    %1268 = vrot.lane.b32.xlu0 %v291, 104
    %v1269 = vpop.permute.xlu0 %1268
    %v1273 = vsel %vm390, %v1264, 0
    %v1276 = vsel %vm390, %v1265, 0
    %1278 = vmatprep.subr.mxu0 0.0
    %1279 = vmatpush1.msra.mxu0 %v1267
    %1280 = vmatprep.subr.mxu0 0.0
    %1281 = vmatpush1.msra.mxu0 %v1269
    %1282 = vmatprep.subr.mxu0 0.0
    %1283 = vmatpush1.msra.mxu0 0.0
    %1284 = vmatprep.subr.mxu0 0.0
    %1285 = vmatpush1.msra.mxu0 0.0
    %1286 = vmatprep.subr.mxu0 0.0
    %1287 = vmatpush1.msra.mxu0 0.0
    %1288 = vmatprep.subr.mxu0 0.0
    %1289 = vmatpush1.msra.mxu0 0.0
    %1290 = vmatprep.subr.mxu0 0.0
    %1291 = vmatpush1.msra.mxu0 0.0
    %1292 = vmatprep.subr.mxu0 0.0
    %1293 = vmatpush1.msra.mxu0 0.0
    %1294 = vmatprep.subr.mxu0 0.0
    %1295 = vmatpush1.msra.mxu0 0.0
    %1296 = vmatprep.subr.mxu0 0.0
    %1297 = vmatpush1.msra.mxu0 0.0
    %1298 = vmatprep.subr.mxu0 0.0
    %1299 = vmatpush1.msra.mxu0 0.0
    %1300 = vmatprep.subr.mxu0 0.0
    %1301 = vmatpush1.msra.mxu0 0.0
    %1302 = vmatprep.subr.mxu0 0.0
    %1303 = vmatpush1.msra.mxu0 0.0
    %1304 = vmatprep.subr.mxu0 0.0
    %1305 = vmatpush1.msra.mxu0 0.0
    %1306 = vmatprep.subr.mxu0 0.0
    %1307 = vmatpush1.msra.mxu0 0.0
    %1308 = vmatprep.subr.mxu0 0.0
    %1309 = vmatpush1.msra.mxu0 0.0
    %1310 = vmatprep.subr.mxu0 0.0
    %1311 = vmatpush1.msra.mxu0 0.0
    %1312 = vmatprep.subr.mxu0 0.0
    %1313 = vmatpush1.msra.mxu0 0.0
    %1314 = vmatprep.subr.mxu0 0.0
    %1315 = vmatpush1.msra.mxu0 0.0
    %1316 = vmatprep.subr.mxu0 0.0
    %1317 = vmatpush1.msra.mxu0 0.0
    %1318 = vmatprep.subr.mxu0 0.0
    %1319 = vmatpush1.msra.mxu0 0.0
    %1320 = vmatprep.subr.mxu0 0.0
    %1321 = vmatpush1.msra.mxu0 0.0
    %1322 = vmatprep.subr.mxu0 0.0
    %1323 = vmatpush1.msra.mxu0 0.0
    %1324 = vmatprep.subr.mxu0 0.0
    %1325 = vmatpush1.msra.mxu0 0.0
    %1326 = vmatprep.subr.mxu0 0.0
    %1327 = vmatpush1.msra.mxu0 0.0
    %1328 = vmatprep.subr.mxu0 0.0
    %1329 = vmatpush1.msra.mxu0 0.0
    %1330 = vmatprep.subr.mxu0 0.0
    %1331 = vmatpush1.msra.mxu0 0.0
    %1332 = vmatprep.subr.mxu0 0.0
    %1333 = vmatpush1.msra.mxu0 0.0
    %1334 = vmatprep.subr.mxu0 0.0
    %1335 = vmatpush1.msra.mxu0 0.0
    %1336 = vmatprep.subr.mxu0 0.0
    %1337 = vmatpush1.msra.mxu0 0.0
    %1338 = vmatprep.subr.mxu0 0.0
    %1339 = vmatpush1.msra.mxu0 0.0
    %1340 = vmatprep.subr.mxu0 0.0
    %1341 = vmatpush1.msra.mxu0 0.0
    %1342 = vmatprep.mubr.f32.mxu0 0.0
    %1343 = vmatmul.mubr.f32.gmra.mrb[0].mxu0 %v1273
    %v1344 = vpop.f32.mrb[0].mxu0
    %v1345 = vadd.f32 0.0, %v1344
    %v1346 = vpop.f32.mrb[0].mxu0
    %1347 = vmatprep.mubr.f32.mxu0 0.0
    %1348 = vmatmul.mubr.f32.gmra.mrb[0].mxu0 %v1276
    %v1349 = vpop.f32.mrb[0].mxu0
    %v1350 = vadd.f32 0.0, %v1349
    %v1351 = vpop.f32.mrb[0].mxu0
    %1352 = vdwg.mxu0
    %v1354 = vsel %vm298, %v1345, 0
    %v1357 = vsel %vm298, %v1350, 0
    %1359 = vmatprep.subr.mxu0 0.0
    %1360 = vmatpush1.msra.mxu0 %v297
    %1361 = vmatprep.subr.mxu0 0.0
    %1362 = vmatpush1.msra.mxu0 0.0
    %1363 = vmatprep.subr.mxu0 0.0
    %1364 = vmatpush1.msra.mxu0 0.0
    %1365 = vmatprep.subr.mxu0 0.0
    %1366 = vmatpush1.msra.mxu0 0.0
    %1367 = vmatprep.subr.mxu0 0.0
    %1368 = vmatpush1.msra.mxu0 0.0
    %1369 = vmatprep.subr.mxu0 0.0
    %1370 = vmatpush1.msra.mxu0 0.0
    %1371 = vmatprep.subr.mxu0 0.0
    %1372 = vmatpush1.msra.mxu0 0.0
    %1373 = vmatprep.subr.mxu0 0.0
    %1374 = vmatpush1.msra.mxu0 0.0
    %1375 = vmatprep.subr.mxu0 0.0
    %1376 = vmatpush1.msra.mxu0 0.0
    %1377 = vmatprep.subr.mxu0 0.0
    %1378 = vmatpush1.msra.mxu0 0.0
    %1379 = vmatprep.subr.mxu0 0.0
    %1380 = vmatpush1.msra.mxu0 0.0
    %1381 = vmatprep.subr.mxu0 0.0
    %1382 = vmatpush1.msra.mxu0 0.0
    %1383 = vmatprep.subr.mxu0 0.0
    %1384 = vmatpush1.msra.mxu0 0.0
    %1385 = vmatprep.subr.mxu0 0.0
    %1386 = vmatpush1.msra.mxu0 0.0
    %1387 = vmatprep.subr.mxu0 0.0
    %1388 = vmatpush1.msra.mxu0 0.0
    %1389 = vmatprep.subr.mxu0 0.0
    %1390 = vmatpush1.msra.mxu0 0.0
    %1391 = vmatprep.subr.mxu0 0.0
    %1392 = vmatpush1.msra.mxu0 0.0
    %1393 = vmatprep.subr.mxu0 0.0
    %1394 = vmatpush1.msra.mxu0 0.0
    %1395 = vmatprep.subr.mxu0 0.0
    %1396 = vmatpush1.msra.mxu0 0.0
    %1397 = vmatprep.subr.mxu0 0.0
    %1398 = vmatpush1.msra.mxu0 0.0
    %1399 = vmatprep.subr.mxu0 0.0
    %1400 = vmatpush1.msra.mxu0 0.0
    %1401 = vmatprep.subr.mxu0 0.0
    %1402 = vmatpush1.msra.mxu0 0.0
    %1403 = vmatprep.subr.mxu0 0.0
    %1404 = vmatpush1.msra.mxu0 0.0
    %1405 = vmatprep.subr.mxu0 0.0
    %1406 = vmatpush1.msra.mxu0 0.0
    %1407 = vmatprep.subr.mxu0 0.0
    %1408 = vmatpush1.msra.mxu0 0.0
    %1409 = vmatprep.subr.mxu0 0.0
    %1410 = vmatpush1.msra.mxu0 0.0
    %1411 = vmatprep.subr.mxu0 0.0
    %1412 = vmatpush1.msra.mxu0 0.0
    %1413 = vmatprep.subr.mxu0 0.0
    %1414 = vmatpush1.msra.mxu0 0.0
    %1415 = vmatprep.subr.mxu0 0.0
    %1416 = vmatpush1.msra.mxu0 0.0
    %1417 = vmatprep.subr.mxu0 0.0
    %1418 = vmatpush1.msra.mxu0 0.0
    %1419 = vmatprep.subr.mxu0 0.0
    %1420 = vmatpush1.msra.mxu0 0.0
    %1421 = vmatprep.subr.mxu0 0.0
    %1422 = vmatpush1.msra.mxu0 0.0
    %1423 = vmatprep.mubr.f32.mxu0 0.0
    %1424 = vmatmul.mubr.f32.gmra.mrb[0].mxu0 %v1354
    %v1425 = vpop.f32.mrb[0].mxu0
    %v1426 = vadd.f32 0.0, %v1425
    %v1427 = vpop.f32.mrb[0].mxu0
    %1428 = vmatprep.mubr.f32.mxu0 0.0
    %1429 = vmatmul.mubr.f32.gmra.mrb[0].mxu0 %v1357
    %v1430 = vpop.f32.mrb[0].mxu0
    %v1431 = vadd.f32 0.0, %v1430
    %v1432 = vpop.f32.mrb[0].mxu0
    %1433 = vdwg.mxu0
    %v1434 = vadd.f32 %v1147, %v1426
    %v1435 = vadd.f32 %v1148, %v1431
    %v1436 = vld [vmem:[%s8] sm:$0x1]
    %v1438 = vlaneseq
    %v1439 = vshrl.u32 %v1438, 7
    %v1440 = vsub.s32 0, %v1439
    %v1441 = vrot.slane %v1436, %v1440
    %v1443 = vadd.f32 %v1434, %v1441
    %v1444 = vadd.f32 %v1435, %v1441
    %v1445 = vld [vmem:[%s1] sm:$0x3]
    %v1446 = vld [vmem:[%s10] sm:$0xff]
    %v1447 = vld [vmem:[%s10 + $0x8] sm:$0xff]
    %v1448 = vld [vmem:[%s10 + $0x10] sm:$0xff]
    %v1449 = vld [vmem:[%s10 + $0x18] sm:$0xff]
    %v1450 = vld [vmem:[%s11] sm:$0x1]
    %v1452 = vlaneseq
    %v1453 = vshrl.u32 %v1452, 7
    %v1454 = vsub.s32 0, %v1453
    %v1455 = vrot.slane %v1450, %v1454
    %v1458 = vsel %vm54, %v1445, 0
    %1460 = vmatprep.subr.mxu0 0.0
    %1461 = vmatpush1.msra.mxu0 %v1446
    %1462 = vmatprep.subr.mxu0 0.0
    %1463 = vmatpush1.msra.mxu0 %v1447
    %1464 = vmatprep.subr.mxu0 0.0
    %1465 = vmatpush1.msra.mxu0 %v1448
    %1466 = vmatprep.subr.mxu0 0.0
    %1467 = vmatpush1.msra.mxu0 %v1449
    %1468 = vmatprep.subr.mxu0 0.0
    %1469 = vmatpush1.msra.mxu0 0.0
    %1470 = vmatprep.subr.mxu0 0.0
    %1471 = vmatpush1.msra.mxu0 0.0
    %1472 = vmatprep.subr.mxu0 0.0
    %1473 = vmatpush1.msra.mxu0 0.0
    %1474 = vmatprep.subr.mxu0 0.0
    %1475 = vmatpush1.msra.mxu0 0.0
    %1476 = vmatprep.subr.mxu0 0.0
    %1477 = vmatpush1.msra.mxu0 0.0
    %1478 = vmatprep.subr.mxu0 0.0
    %1479 = vmatpush1.msra.mxu0 0.0
    %1480 = vmatprep.subr.mxu0 0.0
    %1481 = vmatpush1.msra.mxu0 0.0
    %1482 = vmatprep.subr.mxu0 0.0
    %1483 = vmatpush1.msra.mxu0 0.0
    %1484 = vmatprep.subr.mxu0 0.0
    %1485 = vmatpush1.msra.mxu0 0.0
    %1486 = vmatprep.subr.mxu0 0.0
    %1487 = vmatpush1.msra.mxu0 0.0
    %1488 = vmatprep.subr.mxu0 0.0
    %1489 = vmatpush1.msra.mxu0 0.0
    %1490 = vmatprep.subr.mxu0 0.0
    %1491 = vmatpush1.msra.mxu0 0.0
    %1492 = vmatprep.subr.mxu0 0.0
    %1493 = vmatpush1.msra.mxu0 0.0
    %1494 = vmatprep.subr.mxu0 0.0
    %1495 = vmatpush1.msra.mxu0 0.0
    %1496 = vmatprep.subr.mxu0 0.0
    %1497 = vmatpush1.msra.mxu0 0.0
    %1498 = vmatprep.subr.mxu0 0.0
    %1499 = vmatpush1.msra.mxu0 0.0
    %1500 = vmatprep.subr.mxu0 0.0
    %1501 = vmatpush1.msra.mxu0 0.0
    %1502 = vmatprep.subr.mxu0 0.0
    %1503 = vmatpush1.msra.mxu0 0.0
    %1504 = vmatprep.subr.mxu0 0.0
    %1505 = vmatpush1.msra.mxu0 0.0
    %1506 = vmatprep.subr.mxu0 0.0
    %1507 = vmatpush1.msra.mxu0 0.0
    %1508 = vmatprep.subr.mxu0 0.0
    %1509 = vmatpush1.msra.mxu0 0.0
    %1510 = vmatprep.subr.mxu0 0.0
    %1511 = vmatpush1.msra.mxu0 0.0
    %1512 = vmatprep.subr.mxu0 0.0
    %1513 = vmatpush1.msra.mxu0 0.0
    %1514 = vmatprep.subr.mxu0 0.0
    %1515 = vmatpush1.msra.mxu0 0.0
    %1516 = vmatprep.subr.mxu0 0.0
    %1517 = vmatpush1.msra.mxu0 0.0
    %1518 = vmatprep.subr.mxu0 0.0
    %1519 = vmatpush1.msra.mxu0 0.0
    %1520 = vmatprep.subr.mxu0 0.0
    %1521 = vmatpush1.msra.mxu0 0.0
    %1522 = vmatprep.subr.mxu0 0.0
    %1523 = vmatpush1.msra.mxu0 0.0
    %1524 = vmatprep.mubr.f32.mxu0 0.0
    %1525 = vmatmul.mubr.f32.gmra.mrb[0].mxu0 %v1458
    %v1526 = vpop.f32.mrb[0].mxu0
    %v1527 = vadd.f32 %v1455, %v1526
    %v1528 = vpop.f32.mrb[0].mxu0
    %1529 = vdwg.mxu0
    %v1530 = vlaneseq
    %v1531 = vshrl.u32 %v1530, 7
    %v1532 = vlaneseq
    %v1533 = vand.u32 %v1532, 127
    %v1534 = vmul.u32 %v1531, 8
    %vm1535 = vcmp.eq.s32.totalorder %v1533, %v1534
    %v1536 = vsel %vm1535, 1, 0
    %v1537 = vcvt.s32.f32 %v1536
    %v1539 = vsel %vm390, %v1537, 0
    %1541 = vmatprep.subr.mxu0 0.0
    %1542 = vmatpush1.msra.mxu0 %v1443
    %1543 = vmatprep.subr.mxu0 0.0
    %1544 = vmatpush1.msra.mxu0 %v1444
    %1545 = vmatprep.subr.mxu0 0.0
    %1546 = vmatpush1.msra.mxu0 0.0
    %1547 = vmatprep.subr.mxu0 0.0
    %1548 = vmatpush1.msra.mxu0 0.0
    %1549 = vmatprep.subr.mxu0 0.0
    %1550 = vmatpush1.msra.mxu0 0.0
    %1551 = vmatprep.subr.mxu0 0.0
    %1552 = vmatpush1.msra.mxu0 0.0
    %1553 = vmatprep.subr.mxu0 0.0
    %1554 = vmatpush1.msra.mxu0 0.0
    %1555 = vmatprep.subr.mxu0 0.0
    %1556 = vmatpush1.msra.mxu0 0.0
    %1557 = vmatprep.subr.mxu0 0.0
    %1558 = vmatpush1.msra.mxu0 0.0
    %1559 = vmatprep.subr.mxu0 0.0
    %1560 = vmatpush1.msra.mxu0 0.0
    %1561 = vmatprep.subr.mxu0 0.0
    %1562 = vmatpush1.msra.mxu0 0.0
    %1563 = vmatprep.subr.mxu0 0.0
    %1564 = vmatpush1.msra.mxu0 0.0
    %1565 = vmatprep.subr.mxu0 0.0
    %1566 = vmatpush1.msra.mxu0 0.0
    %1567 = vmatprep.subr.mxu0 0.0
    %1568 = vmatpush1.msra.mxu0 0.0
    %1569 = vmatprep.subr.mxu0 0.0
    %1570 = vmatpush1.msra.mxu0 0.0
    %1571 = vmatprep.subr.mxu0 0.0
    %1572 = vmatpush1.msra.mxu0 0.0
    %1573 = vmatprep.subr.mxu0 0.0
    %1574 = vmatpush1.msra.mxu0 0.0
    %1575 = vmatprep.subr.mxu0 0.0
    %1576 = vmatpush1.msra.mxu0 0.0
    %1577 = vmatprep.subr.mxu0 0.0
    %1578 = vmatpush1.msra.mxu0 0.0
    %1579 = vmatprep.subr.mxu0 0.0
    %1580 = vmatpush1.msra.mxu0 0.0
    %1581 = vmatprep.subr.mxu0 0.0
    %1582 = vmatpush1.msra.mxu0 0.0
    %1583 = vmatprep.subr.mxu0 0.0
    %1584 = vmatpush1.msra.mxu0 0.0
    %1585 = vmatprep.subr.mxu0 0.0
    %1586 = vmatpush1.msra.mxu0 0.0
    %1587 = vmatprep.subr.mxu0 0.0
    %1588 = vmatpush1.msra.mxu0 0.0
    %1589 = vmatprep.subr.mxu0 0.0
    %1590 = vmatpush1.msra.mxu0 0.0
    %1591 = vmatprep.subr.mxu0 0.0
    %1592 = vmatpush1.msra.mxu0 0.0
    %1593 = vmatprep.subr.mxu0 0.0
    %1594 = vmatpush1.msra.mxu0 0.0
    %1595 = vmatprep.subr.mxu0 0.0
    %1596 = vmatpush1.msra.mxu0 0.0
    %1597 = vmatprep.subr.mxu0 0.0
    %1598 = vmatpush1.msra.mxu0 0.0
    %1599 = vmatprep.subr.mxu0 0.0
    %1600 = vmatpush1.msra.mxu0 0.0
    %1601 = vmatprep.subr.mxu0 0.0
    %1602 = vmatpush1.msra.mxu0 0.0
    %1603 = vmatprep.subr.mxu0 0.0
    %1604 = vmatpush1.msra.mxu0 0.0
    %1605 = vmatprep.mubr.f32.mxu0 0.0
    %1606 = vmatmul.mubr.f32.gmra.mrb[0].mxu0 %v1539
    %v1607 = vpop.f32.mrb[0].mxu0
    %v1608 = vadd.f32 0.0, %v1607
    %v1609 = vpop.f32.mrb[0].mxu0
    %1610 = vdwg.mxu0
    %v1611 = vld [vmem:[%s9] sm:$0xff]
    %v1612 = vld [vmem:[%s9 + $0x8] sm:$0xff]
    %v1613 = vld [vmem:[%s9 + $0x10] sm:$0xff]
    %v1614 = vld [vmem:[%s9 + $0x18] sm:$0xff]
    %v1616 = vsel %vm54, %v1608, 0
    %1618 = vmatprep.subr.mxu0 0.0
    %1619 = vmatpush1.msra.mxu0 %v1611
    %1620 = vmatprep.subr.mxu0 0.0
    %1621 = vmatpush1.msra.mxu0 %v1612
    %1622 = vmatprep.subr.mxu0 0.0
    %1623 = vmatpush1.msra.mxu0 %v1613
    %1624 = vmatprep.subr.mxu0 0.0
    %1625 = vmatpush1.msra.mxu0 %v1614
    %1626 = vmatprep.subr.mxu0 0.0
    %1627 = vmatpush1.msra.mxu0 0.0
    %1628 = vmatprep.subr.mxu0 0.0
    %1629 = vmatpush1.msra.mxu0 0.0
    %1630 = vmatprep.subr.mxu0 0.0
    %1631 = vmatpush1.msra.mxu0 0.0
    %1632 = vmatprep.subr.mxu0 0.0
    %1633 = vmatpush1.msra.mxu0 0.0
    %1634 = vmatprep.subr.mxu0 0.0
    %1635 = vmatpush1.msra.mxu0 0.0
    %1636 = vmatprep.subr.mxu0 0.0
    %1637 = vmatpush1.msra.mxu0 0.0
    %1638 = vmatprep.subr.mxu0 0.0
    %1639 = vmatpush1.msra.mxu0 0.0
    %1640 = vmatprep.subr.mxu0 0.0
    %1641 = vmatpush1.msra.mxu0 0.0
    %1642 = vmatprep.subr.mxu0 0.0
    %1643 = vmatpush1.msra.mxu0 0.0
    %1644 = vmatprep.subr.mxu0 0.0
    %1645 = vmatpush1.msra.mxu0 0.0
    %1646 = vmatprep.subr.mxu0 0.0
    %1647 = vmatpush1.msra.mxu0 0.0
    %1648 = vmatprep.subr.mxu0 0.0
    %1649 = vmatpush1.msra.mxu0 0.0
    %1650 = vmatprep.subr.mxu0 0.0
    %1651 = vmatpush1.msra.mxu0 0.0
    %1652 = vmatprep.subr.mxu0 0.0
    %1653 = vmatpush1.msra.mxu0 0.0
    %1654 = vmatprep.subr.mxu0 0.0
    %1655 = vmatpush1.msra.mxu0 0.0
    %1656 = vmatprep.subr.mxu0 0.0
    %1657 = vmatpush1.msra.mxu0 0.0
    %1658 = vmatprep.subr.mxu0 0.0
    %1659 = vmatpush1.msra.mxu0 0.0
    %1660 = vmatprep.subr.mxu0 0.0
    %1661 = vmatpush1.msra.mxu0 0.0
    %1662 = vmatprep.subr.mxu0 0.0
    %1663 = vmatpush1.msra.mxu0 0.0
    %1664 = vmatprep.subr.mxu0 0.0
    %1665 = vmatpush1.msra.mxu0 0.0
    %1666 = vmatprep.subr.mxu0 0.0
    %1667 = vmatpush1.msra.mxu0 0.0
    %1668 = vmatprep.subr.mxu0 0.0
    %1669 = vmatpush1.msra.mxu0 0.0
    %1670 = vmatprep.subr.mxu0 0.0
    %1671 = vmatpush1.msra.mxu0 0.0
    %1672 = vmatprep.subr.mxu0 0.0
    %1673 = vmatpush1.msra.mxu0 0.0
    %1674 = vmatprep.subr.mxu0 0.0
    %1675 = vmatpush1.msra.mxu0 0.0
    %1676 = vmatprep.subr.mxu0 0.0
    %1677 = vmatpush1.msra.mxu0 0.0
    %1678 = vmatprep.subr.mxu0 0.0
    %1679 = vmatpush1.msra.mxu0 0.0
    %1680 = vmatprep.subr.mxu0 0.0
    %1681 = vmatpush1.msra.mxu0 0.0
    %1682 = vmatprep.mubr.f32.mxu0 0.0
    %1683 = vmatmul.mubr.f32.gmra.mrb[0].mxu0 %v1616
    %v1684 = vpop.f32.mrb[0].mxu0
    %v1685 = vadd.f32 0.0, %v1684
    %v1686 = vpop.f32.mrb[0].mxu0
    %1687 = vdwg.mxu0
    %v1688 = vadd.f32 %v1527, %v1685
    %v1689 = vadd.s32 %v1534, 1
    %vm1690 = vcmp.eq.s32.totalorder %v1533, %v1689
    %v1691 = vsel %vm1690, 1, 0
    %v1692 = vcvt.s32.f32 %v1691
    %v1694 = vsel %vm390, %v1692, 0
    %1696 = vmatprep.subr.mxu0 0.0
    %1697 = vmatpush1.msra.mxu0 %v1443
    %1698 = vmatprep.subr.mxu0 0.0
    %1699 = vmatpush1.msra.mxu0 %v1444
    %1700 = vmatprep.subr.mxu0 0.0
    %1701 = vmatpush1.msra.mxu0 0.0
    %1702 = vmatprep.subr.mxu0 0.0
    %1703 = vmatpush1.msra.mxu0 0.0
    %1704 = vmatprep.subr.mxu0 0.0
    %1705 = vmatpush1.msra.mxu0 0.0
    %1706 = vmatprep.subr.mxu0 0.0
    %1707 = vmatpush1.msra.mxu0 0.0
    %1708 = vmatprep.subr.mxu0 0.0
    %1709 = vmatpush1.msra.mxu0 0.0
    %1710 = vmatprep.subr.mxu0 0.0
    %1711 = vmatpush1.msra.mxu0 0.0
    %1712 = vmatprep.subr.mxu0 0.0
    %1713 = vmatpush1.msra.mxu0 0.0
    %1714 = vmatprep.subr.mxu0 0.0
    %1715 = vmatpush1.msra.mxu0 0.0
    %1716 = vmatprep.subr.mxu0 0.0
    %1717 = vmatpush1.msra.mxu0 0.0
    %1718 = vmatprep.subr.mxu0 0.0
    %1719 = vmatpush1.msra.mxu0 0.0
    %1720 = vmatprep.subr.mxu0 0.0
    %1721 = vmatpush1.msra.mxu0 0.0
    %1722 = vmatprep.subr.mxu0 0.0
    %1723 = vmatpush1.msra.mxu0 0.0
    %1724 = vmatprep.subr.mxu0 0.0
    %1725 = vmatpush1.msra.mxu0 0.0
    %1726 = vmatprep.subr.mxu0 0.0
    %1727 = vmatpush1.msra.mxu0 0.0
    %1728 = vmatprep.subr.mxu0 0.0
    %1729 = vmatpush1.msra.mxu0 0.0
    %1730 = vmatprep.subr.mxu0 0.0
    %1731 = vmatpush1.msra.mxu0 0.0
    %1732 = vmatprep.subr.mxu0 0.0
    %1733 = vmatpush1.msra.mxu0 0.0
    %1734 = vmatprep.subr.mxu0 0.0
    %1735 = vmatpush1.msra.mxu0 0.0
    %1736 = vmatprep.subr.mxu0 0.0
    %1737 = vmatpush1.msra.mxu0 0.0
    %1738 = vmatprep.subr.mxu0 0.0
    %1739 = vmatpush1.msra.mxu0 0.0
    %1740 = vmatprep.subr.mxu0 0.0
    %1741 = vmatpush1.msra.mxu0 0.0
    %1742 = vmatprep.subr.mxu0 0.0
    %1743 = vmatpush1.msra.mxu0 0.0
    %1744 = vmatprep.subr.mxu0 0.0
    %1745 = vmatpush1.msra.mxu0 0.0
    %1746 = vmatprep.subr.mxu0 0.0
    %1747 = vmatpush1.msra.mxu0 0.0
    %1748 = vmatprep.subr.mxu0 0.0
    %1749 = vmatpush1.msra.mxu0 0.0
    %1750 = vmatprep.subr.mxu0 0.0
    %1751 = vmatpush1.msra.mxu0 0.0
    %1752 = vmatprep.subr.mxu0 0.0
    %1753 = vmatpush1.msra.mxu0 0.0
    %1754 = vmatprep.subr.mxu0 0.0
    %1755 = vmatpush1.msra.mxu0 0.0
    %1756 = vmatprep.subr.mxu0 0.0
    %1757 = vmatpush1.msra.mxu0 0.0
    %1758 = vmatprep.subr.mxu0 0.0
    %1759 = vmatpush1.msra.mxu0 0.0
    %1760 = vmatprep.mubr.f32.mxu0 0.0
    %1761 = vmatmul.mubr.f32.gmra.mrb[0].mxu0 %v1694
    %v1762 = vpop.f32.mrb[0].mxu0
    %v1763 = vadd.f32 0.0, %v1762
    %v1764 = vpop.f32.mrb[0].mxu0
    %1765 = vdwg.mxu0
    %v1766 = vld [vmem:[%s9 + $0x20] sm:$0xff]
    %v1767 = vld [vmem:[%s9 + $0x28] sm:$0xff]
    %v1768 = vld [vmem:[%s9 + $0x30] sm:$0xff]
    %v1769 = vld [vmem:[%s9 + $0x38] sm:$0xff]
    %v1771 = vsel %vm54, %v1763, 0
    %1773 = vmatprep.subr.mxu0 0.0
    %1774 = vmatpush1.msra.mxu0 %v1766
    %1775 = vmatprep.subr.mxu0 0.0
    %1776 = vmatpush1.msra.mxu0 %v1767
    %1777 = vmatprep.subr.mxu0 0.0
    %1778 = vmatpush1.msra.mxu0 %v1768
    %1779 = vmatprep.subr.mxu0 0.0
    %1780 = vmatpush1.msra.mxu0 %v1769
    %1781 = vmatprep.subr.mxu0 0.0
    %1782 = vmatpush1.msra.mxu0 0.0
    %1783 = vmatprep.subr.mxu0 0.0
    %1784 = vmatpush1.msra.mxu0 0.0
    %1785 = vmatprep.subr.mxu0 0.0
    %1786 = vmatpush1.msra.mxu0 0.0
    %1787 = vmatprep.subr.mxu0 0.0
    %1788 = vmatpush1.msra.mxu0 0.0
    %1789 = vmatprep.subr.mxu0 0.0
    %1790 = vmatpush1.msra.mxu0 0.0
    %1791 = vmatprep.subr.mxu0 0.0
    %1792 = vmatpush1.msra.mxu0 0.0
    %1793 = vmatprep.subr.mxu0 0.0
    %1794 = vmatpush1.msra.mxu0 0.0
    %1795 = vmatprep.subr.mxu0 0.0
    %1796 = vmatpush1.msra.mxu0 0.0
    %1797 = vmatprep.subr.mxu0 0.0
    %1798 = vmatpush1.msra.mxu0 0.0
    %1799 = vmatprep.subr.mxu0 0.0
    %1800 = vmatpush1.msra.mxu0 0.0
    %1801 = vmatprep.subr.mxu0 0.0
    %1802 = vmatpush1.msra.mxu0 0.0
    %1803 = vmatprep.subr.mxu0 0.0
    %1804 = vmatpush1.msra.mxu0 0.0
    %1805 = vmatprep.subr.mxu0 0.0
    %1806 = vmatpush1.msra.mxu0 0.0
    %1807 = vmatprep.subr.mxu0 0.0
    %1808 = vmatpush1.msra.mxu0 0.0
    %1809 = vmatprep.subr.mxu0 0.0
    %1810 = vmatpush1.msra.mxu0 0.0
    %1811 = vmatprep.subr.mxu0 0.0
    %1812 = vmatpush1.msra.mxu0 0.0
    %1813 = vmatprep.subr.mxu0 0.0
    %1814 = vmatpush1.msra.mxu0 0.0
    %1815 = vmatprep.subr.mxu0 0.0
    %1816 = vmatpush1.msra.mxu0 0.0
    %1817 = vmatprep.subr.mxu0 0.0
    %1818 = vmatpush1.msra.mxu0 0.0
    %1819 = vmatprep.subr.mxu0 0.0
    %1820 = vmatpush1.msra.mxu0 0.0
    %1821 = vmatprep.subr.mxu0 0.0
    %1822 = vmatpush1.msra.mxu0 0.0
    %1823 = vmatprep.subr.mxu0 0.0
    %1824 = vmatpush1.msra.mxu0 0.0
    %1825 = vmatprep.subr.mxu0 0.0
    %1826 = vmatpush1.msra.mxu0 0.0
    %1827 = vmatprep.subr.mxu0 0.0
    %1828 = vmatpush1.msra.mxu0 0.0
    %1829 = vmatprep.subr.mxu0 0.0
    %1830 = vmatpush1.msra.mxu0 0.0
    %1831 = vmatprep.subr.mxu0 0.0
    %1832 = vmatpush1.msra.mxu0 0.0
    %1833 = vmatprep.subr.mxu0 0.0
    %1834 = vmatpush1.msra.mxu0 0.0
    %1835 = vmatprep.subr.mxu0 0.0
    %1836 = vmatpush1.msra.mxu0 0.0
    %1837 = vmatprep.mubr.f32.mxu0 0.0
    %1838 = vmatmul.mubr.f32.gmra.mrb[0].mxu0 %v1771
    %v1839 = vpop.f32.mrb[0].mxu0
    %v1840 = vadd.f32 0.0, %v1839
    %v1841 = vpop.f32.mrb[0].mxu0
    %1842 = vdwg.mxu0
    %v1843 = vadd.f32 %v1688, %v1840
    %v1844 = vadd.s32 %v1534, 2
    %vm1845 = vcmp.eq.s32.totalorder %v1533, %v1844
    %v1846 = vsel %vm1845, 1, 0
    %v1847 = vcvt.s32.f32 %v1846
    %v1849 = vsel %vm390, %v1847, 0
    %1851 = vmatprep.subr.mxu0 0.0
    %1852 = vmatpush1.msra.mxu0 %v1443
    %1853 = vmatprep.subr.mxu0 0.0
    %1854 = vmatpush1.msra.mxu0 %v1444
    %1855 = vmatprep.subr.mxu0 0.0
    %1856 = vmatpush1.msra.mxu0 0.0
    %1857 = vmatprep.subr.mxu0 0.0
    %1858 = vmatpush1.msra.mxu0 0.0
    %1859 = vmatprep.subr.mxu0 0.0
    %1860 = vmatpush1.msra.mxu0 0.0
    %1861 = vmatprep.subr.mxu0 0.0
    %1862 = vmatpush1.msra.mxu0 0.0
    %1863 = vmatprep.subr.mxu0 0.0
    %1864 = vmatpush1.msra.mxu0 0.0
    %1865 = vmatprep.subr.mxu0 0.0
    %1866 = vmatpush1.msra.mxu0 0.0
    %1867 = vmatprep.subr.mxu0 0.0
    %1868 = vmatpush1.msra.mxu0 0.0
    %1869 = vmatprep.subr.mxu0 0.0
    %1870 = vmatpush1.msra.mxu0 0.0
    %1871 = vmatprep.subr.mxu0 0.0
    %1872 = vmatpush1.msra.mxu0 0.0
    %1873 = vmatprep.subr.mxu0 0.0
    %1874 = vmatpush1.msra.mxu0 0.0
    %1875 = vmatprep.subr.mxu0 0.0
    %1876 = vmatpush1.msra.mxu0 0.0
    %1877 = vmatprep.subr.mxu0 0.0
    %1878 = vmatpush1.msra.mxu0 0.0
    %1879 = vmatprep.subr.mxu0 0.0
    %1880 = vmatpush1.msra.mxu0 0.0
    %1881 = vmatprep.subr.mxu0 0.0
    %1882 = vmatpush1.msra.mxu0 0.0
    %1883 = vmatprep.subr.mxu0 0.0
    %1884 = vmatpush1.msra.mxu0 0.0
    %1885 = vmatprep.subr.mxu0 0.0
    %1886 = vmatpush1.msra.mxu0 0.0
    %1887 = vmatprep.subr.mxu0 0.0
    %1888 = vmatpush1.msra.mxu0 0.0
    %1889 = vmatprep.subr.mxu0 0.0
    %1890 = vmatpush1.msra.mxu0 0.0
    %1891 = vmatprep.subr.mxu0 0.0
    %1892 = vmatpush1.msra.mxu0 0.0
    %1893 = vmatprep.subr.mxu0 0.0
    %1894 = vmatpush1.msra.mxu0 0.0
    %1895 = vmatprep.subr.mxu0 0.0
    %1896 = vmatpush1.msra.mxu0 0.0
    %1897 = vmatprep.subr.mxu0 0.0
    %1898 = vmatpush1.msra.mxu0 0.0
    %1899 = vmatprep.subr.mxu0 0.0
    %1900 = vmatpush1.msra.mxu0 0.0
    %1901 = vmatprep.subr.mxu0 0.0
    %1902 = vmatpush1.msra.mxu0 0.0
    %1903 = vmatprep.subr.mxu0 0.0
    %1904 = vmatpush1.msra.mxu0 0.0
    %1905 = vmatprep.subr.mxu0 0.0
    %1906 = vmatpush1.msra.mxu0 0.0
    %1907 = vmatprep.subr.mxu0 0.0
    %1908 = vmatpush1.msra.mxu0 0.0
    %1909 = vmatprep.subr.mxu0 0.0
    %1910 = vmatpush1.msra.mxu0 0.0
    %1911 = vmatprep.subr.mxu0 0.0
    %1912 = vmatpush1.msra.mxu0 0.0
    %1913 = vmatprep.subr.mxu0 0.0
    %1914 = vmatpush1.msra.mxu0 0.0
    %1915 = vmatprep.mubr.f32.mxu0 0.0
    %1916 = vmatmul.mubr.f32.gmra.mrb[0].mxu0 %v1849
    %v1917 = vpop.f32.mrb[0].mxu0
    %v1918 = vadd.f32 0.0, %v1917
    %v1919 = vpop.f32.mrb[0].mxu0
    %1920 = vdwg.mxu0
    %v1921 = vld [vmem:[%s9 + $0x40] sm:$0xff]
    %v1922 = vld [vmem:[%s9 + $0x48] sm:$0xff]
    %v1923 = vld [vmem:[%s9 + $0x50] sm:$0xff]
    %v1924 = vld [vmem:[%s9 + $0x58] sm:$0xff]
    %v1926 = vsel %vm54, %v1918, 0
    %1928 = vmatprep.subr.mxu0 0.0
    %1929 = vmatpush1.msra.mxu0 %v1921
    %1930 = vmatprep.subr.mxu0 0.0
    %1931 = vmatpush1.msra.mxu0 %v1922
    %1932 = vmatprep.subr.mxu0 0.0
    %1933 = vmatpush1.msra.mxu0 %v1923
    %1934 = vmatprep.subr.mxu0 0.0
    %1935 = vmatpush1.msra.mxu0 %v1924
    %1936 = vmatprep.subr.mxu0 0.0
    %1937 = vmatpush1.msra.mxu0 0.0
    %1938 = vmatprep.subr.mxu0 0.0
    %1939 = vmatpush1.msra.mxu0 0.0
    %1940 = vmatprep.subr.mxu0 0.0
    %1941 = vmatpush1.msra.mxu0 0.0
    %1942 = vmatprep.subr.mxu0 0.0
    %1943 = vmatpush1.msra.mxu0 0.0
    %1944 = vmatprep.subr.mxu0 0.0
    %1945 = vmatpush1.msra.mxu0 0.0
    %1946 = vmatprep.subr.mxu0 0.0
    %1947 = vmatpush1.msra.mxu0 0.0
    %1948 = vmatprep.subr.mxu0 0.0
    %1949 = vmatpush1.msra.mxu0 0.0
    %1950 = vmatprep.subr.mxu0 0.0
    %1951 = vmatpush1.msra.mxu0 0.0
    %1952 = vmatprep.subr.mxu0 0.0
    %1953 = vmatpush1.msra.mxu0 0.0
    %1954 = vmatprep.subr.mxu0 0.0
    %1955 = vmatpush1.msra.mxu0 0.0
    %1956 = vmatprep.subr.mxu0 0.0
    %1957 = vmatpush1.msra.mxu0 0.0
    %1958 = vmatprep.subr.mxu0 0.0
    %1959 = vmatpush1.msra.mxu0 0.0
    %1960 = vmatprep.subr.mxu0 0.0
    %1961 = vmatpush1.msra.mxu0 0.0
    %1962 = vmatprep.subr.mxu0 0.0
    %1963 = vmatpush1.msra.mxu0 0.0
    %1964 = vmatprep.subr.mxu0 0.0
    %1965 = vmatpush1.msra.mxu0 0.0
    %1966 = vmatprep.subr.mxu0 0.0
    %1967 = vmatpush1.msra.mxu0 0.0
    %1968 = vmatprep.subr.mxu0 0.0
    %1969 = vmatpush1.msra.mxu0 0.0
    %1970 = vmatprep.subr.mxu0 0.0
    %1971 = vmatpush1.msra.mxu0 0.0
    %1972 = vmatprep.subr.mxu0 0.0
    %1973 = vmatpush1.msra.mxu0 0.0
    %1974 = vmatprep.subr.mxu0 0.0
    %1975 = vmatpush1.msra.mxu0 0.0
    %1976 = vmatprep.subr.mxu0 0.0
    %1977 = vmatpush1.msra.mxu0 0.0
    %1978 = vmatprep.subr.mxu0 0.0
    %1979 = vmatpush1.msra.mxu0 0.0
    %1980 = vmatprep.subr.mxu0 0.0
    %1981 = vmatpush1.msra.mxu0 0.0
    %1982 = vmatprep.subr.mxu0 0.0
    %1983 = vmatpush1.msra.mxu0 0.0
    %1984 = vmatprep.subr.mxu0 0.0
    %1985 = vmatpush1.msra.mxu0 0.0
    %1986 = vmatprep.subr.mxu0 0.0
    %1987 = vmatpush1.msra.mxu0 0.0
    %1988 = vmatprep.subr.mxu0 0.0
    %1989 = vmatpush1.msra.mxu0 0.0
    %1990 = vmatprep.subr.mxu0 0.0
    %1991 = vmatpush1.msra.mxu0 0.0
    %1992 = vmatprep.mubr.f32.mxu0 0.0
    %1993 = vmatmul.mubr.f32.gmra.mrb[0].mxu0 %v1926
    %v1994 = vpop.f32.mrb[0].mxu0
    %v1995 = vadd.f32 0.0, %v1994
    %v1996 = vpop.f32.mrb[0].mxu0
    %1997 = vdwg.mxu0
    %v1998 = vadd.f32 %v1843, %v1995
    %v1999 = vadd.s32 %v1534, 3
    %vm2000 = vcmp.eq.s32.totalorder %v1533, %v1999
    %v2001 = vsel %vm2000, 1, 0
    %v2002 = vcvt.s32.f32 %v2001
    %v2004 = vsel %vm390, %v2002, 0
    %2006 = vmatprep.subr.mxu0 0.0
    %2007 = vmatpush1.msra.mxu0 %v1443
    %2008 = vmatprep.subr.mxu0 0.0
    %2009 = vmatpush1.msra.mxu0 %v1444
    %2010 = vmatprep.subr.mxu0 0.0
    %2011 = vmatpush1.msra.mxu0 0.0
    %2012 = vmatprep.subr.mxu0 0.0
    %2013 = vmatpush1.msra.mxu0 0.0
    %2014 = vmatprep.subr.mxu0 0.0
    %2015 = vmatpush1.msra.mxu0 0.0
    %2016 = vmatprep.subr.mxu0 0.0
    %2017 = vmatpush1.msra.mxu0 0.0
    %2018 = vmatprep.subr.mxu0 0.0
    %2019 = vmatpush1.msra.mxu0 0.0
    %2020 = vmatprep.subr.mxu0 0.0
    %2021 = vmatpush1.msra.mxu0 0.0
    %2022 = vmatprep.subr.mxu0 0.0
    %2023 = vmatpush1.msra.mxu0 0.0
    %2024 = vmatprep.subr.mxu0 0.0
    %2025 = vmatpush1.msra.mxu0 0.0
    %2026 = vmatprep.subr.mxu0 0.0
    %2027 = vmatpush1.msra.mxu0 0.0
    %2028 = vmatprep.subr.mxu0 0.0
    %2029 = vmatpush1.msra.mxu0 0.0
    %2030 = vmatprep.subr.mxu0 0.0
    %2031 = vmatpush1.msra.mxu0 0.0
    %2032 = vmatprep.subr.mxu0 0.0
    %2033 = vmatpush1.msra.mxu0 0.0
    %2034 = vmatprep.subr.mxu0 0.0
    %2035 = vmatpush1.msra.mxu0 0.0
    %2036 = vmatprep.subr.mxu0 0.0
    %2037 = vmatpush1.msra.mxu0 0.0
    %2038 = vmatprep.subr.mxu0 0.0
    %2039 = vmatpush1.msra.mxu0 0.0
    %2040 = vmatprep.subr.mxu0 0.0
    %2041 = vmatpush1.msra.mxu0 0.0
    %2042 = vmatprep.subr.mxu0 0.0
    %2043 = vmatpush1.msra.mxu0 0.0
    %2044 = vmatprep.subr.mxu0 0.0
    %2045 = vmatpush1.msra.mxu0 0.0
    %2046 = vmatprep.subr.mxu0 0.0
    %2047 = vmatpush1.msra.mxu0 0.0
    %2048 = vmatprep.subr.mxu0 0.0
    %2049 = vmatpush1.msra.mxu0 0.0
    %2050 = vmatprep.subr.mxu0 0.0
    %2051 = vmatpush1.msra.mxu0 0.0
    %2052 = vmatprep.subr.mxu0 0.0
    %2053 = vmatpush1.msra.mxu0 0.0
    %2054 = vmatprep.subr.mxu0 0.0
    %2055 = vmatpush1.msra.mxu0 0.0
    %2056 = vmatprep.subr.mxu0 0.0
    %2057 = vmatpush1.msra.mxu0 0.0
    %2058 = vmatprep.subr.mxu0 0.0
    %2059 = vmatpush1.msra.mxu0 0.0
    %2060 = vmatprep.subr.mxu0 0.0
    %2061 = vmatpush1.msra.mxu0 0.0
    %2062 = vmatprep.subr.mxu0 0.0
    %2063 = vmatpush1.msra.mxu0 0.0
    %2064 = vmatprep.subr.mxu0 0.0
    %2065 = vmatpush1.msra.mxu0 0.0
    %2066 = vmatprep.subr.mxu0 0.0
    %2067 = vmatpush1.msra.mxu0 0.0
    %2068 = vmatprep.subr.mxu0 0.0
    %2069 = vmatpush1.msra.mxu0 0.0
    %2070 = vmatprep.mubr.f32.mxu0 0.0
    %2071 = vmatmul.mubr.f32.gmra.mrb[0].mxu0 %v2004
    %v2072 = vpop.f32.mrb[0].mxu0
    %v2073 = vadd.f32 0.0, %v2072
    %v2074 = vpop.f32.mrb[0].mxu0
    %2075 = vdwg.mxu0
    %v2076 = vld [vmem:[%s9 + $0x60] sm:$0xff]
    %v2077 = vld [vmem:[%s9 + $0x68] sm:$0xff]
    %v2078 = vld [vmem:[%s9 + $0x70] sm:$0xff]
    %v2079 = vld [vmem:[%s9 + $0x78] sm:$0xff]
    %v2081 = vsel %vm54, %v2073, 0
    %2083 = vmatprep.subr.mxu0 0.0
    %2084 = vmatpush1.msra.mxu0 %v2076
    %2085 = vmatprep.subr.mxu0 0.0
    %2086 = vmatpush1.msra.mxu0 %v2077
    %2087 = vmatprep.subr.mxu0 0.0
    %2088 = vmatpush1.msra.mxu0 %v2078
    %2089 = vmatprep.subr.mxu0 0.0
    %2090 = vmatpush1.msra.mxu0 %v2079
    %2091 = vmatprep.subr.mxu0 0.0
    %2092 = vmatpush1.msra.mxu0 0.0
    %2093 = vmatprep.subr.mxu0 0.0
    %2094 = vmatpush1.msra.mxu0 0.0
    %2095 = vmatprep.subr.mxu0 0.0
    %2096 = vmatpush1.msra.mxu0 0.0
    %2097 = vmatprep.subr.mxu0 0.0
    %2098 = vmatpush1.msra.mxu0 0.0
    %2099 = vmatprep.subr.mxu0 0.0
    %2100 = vmatpush1.msra.mxu0 0.0
    %2101 = vmatprep.subr.mxu0 0.0
    %2102 = vmatpush1.msra.mxu0 0.0
    %2103 = vmatprep.subr.mxu0 0.0
    %2104 = vmatpush1.msra.mxu0 0.0
    %2105 = vmatprep.subr.mxu0 0.0
    %2106 = vmatpush1.msra.mxu0 0.0
    %2107 = vmatprep.subr.mxu0 0.0
    %2108 = vmatpush1.msra.mxu0 0.0
    %2109 = vmatprep.subr.mxu0 0.0
    %2110 = vmatpush1.msra.mxu0 0.0
    %2111 = vmatprep.subr.mxu0 0.0
    %2112 = vmatpush1.msra.mxu0 0.0
    %2113 = vmatprep.subr.mxu0 0.0
    %2114 = vmatpush1.msra.mxu0 0.0
    %2115 = vmatprep.subr.mxu0 0.0
    %2116 = vmatpush1.msra.mxu0 0.0
    %2117 = vmatprep.subr.mxu0 0.0
    %2118 = vmatpush1.msra.mxu0 0.0
    %2119 = vmatprep.subr.mxu0 0.0
    %2120 = vmatpush1.msra.mxu0 0.0
    %2121 = vmatprep.subr.mxu0 0.0
    %2122 = vmatpush1.msra.mxu0 0.0
    %2123 = vmatprep.subr.mxu0 0.0
    %2124 = vmatpush1.msra.mxu0 0.0
    %2125 = vmatprep.subr.mxu0 0.0
    %2126 = vmatpush1.msra.mxu0 0.0
    %2127 = vmatprep.subr.mxu0 0.0
    %2128 = vmatpush1.msra.mxu0 0.0
    %2129 = vmatprep.subr.mxu0 0.0
    %2130 = vmatpush1.msra.mxu0 0.0
    %2131 = vmatprep.subr.mxu0 0.0
    %2132 = vmatpush1.msra.mxu0 0.0
    %2133 = vmatprep.subr.mxu0 0.0
    %2134 = vmatpush1.msra.mxu0 0.0
    %2135 = vmatprep.subr.mxu0 0.0
    %2136 = vmatpush1.msra.mxu0 0.0
    %2137 = vmatprep.subr.mxu0 0.0
    %2138 = vmatpush1.msra.mxu0 0.0
    %2139 = vmatprep.subr.mxu0 0.0
    %2140 = vmatpush1.msra.mxu0 0.0
    %2141 = vmatprep.subr.mxu0 0.0
    %2142 = vmatpush1.msra.mxu0 0.0
    %2143 = vmatprep.subr.mxu0 0.0
    %2144 = vmatpush1.msra.mxu0 0.0
    %2145 = vmatprep.subr.mxu0 0.0
    %2146 = vmatpush1.msra.mxu0 0.0
    %2147 = vmatprep.mubr.f32.mxu0 0.0
    %2148 = vmatmul.mubr.f32.gmra.mrb[0].mxu0 %v2081
    %v2149 = vpop.f32.mrb[0].mxu0
    %v2150 = vadd.f32 0.0, %v2149
    %v2151 = vpop.f32.mrb[0].mxu0
    %2152 = vdwg.mxu0
    %v2153 = vadd.f32 %v1998, %v2150
    %v2154 = vadd.s32 %v1534, 4
    %vm2155 = vcmp.eq.s32.totalorder %v1533, %v2154
    %v2156 = vsel %vm2155, 1, 0
    %v2157 = vcvt.s32.f32 %v2156
    %v2159 = vsel %vm390, %v2157, 0
    %2161 = vmatprep.subr.mxu0 0.0
    %2162 = vmatpush1.msra.mxu0 %v1443
    %2163 = vmatprep.subr.mxu0 0.0
    %2164 = vmatpush1.msra.mxu0 %v1444
    %2165 = vmatprep.subr.mxu0 0.0
    %2166 = vmatpush1.msra.mxu0 0.0
    %2167 = vmatprep.subr.mxu0 0.0
    %2168 = vmatpush1.msra.mxu0 0.0
    %2169 = vmatprep.subr.mxu0 0.0
    %2170 = vmatpush1.msra.mxu0 0.0
    %2171 = vmatprep.subr.mxu0 0.0
    %2172 = vmatpush1.msra.mxu0 0.0
    %2173 = vmatprep.subr.mxu0 0.0
    %2174 = vmatpush1.msra.mxu0 0.0
    %2175 = vmatprep.subr.mxu0 0.0
    %2176 = vmatpush1.msra.mxu0 0.0
    %2177 = vmatprep.subr.mxu0 0.0
    %2178 = vmatpush1.msra.mxu0 0.0
    %2179 = vmatprep.subr.mxu0 0.0
    %2180 = vmatpush1.msra.mxu0 0.0
    %2181 = vmatprep.subr.mxu0 0.0
    %2182 = vmatpush1.msra.mxu0 0.0
    %2183 = vmatprep.subr.mxu0 0.0
    %2184 = vmatpush1.msra.mxu0 0.0
    %2185 = vmatprep.subr.mxu0 0.0
    %2186 = vmatpush1.msra.mxu0 0.0
    %2187 = vmatprep.subr.mxu0 0.0
    %2188 = vmatpush1.msra.mxu0 0.0
    %2189 = vmatprep.subr.mxu0 0.0
    %2190 = vmatpush1.msra.mxu0 0.0
    %2191 = vmatprep.subr.mxu0 0.0
    %2192 = vmatpush1.msra.mxu0 0.0
    %2193 = vmatprep.subr.mxu0 0.0
    %2194 = vmatpush1.msra.mxu0 0.0
    %2195 = vmatprep.subr.mxu0 0.0
    %2196 = vmatpush1.msra.mxu0 0.0
    %2197 = vmatprep.subr.mxu0 0.0
    %2198 = vmatpush1.msra.mxu0 0.0
    %2199 = vmatprep.subr.mxu0 0.0
    %2200 = vmatpush1.msra.mxu0 0.0
    %2201 = vmatprep.subr.mxu0 0.0
    %2202 = vmatpush1.msra.mxu0 0.0
    %2203 = vmatprep.subr.mxu0 0.0
    %2204 = vmatpush1.msra.mxu0 0.0
    %2205 = vmatprep.subr.mxu0 0.0
    %2206 = vmatpush1.msra.mxu0 0.0
    %2207 = vmatprep.subr.mxu0 0.0
    %2208 = vmatpush1.msra.mxu0 0.0
    %2209 = vmatprep.subr.mxu0 0.0
    %2210 = vmatpush1.msra.mxu0 0.0
    %2211 = vmatprep.subr.mxu0 0.0
    %2212 = vmatpush1.msra.mxu0 0.0
    %2213 = vmatprep.subr.mxu0 0.0
    %2214 = vmatpush1.msra.mxu0 0.0
    %2215 = vmatprep.subr.mxu0 0.0
    %2216 = vmatpush1.msra.mxu0 0.0
    %2217 = vmatprep.subr.mxu0 0.0
    %2218 = vmatpush1.msra.mxu0 0.0
    %2219 = vmatprep.subr.mxu0 0.0
    %2220 = vmatpush1.msra.mxu0 0.0
    %2221 = vmatprep.subr.mxu0 0.0
    %2222 = vmatpush1.msra.mxu0 0.0
    %2223 = vmatprep.subr.mxu0 0.0
    %2224 = vmatpush1.msra.mxu0 0.0
    %2225 = vmatprep.mubr.f32.mxu0 0.0
    %2226 = vmatmul.mubr.f32.gmra.mrb[0].mxu0 %v2159
    %v2227 = vpop.f32.mrb[0].mxu0
    %v2228 = vadd.f32 0.0, %v2227
    %v2229 = vpop.f32.mrb[0].mxu0
    %2230 = vdwg.mxu0
    %v2231 = vld [vmem:[%s9 + $0x80] sm:$0xff]
    %v2232 = vld [vmem:[%s9 + $0x88] sm:$0xff]
    %v2233 = vld [vmem:[%s9 + $0x90] sm:$0xff]
    %v2234 = vld [vmem:[%s9 + $0x98] sm:$0xff]
    %v2236 = vsel %vm54, %v2228, 0
    %2238 = vmatprep.subr.mxu0 0.0
    %2239 = vmatpush1.msra.mxu0 %v2231
    %2240 = vmatprep.subr.mxu0 0.0
    %2241 = vmatpush1.msra.mxu0 %v2232
    %2242 = vmatprep.subr.mxu0 0.0
    %2243 = vmatpush1.msra.mxu0 %v2233
    %2244 = vmatprep.subr.mxu0 0.0
    %2245 = vmatpush1.msra.mxu0 %v2234
    %2246 = vmatprep.subr.mxu0 0.0
    %2247 = vmatpush1.msra.mxu0 0.0
    %2248 = vmatprep.subr.mxu0 0.0
    %2249 = vmatpush1.msra.mxu0 0.0
    %2250 = vmatprep.subr.mxu0 0.0
    %2251 = vmatpush1.msra.mxu0 0.0
    %2252 = vmatprep.subr.mxu0 0.0
    %2253 = vmatpush1.msra.mxu0 0.0
    %2254 = vmatprep.subr.mxu0 0.0
    %2255 = vmatpush1.msra.mxu0 0.0
    %2256 = vmatprep.subr.mxu0 0.0
    %2257 = vmatpush1.msra.mxu0 0.0
    %2258 = vmatprep.subr.mxu0 0.0
    %2259 = vmatpush1.msra.mxu0 0.0
    %2260 = vmatprep.subr.mxu0 0.0
    %2261 = vmatpush1.msra.mxu0 0.0
    %2262 = vmatprep.subr.mxu0 0.0
    %2263 = vmatpush1.msra.mxu0 0.0
    %2264 = vmatprep.subr.mxu0 0.0
    %2265 = vmatpush1.msra.mxu0 0.0
    %2266 = vmatprep.subr.mxu0 0.0
    %2267 = vmatpush1.msra.mxu0 0.0
    %2268 = vmatprep.subr.mxu0 0.0
    %2269 = vmatpush1.msra.mxu0 0.0
    %2270 = vmatprep.subr.mxu0 0.0
    %2271 = vmatpush1.msra.mxu0 0.0
    %2272 = vmatprep.subr.mxu0 0.0
    %2273 = vmatpush1.msra.mxu0 0.0
    %2274 = vmatprep.subr.mxu0 0.0
    %2275 = vmatpush1.msra.mxu0 0.0
    %2276 = vmatprep.subr.mxu0 0.0
    %2277 = vmatpush1.msra.mxu0 0.0
    %2278 = vmatprep.subr.mxu0 0.0
    %2279 = vmatpush1.msra.mxu0 0.0
    %2280 = vmatprep.subr.mxu0 0.0
    %2281 = vmatpush1.msra.mxu0 0.0
    %2282 = vmatprep.subr.mxu0 0.0
    %2283 = vmatpush1.msra.mxu0 0.0
    %2284 = vmatprep.subr.mxu0 0.0
    %2285 = vmatpush1.msra.mxu0 0.0
    %2286 = vmatprep.subr.mxu0 0.0
    %2287 = vmatpush1.msra.mxu0 0.0
    %2288 = vmatprep.subr.mxu0 0.0
    %2289 = vmatpush1.msra.mxu0 0.0
    %2290 = vmatprep.subr.mxu0 0.0
    %2291 = vmatpush1.msra.mxu0 0.0
    %2292 = vmatprep.subr.mxu0 0.0
    %2293 = vmatpush1.msra.mxu0 0.0
    %2294 = vmatprep.subr.mxu0 0.0
    %2295 = vmatpush1.msra.mxu0 0.0
    %2296 = vmatprep.subr.mxu0 0.0
    %2297 = vmatpush1.msra.mxu0 0.0
    %2298 = vmatprep.subr.mxu0 0.0
    %2299 = vmatpush1.msra.mxu0 0.0
    %2300 = vmatprep.subr.mxu0 0.0
    %2301 = vmatpush1.msra.mxu0 0.0
    %2302 = vmatprep.mubr.f32.mxu0 0.0
    %2303 = vmatmul.mubr.f32.gmra.mrb[0].mxu0 %v2236
    %v2304 = vpop.f32.mrb[0].mxu0
    %v2305 = vadd.f32 0.0, %v2304
    %v2306 = vpop.f32.mrb[0].mxu0
    %2307 = vdwg.mxu0
    %v2308 = vadd.f32 %v2153, %v2305
    %v2309 = vadd.s32 %v1534, 5
    %vm2310 = vcmp.eq.s32.totalorder %v1533, %v2309
    %v2311 = vsel %vm2310, 1, 0
    %v2312 = vcvt.s32.f32 %v2311
    %v2314 = vsel %vm390, %v2312, 0
    %2316 = vmatprep.subr.mxu0 0.0
    %2317 = vmatpush1.msra.mxu0 %v1443
    %2318 = vmatprep.subr.mxu0 0.0
    %2319 = vmatpush1.msra.mxu0 %v1444
    %2320 = vmatprep.subr.mxu0 0.0
    %2321 = vmatpush1.msra.mxu0 0.0
    %2322 = vmatprep.subr.mxu0 0.0
    %2323 = vmatpush1.msra.mxu0 0.0
    %2324 = vmatprep.subr.mxu0 0.0
    %2325 = vmatpush1.msra.mxu0 0.0
    %2326 = vmatprep.subr.mxu0 0.0
    %2327 = vmatpush1.msra.mxu0 0.0
    %2328 = vmatprep.subr.mxu0 0.0
    %2329 = vmatpush1.msra.mxu0 0.0
    %2330 = vmatprep.subr.mxu0 0.0
    %2331 = vmatpush1.msra.mxu0 0.0
    %2332 = vmatprep.subr.mxu0 0.0
    %2333 = vmatpush1.msra.mxu0 0.0
    %2334 = vmatprep.subr.mxu0 0.0
    %2335 = vmatpush1.msra.mxu0 0.0
    %2336 = vmatprep.subr.mxu0 0.0
    %2337 = vmatpush1.msra.mxu0 0.0
    %2338 = vmatprep.subr.mxu0 0.0
    %2339 = vmatpush1.msra.mxu0 0.0
    %2340 = vmatprep.subr.mxu0 0.0
    %2341 = vmatpush1.msra.mxu0 0.0
    %2342 = vmatprep.subr.mxu0 0.0
    %2343 = vmatpush1.msra.mxu0 0.0
    %2344 = vmatprep.subr.mxu0 0.0
    %2345 = vmatpush1.msra.mxu0 0.0
    %2346 = vmatprep.subr.mxu0 0.0
    %2347 = vmatpush1.msra.mxu0 0.0
    %2348 = vmatprep.subr.mxu0 0.0
    %2349 = vmatpush1.msra.mxu0 0.0
    %2350 = vmatprep.subr.mxu0 0.0
    %2351 = vmatpush1.msra.mxu0 0.0
    %2352 = vmatprep.subr.mxu0 0.0
    %2353 = vmatpush1.msra.mxu0 0.0
    %2354 = vmatprep.subr.mxu0 0.0
    %2355 = vmatpush1.msra.mxu0 0.0
    %2356 = vmatprep.subr.mxu0 0.0
    %2357 = vmatpush1.msra.mxu0 0.0
    %2358 = vmatprep.subr.mxu0 0.0
    %2359 = vmatpush1.msra.mxu0 0.0
    %2360 = vmatprep.subr.mxu0 0.0
    %2361 = vmatpush1.msra.mxu0 0.0
    %2362 = vmatprep.subr.mxu0 0.0
    %2363 = vmatpush1.msra.mxu0 0.0
    %2364 = vmatprep.subr.mxu0 0.0
    %2365 = vmatpush1.msra.mxu0 0.0
    %2366 = vmatprep.subr.mxu0 0.0
    %2367 = vmatpush1.msra.mxu0 0.0
    %2368 = vmatprep.subr.mxu0 0.0
    %2369 = vmatpush1.msra.mxu0 0.0
    %2370 = vmatprep.subr.mxu0 0.0
    %2371 = vmatpush1.msra.mxu0 0.0
    %2372 = vmatprep.subr.mxu0 0.0
    %2373 = vmatpush1.msra.mxu0 0.0
    %2374 = vmatprep.subr.mxu0 0.0
    %2375 = vmatpush1.msra.mxu0 0.0
    %2376 = vmatprep.subr.mxu0 0.0
    %2377 = vmatpush1.msra.mxu0 0.0
    %2378 = vmatprep.subr.mxu0 0.0
    %2379 = vmatpush1.msra.mxu0 0.0
    %2380 = vmatprep.mubr.f32.mxu0 0.0
    %2381 = vmatmul.mubr.f32.gmra.mrb[0].mxu0 %v2314
    %v2382 = vpop.f32.mrb[0].mxu0
    %v2383 = vadd.f32 0.0, %v2382
    %v2384 = vpop.f32.mrb[0].mxu0
    %2385 = vdwg.mxu0
    %v2386 = vld [vmem:[%s9 + $0xa0] sm:$0xff]
    %v2387 = vld [vmem:[%s9 + $0xa8] sm:$0xff]
    %v2388 = vld [vmem:[%s9 + $0xb0] sm:$0xff]
    %v2389 = vld [vmem:[%s9 + $0xb8] sm:$0xff]
    %v2391 = vsel %vm54, %v2383, 0
    %2393 = vmatprep.subr.mxu0 0.0
    %2394 = vmatpush1.msra.mxu0 %v2386
    %2395 = vmatprep.subr.mxu0 0.0
    %2396 = vmatpush1.msra.mxu0 %v2387
    %2397 = vmatprep.subr.mxu0 0.0
    %2398 = vmatpush1.msra.mxu0 %v2388
    %2399 = vmatprep.subr.mxu0 0.0
    %2400 = vmatpush1.msra.mxu0 %v2389
    %2401 = vmatprep.subr.mxu0 0.0
    %2402 = vmatpush1.msra.mxu0 0.0
    %2403 = vmatprep.subr.mxu0 0.0
    %2404 = vmatpush1.msra.mxu0 0.0
    %2405 = vmatprep.subr.mxu0 0.0
    %2406 = vmatpush1.msra.mxu0 0.0
    %2407 = vmatprep.subr.mxu0 0.0
    %2408 = vmatpush1.msra.mxu0 0.0
    %2409 = vmatprep.subr.mxu0 0.0
    %2410 = vmatpush1.msra.mxu0 0.0
    %2411 = vmatprep.subr.mxu0 0.0
    %2412 = vmatpush1.msra.mxu0 0.0
    %2413 = vmatprep.subr.mxu0 0.0
    %2414 = vmatpush1.msra.mxu0 0.0
    %2415 = vmatprep.subr.mxu0 0.0
    %2416 = vmatpush1.msra.mxu0 0.0
    %2417 = vmatprep.subr.mxu0 0.0
    %2418 = vmatpush1.msra.mxu0 0.0
    %2419 = vmatprep.subr.mxu0 0.0
    %2420 = vmatpush1.msra.mxu0 0.0
    %2421 = vmatprep.subr.mxu0 0.0
    %2422 = vmatpush1.msra.mxu0 0.0
    %2423 = vmatprep.subr.mxu0 0.0
    %2424 = vmatpush1.msra.mxu0 0.0
    %2425 = vmatprep.subr.mxu0 0.0
    %2426 = vmatpush1.msra.mxu0 0.0
    %2427 = vmatprep.subr.mxu0 0.0
    %2428 = vmatpush1.msra.mxu0 0.0
    %2429 = vmatprep.subr.mxu0 0.0
    %2430 = vmatpush1.msra.mxu0 0.0
    %2431 = vmatprep.subr.mxu0 0.0
    %2432 = vmatpush1.msra.mxu0 0.0
    %2433 = vmatprep.subr.mxu0 0.0
    %2434 = vmatpush1.msra.mxu0 0.0
    %2435 = vmatprep.subr.mxu0 0.0
    %2436 = vmatpush1.msra.mxu0 0.0
    %2437 = vmatprep.subr.mxu0 0.0
    %2438 = vmatpush1.msra.mxu0 0.0
    %2439 = vmatprep.subr.mxu0 0.0
    %2440 = vmatpush1.msra.mxu0 0.0
    %2441 = vmatprep.subr.mxu0 0.0
    %2442 = vmatpush1.msra.mxu0 0.0
    %2443 = vmatprep.subr.mxu0 0.0
    %2444 = vmatpush1.msra.mxu0 0.0
    %2445 = vmatprep.subr.mxu0 0.0
    %2446 = vmatpush1.msra.mxu0 0.0
    %2447 = vmatprep.subr.mxu0 0.0
    %2448 = vmatpush1.msra.mxu0 0.0
    %2449 = vmatprep.subr.mxu0 0.0
    %2450 = vmatpush1.msra.mxu0 0.0
    %2451 = vmatprep.subr.mxu0 0.0
    %2452 = vmatpush1.msra.mxu0 0.0
    %2453 = vmatprep.subr.mxu0 0.0
    %2454 = vmatpush1.msra.mxu0 0.0
    %2455 = vmatprep.subr.mxu0 0.0
    %2456 = vmatpush1.msra.mxu0 0.0
    %2457 = vmatprep.mubr.f32.mxu0 0.0
    %2458 = vmatmul.mubr.f32.gmra.mrb[0].mxu0 %v2391
    %v2459 = vpop.f32.mrb[0].mxu0
    %v2460 = vadd.f32 0.0, %v2459
    %v2461 = vpop.f32.mrb[0].mxu0
    %2462 = vdwg.mxu0
    %v2463 = vadd.f32 %v2308, %v2460
    %v2464 = vadd.s32 %v1534, 6
    %vm2465 = vcmp.eq.s32.totalorder %v1533, %v2464
    %v2466 = vsel %vm2465, 1, 0
    %v2467 = vcvt.s32.f32 %v2466
    %v2469 = vsel %vm390, %v2467, 0
    %2471 = vmatprep.subr.mxu0 0.0
    %2472 = vmatpush1.msra.mxu0 %v1443
    %2473 = vmatprep.subr.mxu0 0.0
    %2474 = vmatpush1.msra.mxu0 %v1444
    %2475 = vmatprep.subr.mxu0 0.0
    %2476 = vmatpush1.msra.mxu0 0.0
    %2477 = vmatprep.subr.mxu0 0.0
    %2478 = vmatpush1.msra.mxu0 0.0
    %2479 = vmatprep.subr.mxu0 0.0
    %2480 = vmatpush1.msra.mxu0 0.0
    %2481 = vmatprep.subr.mxu0 0.0
    %2482 = vmatpush1.msra.mxu0 0.0
    %2483 = vmatprep.subr.mxu0 0.0
    %2484 = vmatpush1.msra.mxu0 0.0
    %2485 = vmatprep.subr.mxu0 0.0
    %2486 = vmatpush1.msra.mxu0 0.0
    %2487 = vmatprep.subr.mxu0 0.0
    %2488 = vmatpush1.msra.mxu0 0.0
    %2489 = vmatprep.subr.mxu0 0.0
    %2490 = vmatpush1.msra.mxu0 0.0
    %2491 = vmatprep.subr.mxu0 0.0
    %2492 = vmatpush1.msra.mxu0 0.0
    %2493 = vmatprep.subr.mxu0 0.0
    %2494 = vmatpush1.msra.mxu0 0.0
    %2495 = vmatprep.subr.mxu0 0.0
    %2496 = vmatpush1.msra.mxu0 0.0
    %2497 = vmatprep.subr.mxu0 0.0
    %2498 = vmatpush1.msra.mxu0 0.0
    %2499 = vmatprep.subr.mxu0 0.0
    %2500 = vmatpush1.msra.mxu0 0.0
    %2501 = vmatprep.subr.mxu0 0.0
    %2502 = vmatpush1.msra.mxu0 0.0
    %2503 = vmatprep.subr.mxu0 0.0
    %2504 = vmatpush1.msra.mxu0 0.0
    %2505 = vmatprep.subr.mxu0 0.0
    %2506 = vmatpush1.msra.mxu0 0.0
    %2507 = vmatprep.subr.mxu0 0.0
    %2508 = vmatpush1.msra.mxu0 0.0
    %2509 = vmatprep.subr.mxu0 0.0
    %2510 = vmatpush1.msra.mxu0 0.0
    %2511 = vmatprep.subr.mxu0 0.0
    %2512 = vmatpush1.msra.mxu0 0.0
    %2513 = vmatprep.subr.mxu0 0.0
    %2514 = vmatpush1.msra.mxu0 0.0
    %2515 = vmatprep.subr.mxu0 0.0
    %2516 = vmatpush1.msra.mxu0 0.0
    %2517 = vmatprep.subr.mxu0 0.0
    %2518 = vmatpush1.msra.mxu0 0.0
    %2519 = vmatprep.subr.mxu0 0.0
    %2520 = vmatpush1.msra.mxu0 0.0
    %2521 = vmatprep.subr.mxu0 0.0
    %2522 = vmatpush1.msra.mxu0 0.0
    %2523 = vmatprep.subr.mxu0 0.0
    %2524 = vmatpush1.msra.mxu0 0.0
    %2525 = vmatprep.subr.mxu0 0.0
    %2526 = vmatpush1.msra.mxu0 0.0
    %2527 = vmatprep.subr.mxu0 0.0
    %2528 = vmatpush1.msra.mxu0 0.0
    %2529 = vmatprep.subr.mxu0 0.0
    %2530 = vmatpush1.msra.mxu0 0.0
    %2531 = vmatprep.subr.mxu0 0.0
    %2532 = vmatpush1.msra.mxu0 0.0
    %2533 = vmatprep.subr.mxu0 0.0
    %2534 = vmatpush1.msra.mxu0 0.0
    %2535 = vmatprep.mubr.f32.mxu0 0.0
    %2536 = vmatmul.mubr.f32.gmra.mrb[0].mxu0 %v2469
    %v2537 = vpop.f32.mrb[0].mxu0
    %v2538 = vadd.f32 0.0, %v2537
    %v2539 = vpop.f32.mrb[0].mxu0
    %2540 = vdwg.mxu0
    %v2541 = vld [vmem:[%s9 + $0xc0] sm:$0xff]
    %v2542 = vld [vmem:[%s9 + $0xc8] sm:$0xff]
    %v2543 = vld [vmem:[%s9 + $0xd0] sm:$0xff]
    %v2544 = vld [vmem:[%s9 + $0xd8] sm:$0xff]
    %v2546 = vsel %vm54, %v2538, 0
    %2548 = vmatprep.subr.mxu0 0.0
    %2549 = vmatpush1.msra.mxu0 %v2541
    %2550 = vmatprep.subr.mxu0 0.0
    %2551 = vmatpush1.msra.mxu0 %v2542
    %2552 = vmatprep.subr.mxu0 0.0
    %2553 = vmatpush1.msra.mxu0 %v2543
    %2554 = vmatprep.subr.mxu0 0.0
    %2555 = vmatpush1.msra.mxu0 %v2544
    %2556 = vmatprep.subr.mxu0 0.0
    %2557 = vmatpush1.msra.mxu0 0.0
    %2558 = vmatprep.subr.mxu0 0.0
    %2559 = vmatpush1.msra.mxu0 0.0
    %2560 = vmatprep.subr.mxu0 0.0
    %2561 = vmatpush1.msra.mxu0 0.0
    %2562 = vmatprep.subr.mxu0 0.0
    %2563 = vmatpush1.msra.mxu0 0.0
    %2564 = vmatprep.subr.mxu0 0.0
    %2565 = vmatpush1.msra.mxu0 0.0
    %2566 = vmatprep.subr.mxu0 0.0
    %2567 = vmatpush1.msra.mxu0 0.0
    %2568 = vmatprep.subr.mxu0 0.0
    %2569 = vmatpush1.msra.mxu0 0.0
    %2570 = vmatprep.subr.mxu0 0.0
    %2571 = vmatpush1.msra.mxu0 0.0
    %2572 = vmatprep.subr.mxu0 0.0
    %2573 = vmatpush1.msra.mxu0 0.0
    %2574 = vmatprep.subr.mxu0 0.0
    %2575 = vmatpush1.msra.mxu0 0.0
    %2576 = vmatprep.subr.mxu0 0.0
    %2577 = vmatpush1.msra.mxu0 0.0
    %2578 = vmatprep.subr.mxu0 0.0
    %2579 = vmatpush1.msra.mxu0 0.0
    %2580 = vmatprep.subr.mxu0 0.0
    %2581 = vmatpush1.msra.mxu0 0.0
    %2582 = vmatprep.subr.mxu0 0.0
    %2583 = vmatpush1.msra.mxu0 0.0
    %2584 = vmatprep.subr.mxu0 0.0
    %2585 = vmatpush1.msra.mxu0 0.0
    %2586 = vmatprep.subr.mxu0 0.0
    %2587 = vmatpush1.msra.mxu0 0.0
    %2588 = vmatprep.subr.mxu0 0.0
    %2589 = vmatpush1.msra.mxu0 0.0
    %2590 = vmatprep.subr.mxu0 0.0
    %2591 = vmatpush1.msra.mxu0 0.0
    %2592 = vmatprep.subr.mxu0 0.0
    %2593 = vmatpush1.msra.mxu0 0.0
    %2594 = vmatprep.subr.mxu0 0.0
    %2595 = vmatpush1.msra.mxu0 0.0
    %2596 = vmatprep.subr.mxu0 0.0
    %2597 = vmatpush1.msra.mxu0 0.0
    %2598 = vmatprep.subr.mxu0 0.0
    %2599 = vmatpush1.msra.mxu0 0.0
    %2600 = vmatprep.subr.mxu0 0.0
    %2601 = vmatpush1.msra.mxu0 0.0
    %2602 = vmatprep.subr.mxu0 0.0
    %2603 = vmatpush1.msra.mxu0 0.0
    %2604 = vmatprep.subr.mxu0 0.0
    %2605 = vmatpush1.msra.mxu0 0.0
    %2606 = vmatprep.subr.mxu0 0.0
    %2607 = vmatpush1.msra.mxu0 0.0
    %2608 = vmatprep.subr.mxu0 0.0
    %2609 = vmatpush1.msra.mxu0 0.0
    %2610 = vmatprep.subr.mxu0 0.0
    %2611 = vmatpush1.msra.mxu0 0.0
    %2612 = vmatprep.mubr.f32.mxu0 0.0
    %2613 = vmatmul.mubr.f32.gmra.mrb[0].mxu0 %v2546
    %v2614 = vpop.f32.mrb[0].mxu0
    %v2615 = vadd.f32 0.0, %v2614
    %v2616 = vpop.f32.mrb[0].mxu0
    %2617 = vdwg.mxu0
    %v2618 = vadd.f32 %v2463, %v2615
    %v2619 = vadd.s32 %v1534, 7
    %vm2620 = vcmp.eq.s32.totalorder %v1533, %v2619
    %v2621 = vsel %vm2620, 1, 0
    %v2622 = vcvt.s32.f32 %v2621
    %v2624 = vsel %vm390, %v2622, 0
    %2626 = vmatprep.subr.mxu0 0.0
    %2627 = vmatpush1.msra.mxu0 %v1443
    %2628 = vmatprep.subr.mxu0 0.0
    %2629 = vmatpush1.msra.mxu0 %v1444
    %2630 = vmatprep.subr.mxu0 0.0
    %2631 = vmatpush1.msra.mxu0 0.0
    %2632 = vmatprep.subr.mxu0 0.0
    %2633 = vmatpush1.msra.mxu0 0.0
    %2634 = vmatprep.subr.mxu0 0.0
    %2635 = vmatpush1.msra.mxu0 0.0
    %2636 = vmatprep.subr.mxu0 0.0
    %2637 = vmatpush1.msra.mxu0 0.0
    %2638 = vmatprep.subr.mxu0 0.0
    %2639 = vmatpush1.msra.mxu0 0.0
    %2640 = vmatprep.subr.mxu0 0.0
    %2641 = vmatpush1.msra.mxu0 0.0
    %2642 = vmatprep.subr.mxu0 0.0
    %2643 = vmatpush1.msra.mxu0 0.0
    %2644 = vmatprep.subr.mxu0 0.0
    %2645 = vmatpush1.msra.mxu0 0.0
    %2646 = vmatprep.subr.mxu0 0.0
    %2647 = vmatpush1.msra.mxu0 0.0
    %2648 = vmatprep.subr.mxu0 0.0
    %2649 = vmatpush1.msra.mxu0 0.0
    %2650 = vmatprep.subr.mxu0 0.0
    %2651 = vmatpush1.msra.mxu0 0.0
    %2652 = vmatprep.subr.mxu0 0.0
    %2653 = vmatpush1.msra.mxu0 0.0
    %2654 = vmatprep.subr.mxu0 0.0
    %2655 = vmatpush1.msra.mxu0 0.0
    %2656 = vmatprep.subr.mxu0 0.0
    %2657 = vmatpush1.msra.mxu0 0.0
    %2658 = vmatprep.subr.mxu0 0.0
    %2659 = vmatpush1.msra.mxu0 0.0
    %2660 = vmatprep.subr.mxu0 0.0
    %2661 = vmatpush1.msra.mxu0 0.0
    %2662 = vmatprep.subr.mxu0 0.0
    %2663 = vmatpush1.msra.mxu0 0.0
    %2664 = vmatprep.subr.mxu0 0.0
    %2665 = vmatpush1.msra.mxu0 0.0
    %2666 = vmatprep.subr.mxu0 0.0
    %2667 = vmatpush1.msra.mxu0 0.0
    %2668 = vmatprep.subr.mxu0 0.0
    %2669 = vmatpush1.msra.mxu0 0.0
    %2670 = vmatprep.subr.mxu0 0.0
    %2671 = vmatpush1.msra.mxu0 0.0
    %2672 = vmatprep.subr.mxu0 0.0
    %2673 = vmatpush1.msra.mxu0 0.0
    %2674 = vmatprep.subr.mxu0 0.0
    %2675 = vmatpush1.msra.mxu0 0.0
    %2676 = vmatprep.subr.mxu0 0.0
    %2677 = vmatpush1.msra.mxu0 0.0
    %2678 = vmatprep.subr.mxu0 0.0
    %2679 = vmatpush1.msra.mxu0 0.0
    %2680 = vmatprep.subr.mxu0 0.0
    %2681 = vmatpush1.msra.mxu0 0.0
    %2682 = vmatprep.subr.mxu0 0.0
    %2683 = vmatpush1.msra.mxu0 0.0
    %2684 = vmatprep.subr.mxu0 0.0
    %2685 = vmatpush1.msra.mxu0 0.0
    %2686 = vmatprep.subr.mxu0 0.0
    %2687 = vmatpush1.msra.mxu0 0.0
    %2688 = vmatprep.subr.mxu0 0.0
    %2689 = vmatpush1.msra.mxu0 0.0
    %2690 = vmatprep.mubr.f32.mxu0 0.0
    %2691 = vmatmul.mubr.f32.gmra.mrb[0].mxu0 %v2624
    %v2692 = vpop.f32.mrb[0].mxu0
    %v2693 = vadd.f32 0.0, %v2692
    %v2694 = vpop.f32.mrb[0].mxu0
    %2695 = vdwg.mxu0
    %v2696 = vld [vmem:[%s9 + $0xe0] sm:$0xff]
    %v2697 = vld [vmem:[%s9 + $0xe8] sm:$0xff]
    %v2698 = vld [vmem:[%s9 + $0xf0] sm:$0xff]
    %v2699 = vld [vmem:[%s9 + $0xf8] sm:$0xff]
    %v2701 = vsel %vm54, %v2693, 0
    %2703 = vmatprep.subr.mxu0 0.0
    %2704 = vmatpush1.msra.mxu0 %v2696
    %2705 = vmatprep.subr.mxu0 0.0
    %2706 = vmatpush1.msra.mxu0 %v2697
    %2707 = vmatprep.subr.mxu0 0.0
    %2708 = vmatpush1.msra.mxu0 %v2698
    %2709 = vmatprep.subr.mxu0 0.0
    %2710 = vmatpush1.msra.mxu0 %v2699
    %2711 = vmatprep.subr.mxu0 0.0
    %2712 = vmatpush1.msra.mxu0 0.0
    %2713 = vmatprep.subr.mxu0 0.0
    %2714 = vmatpush1.msra.mxu0 0.0
    %2715 = vmatprep.subr.mxu0 0.0
    %2716 = vmatpush1.msra.mxu0 0.0
    %2717 = vmatprep.subr.mxu0 0.0
    %2718 = vmatpush1.msra.mxu0 0.0
    %2719 = vmatprep.subr.mxu0 0.0
    %2720 = vmatpush1.msra.mxu0 0.0
    %2721 = vmatprep.subr.mxu0 0.0
    %2722 = vmatpush1.msra.mxu0 0.0
    %2723 = vmatprep.subr.mxu0 0.0
    %2724 = vmatpush1.msra.mxu0 0.0
    %2725 = vmatprep.subr.mxu0 0.0
    %2726 = vmatpush1.msra.mxu0 0.0
    %2727 = vmatprep.subr.mxu0 0.0
    %2728 = vmatpush1.msra.mxu0 0.0
    %2729 = vmatprep.subr.mxu0 0.0
    %2730 = vmatpush1.msra.mxu0 0.0
    %2731 = vmatprep.subr.mxu0 0.0
    %2732 = vmatpush1.msra.mxu0 0.0
    %2733 = vmatprep.subr.mxu0 0.0
    %2734 = vmatpush1.msra.mxu0 0.0
    %2735 = vmatprep.subr.mxu0 0.0
    %2736 = vmatpush1.msra.mxu0 0.0
    %2737 = vmatprep.subr.mxu0 0.0
    %2738 = vmatpush1.msra.mxu0 0.0
    %2739 = vmatprep.subr.mxu0 0.0
    %2740 = vmatpush1.msra.mxu0 0.0
    %2741 = vmatprep.subr.mxu0 0.0
    %2742 = vmatpush1.msra.mxu0 0.0
    %2743 = vmatprep.subr.mxu0 0.0
    %2744 = vmatpush1.msra.mxu0 0.0
    %2745 = vmatprep.subr.mxu0 0.0
    %2746 = vmatpush1.msra.mxu0 0.0
    %2747 = vmatprep.subr.mxu0 0.0
    %2748 = vmatpush1.msra.mxu0 0.0
    %2749 = vmatprep.subr.mxu0 0.0
    %2750 = vmatpush1.msra.mxu0 0.0
    %2751 = vmatprep.subr.mxu0 0.0
    %2752 = vmatpush1.msra.mxu0 0.0
    %2753 = vmatprep.subr.mxu0 0.0
    %2754 = vmatpush1.msra.mxu0 0.0
    %2755 = vmatprep.subr.mxu0 0.0
    %2756 = vmatpush1.msra.mxu0 0.0
    %2757 = vmatprep.subr.mxu0 0.0
    %2758 = vmatpush1.msra.mxu0 0.0
    %2759 = vmatprep.subr.mxu0 0.0
    %2760 = vmatpush1.msra.mxu0 0.0
    %2761 = vmatprep.subr.mxu0 0.0
    %2762 = vmatpush1.msra.mxu0 0.0
    %2763 = vmatprep.subr.mxu0 0.0
    %2764 = vmatpush1.msra.mxu0 0.0
    %2765 = vmatprep.subr.mxu0 0.0
    %2766 = vmatpush1.msra.mxu0 0.0
    %2767 = vmatprep.mubr.f32.mxu0 0.0
    %2768 = vmatmul.mubr.f32.gmra.mrb[0].mxu0 %v2701
    %v2769 = vpop.f32.mrb[0].mxu0
    %v2770 = vadd.f32 0.0, %v2769
    %v2771 = vpop.f32.mrb[0].mxu0
    %2772 = vdwg.mxu0
    %v2773 = vadd.f32 %v2618, %v2770
    %vm2774 = vcmask 17408
    %v2775 = vsel %vm2774, %v2773, -inf
    %2776 = vmax.xlane.f32.xlu0 %v2775
    %v2777 = vpop.xlane.xlu0 %2776
    %v2778 = vsub.f32 %v2773, %v2777
    %v2779 = vmul.f32 %v2778, 1.442695
    %v2780 = vpow.pop %v2779
    %v2781 = vsel %vm2774, %v2780, 0.0
    %2782 = vadd.xlane.f32.xlu0 %v2781
    %v2783 = vpop.xlane.xlu0 %2782
    %v2784 = vrcp.pop %v2783
    %v2785 = vmul.f32 %v2780, %v2784
    %2786 = vst.msk [vmem:[#allocation2] sm:$0x3] %vm2774, %v2785
    // Predicated region
    $region50: #{tpu_custom_call.1} parent=1 // pred_check
      _
    $region51: #{tpu_custom_call.1} parent=1 // pred_check_branch
      %2788 = sbr.rel (0) target = $region53
    $region52: #{tpu_custom_call.1} parent=1 // pred_region
      %s2790 = ssub.s32 32, 32
      %2791 = vsyncadd [#allocation3], %s2790
      %s2793 = sshll.u32 [#allocation2], 4
      %s2794 = int_to_ptr.vmem [resolvable:$true] %s2793
      %2796 = dma.vmem_to_hbm [thread:$0]  %s2794, 32, %s12, [#allocation3]
    $region53: #{tpu_custom_call.1} parent=1 // pred_fallthru
      _
    // Predicated region
    $region54: #{tpu_custom_call.1} parent=1 // pred_check
      _
    $region55: #{tpu_custom_call.1} parent=1 // pred_check_branch
      %2798 = sbr.rel (0) target = $region57
    $region56: #{tpu_custom_call.1} parent=1 // pred_region
      %2799 = dma.done [#allocation3], 32
    $region57: #{tpu_custom_call.1} parent=1 // pred_fallthru
      _
    %2800 = vsyncpa [#allocation3], 1

</llo_original>
